<compile_context>
chip_gen: v7x
topology: tpu7x:2x2x1
jax: 0.10.0
libtpu: 0.0.40
codegen_flags: <defaults>
</compile_context>

<pallas_src>
import functools

import jax
import jax.numpy as jnp
from jax import lax
from jax.experimental import pallas as pl
from jax.experimental.pallas import tpu as pltpu

HIDDEN = 50        # real hidden size (PyTorch)
HIDDEN_PAD = 128   # lane-padded hidden size (one 128-lane block per gate)
NUM_LAYERS = 4
GATE_ORDER = (0, 1, 3, 2)   # PyTorch (i, f, g, o) -> kernel layout (i, f, o, g)


# ------------------------------ fused RNN kernel ------------------------------
def _rnn_kernel(x_ref, w_ih_ref, w_hh_ref, b_ref, w_fc_ref, b_fc_ref, out_ref,
                xproj_s, seq_s, *, seq_len, batch_pad):
    """One grid step == one LSTM layer (grid=(NUM_LAYERS,), "arbitrary").

    x_ref    : (T, BP, HP)     time-major, batch/lane-padded input (f32)
    w_ih_ref : (1, HP, 4*HP)   this layer's input->gates weights (bf16, gates i,f,o,g)
    w_hh_ref : (1, HP, 4*HP)   this layer's hidden->gates weights (bf16)
    b_ref    : (1, 1, 4*HP)    this layer's combined b_ih + b_hh (f32)
    w_fc_ref : (HP, HP)        FC weight (bf16, only [:H, :1] real)
    b_fc_ref : (1, HP)         FC bias (f32, only lane 0 real)
    out_ref  : (BP, HP)        FC output (row<B, lane 0 is the real output)
    xproj_s  : (T, BP, 4*HP)   VMEM scratch: x @ W_ih + b for this layer
    seq_s    : (T, BP, HP)     VMEM scratch: inter-layer hidden-state sequence
    """
    T, BP = seq_len, batch_pad
    HP = x_ref.shape[2]
    l = pl.program_id(0)
    last_layer = pl.num_programs(0) - 1

    # ---- prologue: input projection for all timesteps in one lane-dense matmul ----
    def project(act2d_bf16):
        p = jnp.dot(act2d_bf16, w_ih_ref[0],
                    preferred_element_type=jnp.float32) + b_ref[0]   # (T*BP, 4*HP)
        xproj_s[...] = p.reshape(T, BP, 4 * HP)

    @pl.when(l == 0)
    def _():
        project(x_ref[...].reshape(T * BP, HP).astype(jnp.bfloat16))

    @pl.when(l > 0)
    def _():
        project(seq_s[...].reshape(T * BP, HP).astype(jnp.bfloat16))

    # ---- recurrence: only h @ W_hh + elementwise on the serial critical path ----
    h0 = jnp.zeros((BP, HP), jnp.float32)
    c0 = jnp.zeros((BP, HP), jnp.float32)

    def step(t, carry):
        h, c = carry
        gates = xproj_s[t] + jnp.dot(
            h.astype(jnp.bfloat16), w_hh_ref[0],
            preferred_element_type=jnp.float32)                      # (BP, 4*HP)
        # gate layout (i, f, o, g): one contiguous sigmoid slab, one tanh slab
        sig = jax.nn.sigmoid(gates[:, :3 * HP])
        i = sig[:, 0 * HP:1 * HP]
        f = sig[:, 1 * HP:2 * HP]
        o = sig[:, 2 * HP:3 * HP]
        g = jnp.tanh(gates[:, 3 * HP:])
        c_new = f * c + i * g
        h_new = o * jnp.tanh(c_new)
        seq_s[t] = h_new          # aligned (8,128) tile store; input to next layer
        return (h_new, c_new)

    unroll = True if T <= 32 else 8
    h, _ = lax.fori_loop(0, T, step, (h0, c0), unroll=unroll)

    # ---- fused FC head on the last layer's final hidden state ----
    @pl.when(l == last_layer)
    def _():
        out_ref[...] = (
            jnp.dot(h.astype(jnp.bfloat16), w_fc_ref[...],
                    preferred_element_type=jnp.float32)
            + b_fc_ref[...]
        )


# ------------------------------ Parameter init ---------------------------------
def _pad_gate_blocks(m, hidden, hp, target_rows):
    """m: (rows, 4*hidden) gate-blocked in PyTorch order (i,f,g,o).
    Returns (target_rows, 4*hp), zero padded, gates reordered to (i,f,o,g)."""
    rows = m.shape[0]
    blocks = []
    for g in GATE_ORDER:
        blk = m[:, g * hidden:(g + 1) * hidden]
        blk = jnp.pad(blk, ((0, target_rows - rows), (0, hp - hidden)))
        blocks.append(blk)
    return jnp.concatenate(blocks, axis=1)


def init_params(key, hidden=HIDDEN, hp=HIDDEN_PAD):
    """PyTorch-style U(-1/sqrt(H), 1/sqrt(H)) init, lane/gate-padded for the kernel.
    Matmul weights are stored bf16 (zeros preserved -> padded-lane invariant holds)."""
    k = 1.0 / jnp.sqrt(jnp.float32(hidden))
    in_sizes = [1, hidden, hidden, hidden]
    w_ih_list, w_hh_list, b_list = [], [], []
    for d_in in in_sizes:
        key, k1, k2, k3, k4 = jax.random.split(key, 5)
        w_ih = jax.random.uniform(k1, (4 * hidden, d_in), jnp.float32, -k, k)
        w_hh = jax.random.uniform(k2, (4 * hidden, hidden), jnp.float32, -k, k)
        b_ih = jax.random.uniform(k3, (4 * hidden,), jnp.float32, -k, k)
        b_hh = jax.random.uniform(k4, (4 * hidden,), jnp.float32, -k, k)
        w_ih_list.append(
            _pad_gate_blocks(w_ih.T, hidden, hp, target_rows=hp).astype(jnp.bfloat16))
        w_hh_list.append(
            _pad_gate_blocks(w_hh.T, hidden, hp, target_rows=hp).astype(jnp.bfloat16))
        b_list.append(
            _pad_gate_blocks((b_ih + b_hh).reshape(1, 4 * hidden), hidden, hp,
                             target_rows=1))
    key, k1, k2 = jax.random.split(key, 3)
    kf = 1.0 / jnp.sqrt(jnp.float32(hidden))
    w_fc = jax.random.uniform(k1, (1, hidden), jnp.float32, -kf, kf)
    b_fc = jax.random.uniform(k2, (1,), jnp.float32, -kf, kf)
    w_fc_pad = jnp.zeros((hp, hp), jnp.float32).at[:hidden, :1].set(w_fc.T)
    b_fc_pad = jnp.zeros((1, hp), jnp.float32).at[:, :1].set(b_fc.reshape(1, 1))
    return {
        "w_ih": jnp.stack(w_ih_list),                 # (L, HP, 4*HP) bf16
        "w_hh": jnp.stack(w_hh_list),                 # (L, HP, 4*HP) bf16
        "b": jnp.stack(b_list),                       # (L, 1, 4*HP)  f32
        "w_fc": w_fc_pad.astype(jnp.bfloat16),        # (HP, HP)      bf16
        "b_fc": b_fc_pad,                             # (1, HP)       f32
    }


# ---------------------------------- Forward -------------------------------------
def rnn_forward(params, x):
    """x: (B, T, 1) batch-first float32 -> (B, 1)."""
    B, T, D = x.shape
    HP = params["w_hh"].shape[1]
    L = params["w_ih"].shape[0]
    BP = max(8, ((B + 7) // 8) * 8)   # sublane-padded batch

    # Layout plumbing (XLA ops): time-major, pad batch to 8 sublanes and the feature
    # dim to a 128-lane block (HBM traffic for x is tiny at this size).
    xt = jnp.transpose(x, (1, 0, 2)).astype(jnp.float32)          # (T, B, 1)
    xp = jnp.pad(xt, ((0, 0), (0, BP - B), (0, HP - D)))          # (T, BP, HP)

    flops = int(2 * (T * BP) * HP * 4 * HP * L        # input projections
                + 2 * BP * HP * 4 * HP * T * L        # recurrent matmuls
                + 2 * BP * HP * HP)                   # FC head
    transcendentals = int(5 * BP * HP * T * L)
    bytes_accessed = int(xp.size * 4
                         + params["w_ih"].size * 2 + params["w_hh"].size * 2
                         + params["b"].size * 4
                         + params["w_fc"].size * 2 + params["b_fc"].size * 4
                         + BP * HP * 4)

    out = pl.pallas_call(
        functools.partial(_rnn_kernel, seq_len=T, batch_pad=BP),
        out_shape=jax.ShapeDtypeStruct((BP, HP), jnp.float32),
        grid=(L,),
        in_specs=[
            pl.BlockSpec((T, BP, HP), lambda l: (0, 0, 0)),        # x (fetched once)
            pl.BlockSpec((1, HP, 4 * HP), lambda l: (l, 0, 0)),    # W_ih[l]
            pl.BlockSpec((1, HP, 4 * HP), lambda l: (l, 0, 0)),    # W_hh[l]
            pl.BlockSpec((1, 1, 4 * HP), lambda l: (l, 0, 0)),     # b[l]
            pl.BlockSpec((HP, HP), lambda l: (0, 0)),              # W_fc
            pl.BlockSpec((1, HP), lambda l: (0, 0)),               # b_fc
        ],
        out_specs=pl.BlockSpec((BP, HP), lambda l: (0, 0)),
        scratch_shapes=[
            pltpu.VMEM((T, BP, 4 * HP), jnp.float32),  # per-layer x @ W_ih + b
            pltpu.VMEM((T, BP, HP), jnp.float32),      # inter-layer hidden sequence
        ],
        compiler_params=pltpu.CompilerParams(
            dimension_semantics=("arbitrary",),
            vmem_limit_bytes=16 * 1024 * 1024),
        cost_estimate=pl.CostEstimate(
            flops=flops, transcendentals=transcendentals,
            bytes_accessed=bytes_accessed),
    )(xp, params["w_ih"], params["w_hh"], params["b"],
      params["w_fc"], params["b_fc"])
    return out[:B, :1]   # only the real batch rows / lane 0 of the padded FC output


if __name__ == "__main__":
    key = jax.random.PRNGKey(0)
    pkey, xkey = jax.random.split(key)
    params = init_params(pkey)

    B, T = 2, 8
    x = jax.random.normal(xkey, (B, T, 1), dtype=jnp.float32)

    out = jax.jit(rnn_forward)(params, x)
    out = jax.block_until_ready(out)
    assert out.shape == (B, 1) and out.dtype == jnp.float32
    assert bool(jnp.all(jnp.isfinite(out)))
    print("KERNEL_OK")
</pallas_src>

<mosaic_0001>
module attributes {stable_mosaic.version = 11 : i64} {
  func.func @_rnn_kernel(%arg0: i32, %arg1: memref<8x8x128xf32, #tpu.memory_space<vmem>>, %arg2: memref<1x128x512xbf16, #tpu.memory_space<vmem>>, %arg3: memref<1x128x512xbf16, #tpu.memory_space<vmem>>, %arg4: memref<1x1x512xf32, #tpu.memory_space<vmem>>, %arg5: memref<128x128xbf16, #tpu.memory_space<vmem>>, %arg6: memref<1x128xf32, #tpu.memory_space<vmem>>, %arg7: memref<8x128xf32, #tpu.memory_space<vmem>>, %arg8: memref<8x8x512xf32, #tpu.memory_space<vmem>>, %arg9: memref<8x8x128xf32, #tpu.memory_space<vmem>>) attributes {dimension_semantics = [#tpu.dimension_semantics<arbitrary>], iteration_bounds = array<i64: 4>, scalar_prefetch = 0 : i64, scratch_operands = 2 : i64, tpu.core_type = #tpu.core_type<tc>, window_params = [{pipeline_mode = #tpu.pipeline_mode<synchronous>, transform_indices = @transform_0, window_bounds = array<i64: 8, 8, 128>}, {transform_indices = @transform_1, window_bounds = array<i64: 1, 128, 512>}, {transform_indices = @transform_2, window_bounds = array<i64: 1, 128, 512>}, {transform_indices = @transform_3, window_bounds = array<i64: 1, 1, 512>}, {pipeline_mode = #tpu.pipeline_mode<synchronous>, transform_indices = @transform_4, window_bounds = array<i64: 128, 128>}, {pipeline_mode = #tpu.pipeline_mode<synchronous>, transform_indices = @transform_5, window_bounds = array<i64: 1, 128>}, {pipeline_mode = #tpu.pipeline_mode<synchronous>, transform_indices = @transform_6, window_bounds = array<i64: 8, 128>}]} {
    %c0_i32 = arith.constant 0 : i32
    %0 = arith.cmpi eq, %arg0, %c0_i32 : i32
    %1 = arith.extui %0 : i1 to i32
    %c0_i32_0 = arith.constant 0 : i32
    %2 = arith.cmpi ne, %1, %c0_i32_0 : i32
    scf.if %2 {
      %c0_78 = arith.constant 0 : index
      %c0_79 = arith.constant 0 : index
      %c0_80 = arith.constant 0 : index
      %235 = vector.load %arg1[%c0_78, %c0_79, %c0_80] : memref<8x8x128xf32, #tpu.memory_space<vmem>>, vector<8x8x128xf32>
      %236 = vector.shape_cast %235 : vector<8x8x128xf32> to vector<64x128xf32>
      %237 = arith.truncf %236 : vector<64x128xf32> to vector<64x128xbf16>
      %c0_81 = arith.constant 0 : index
      %c0_82 = arith.constant 0 : index
      %c0_83 = arith.constant 0 : index
      %238 = vector.load %arg2[%c0_81, %c0_82, %c0_83] : memref<1x128x512xbf16, #tpu.memory_space<vmem>>, vector<1x128x512xbf16>
      %239 = vector.shape_cast %238 : vector<1x128x512xbf16> to vector<128x512xbf16>
      %cst_84 = arith.constant dense<0.000000e+00> : vector<64x512xf32>
      %240 = tpu.matmul %237, %239, %cst_84 {dimension_numbers = #tpu.dot_dimension_numbers<[1], [0], [0], [1], [0, 0, 1, 1], [], []>} : vector<64x128xbf16>, vector<128x512xbf16>, vector<64x512xf32> -> vector<64x512xf32>
      %c0_85 = arith.constant 0 : index
      %c0_86 = arith.constant 0 : index
      %c0_87 = arith.constant 0 : index
      %241 = vector.load %arg4[%c0_85, %c0_86, %c0_87] : memref<1x1x512xf32, #tpu.memory_space<vmem>>, vector<1x1x512xf32>
      %242 = vector.shape_cast %241 : vector<1x1x512xf32> to vector<1x512xf32>
      %243 = vector.broadcast %242 : vector<1x512xf32> to vector<64x512xf32>
      %244 = arith.addf %240, %243 : vector<64x512xf32>
      %245 = vector.shape_cast %244 : vector<64x512xf32> to vector<8x8x512xf32>
      %c0_88 = arith.constant 0 : index
      %c0_89 = arith.constant 0 : index
      %c0_90 = arith.constant 0 : index
      %246 = vector.load %arg8[%c0_88, %c0_89, %c0_90] : memref<8x8x512xf32, #tpu.memory_space<vmem>>, vector<8x8x512xf32>
      tpu.vector_store %arg8[%c0_88, %c0_89, %c0_90], %245 {strides = array<i32>} : memref<8x8x512xf32, #tpu.memory_space<vmem>>, vector<8x8x512xf32>,
    } else {
    }
    %c0_i32_1 = arith.constant 0 : i32
    %3 = arith.cmpi sgt, %arg0, %c0_i32_1 : i32
    %4 = arith.extui %3 : i1 to i32
    %c0_i32_2 = arith.constant 0 : i32
    %5 = arith.cmpi ne, %4, %c0_i32_2 : i32
    scf.if %5 {
      %c0_78 = arith.constant 0 : index
      %c0_79 = arith.constant 0 : index
      %c0_80 = arith.constant 0 : index
      %235 = vector.load %arg9[%c0_78, %c0_79, %c0_80] : memref<8x8x128xf32, #tpu.memory_space<vmem>>, vector<8x8x128xf32>
      %236 = vector.shape_cast %235 : vector<8x8x128xf32> to vector<64x128xf32>
      %237 = arith.truncf %236 : vector<64x128xf32> to vector<64x128xbf16>
      %c0_81 = arith.constant 0 : index
      %c0_82 = arith.constant 0 : index
      %c0_83 = arith.constant 0 : index
      %238 = vector.load %arg2[%c0_81, %c0_82, %c0_83] : memref<1x128x512xbf16, #tpu.memory_space<vmem>>, vector<1x128x512xbf16>
      %239 = vector.shape_cast %238 : vector<1x128x512xbf16> to vector<128x512xbf16>
      %cst_84 = arith.constant dense<0.000000e+00> : vector<64x512xf32>
      %240 = tpu.matmul %237, %239, %cst_84 {dimension_numbers = #tpu.dot_dimension_numbers<[1], [0], [0], [1], [0, 0, 1, 1], [], []>} : vector<64x128xbf16>, vector<128x512xbf16>, vector<64x512xf32> -> vector<64x512xf32>
      %c0_85 = arith.constant 0 : index
      %c0_86 = arith.constant 0 : index
      %c0_87 = arith.constant 0 : index
      %241 = vector.load %arg4[%c0_85, %c0_86, %c0_87] : memref<1x1x512xf32, #tpu.memory_space<vmem>>, vector<1x1x512xf32>
      %242 = vector.shape_cast %241 : vector<1x1x512xf32> to vector<1x512xf32>
      %243 = vector.broadcast %242 : vector<1x512xf32> to vector<64x512xf32>
      %244 = arith.addf %240, %243 : vector<64x512xf32>
      %245 = vector.shape_cast %244 : vector<64x512xf32> to vector<8x8x512xf32>
      %c0_88 = arith.constant 0 : index
      %c0_89 = arith.constant 0 : index
      %c0_90 = arith.constant 0 : index
      %246 = vector.load %arg8[%c0_88, %c0_89, %c0_90] : memref<8x8x512xf32, #tpu.memory_space<vmem>>, vector<8x8x512xf32>
      tpu.vector_store %arg8[%c0_88, %c0_89, %c0_90], %245 {strides = array<i32>} : memref<8x8x512xf32, #tpu.memory_space<vmem>>, vector<8x8x512xf32>,
    } else {
    }
    %cst = arith.constant 0.000000e+00 : f32
    %6 = vector.broadcast %cst : f32 to vector<8x128xf32>
    %cst_3 = arith.constant 0.000000e+00 : f32
    %7 = vector.broadcast %cst_3 : f32 to vector<8x128xf32>
    %c0_i32_4 = arith.constant 0 : i32
    %8 = arith.index_cast %c0_i32_4 : i32 to index
    %c0 = arith.constant 0 : index
    %c0_5 = arith.constant 0 : index
    %9 = vector.load %arg8[%8, %c0, %c0_5] : memref<8x8x512xf32, #tpu.memory_space<vmem>>, vector<1x8x512xf32>
    %10 = vector.shape_cast %9 : vector<1x8x512xf32> to vector<8x512xf32>
    %11 = arith.truncf %6 : vector<8x128xf32> to vector<8x128xbf16>
    %c0_6 = arith.constant 0 : index
    %c0_7 = arith.constant 0 : index
    %c0_8 = arith.constant 0 : index
    %12 = vector.load %arg3[%c0_6, %c0_7, %c0_8] : memref<1x128x512xbf16, #tpu.memory_space<vmem>>, vector<1x128x512xbf16>
    %13 = vector.shape_cast %12 : vector<1x128x512xbf16> to vector<128x512xbf16>
    %cst_9 = arith.constant dense<0.000000e+00> : vector<8x512xf32>
    %14 = tpu.matmul %11, %13, %cst_9 {dimension_numbers = #tpu.dot_dimension_numbers<[1], [0], [0], [1], [0, 0, 1, 1], [], []>} : vector<8x128xbf16>, vector<128x512xbf16>, vector<8x512xf32> -> vector<8x512xf32>
    %15 = arith.addf %10, %14 : vector<8x512xf32>
    %16 = vector.extract_strided_slice %15 {offsets = [0, 0], sizes = [8, 384], strides = [1, 1]} : vector<8x512xf32> to vector<8x384xf32>
    %17 = arith.negf %16 : vector<8x384xf32>
    %18 = math.exp %17 : vector<8x384xf32>
    %cst_10 = arith.constant 1.000000e+00 : f32
    %19 = vector.broadcast %cst_10 : f32 to vector<8x384xf32>
    %20 = arith.addf %19, %18 : vector<8x384xf32>
    %21 = arith.divf %19, %20 : vector<8x384xf32>
    %22 = vector.extract_strided_slice %21 {offsets = [0, 0], sizes = [8, 128], strides = [1, 1]} : vector<8x384xf32> to vector<8x128xf32>
    %23 = vector.extract_strided_slice %21 {offsets = [0, 128], sizes = [8, 128], strides = [1, 1]} : vector<8x384xf32> to vector<8x128xf32>
    %24 = vector.extract_strided_slice %21 {offsets = [0, 256], sizes = [8, 128], strides = [1, 1]} : vector<8x384xf32> to vector<8x128xf32>
    %25 = vector.extract_strided_slice %15 {offsets = [0, 384], sizes = [8, 128], strides = [1, 1]} : vector<8x512xf32> to vector<8x128xf32>
    %26 = math.tanh %25 : vector<8x128xf32>
    %27 = arith.mulf %23, %7 : vector<8x128xf32>
    %28 = arith.mulf %22, %26 : vector<8x128xf32>
    %29 = arith.addf %27, %28 : vector<8x128xf32>
    %30 = math.tanh %29 : vector<8x128xf32>
    %31 = arith.mulf %24, %30 : vector<8x128xf32>
    %32 = arith.index_cast %c0_i32_4 : i32 to index
    %c0_11 = arith.constant 0 : index
    %c0_12 = arith.constant 0 : index
    %33 = vector.load %arg9[%32, %c0_11, %c0_12] : memref<8x8x128xf32, #tpu.memory_space<vmem>>, vector<1x8x128xf32>
    %34 = vector.shape_cast %33 : vector<1x8x128xf32> to vector<8x128xf32>
    %35 = vector.shape_cast %31 : vector<8x128xf32> to vector<1x8x128xf32>
    tpu.vector_store %arg9[%32, %c0_11, %c0_12], %35 {strides = array<i32>} : memref<8x8x128xf32, #tpu.memory_space<vmem>>, vector<1x8x128xf32>,
    %c1_i32 = arith.constant 1 : i32
    %36 = arith.index_cast %c1_i32 : i32 to index
    %c0_13 = arith.constant 0 : index
    %c0_14 = arith.constant 0 : index
    %37 = vector.load %arg8[%36, %c0_13, %c0_14] : memref<8x8x512xf32, #tpu.memory_space<vmem>>, vector<1x8x512xf32>
    %38 = vector.shape_cast %37 : vector<1x8x512xf32> to vector<8x512xf32>
    %39 = arith.truncf %31 : vector<8x128xf32> to vector<8x128xbf16>
    %c0_15 = arith.constant 0 : index
    %c0_16 = arith.constant 0 : index
    %c0_17 = arith.constant 0 : index
    %40 = vector.load %arg3[%c0_15, %c0_16, %c0_17] : memref<1x128x512xbf16, #tpu.memory_space<vmem>>, vector<1x128x512xbf16>
    %41 = vector.shape_cast %40 : vector<1x128x512xbf16> to vector<128x512xbf16>
    %cst_18 = arith.constant dense<0.000000e+00> : vector<8x512xf32>
    %42 = tpu.matmul %39, %41, %cst_18 {dimension_numbers = #tpu.dot_dimension_numbers<[1], [0], [0], [1], [0, 0, 1, 1], [], []>} : vector<8x128xbf16>, vector<128x512xbf16>, vector<8x512xf32> -> vector<8x512xf32>
    %43 = arith.addf %38, %42 : vector<8x512xf32>
    %44 = vector.extract_strided_slice %43 {offsets = [0, 0], sizes = [8, 384], strides = [1, 1]} : vector<8x512xf32> to vector<8x384xf32>
    %45 = arith.negf %44 : vector<8x384xf32>
    %46 = math.exp %45 : vector<8x384xf32>
    %cst_19 = arith.constant 1.000000e+00 : f32
    %47 = vector.broadcast %cst_19 : f32 to vector<8x384xf32>
    %48 = arith.addf %47, %46 : vector<8x384xf32>
    %49 = arith.divf %47, %48 : vector<8x384xf32>
    %50 = vector.extract_strided_slice %49 {offsets = [0, 0], sizes = [8, 128], strides = [1, 1]} : vector<8x384xf32> to vector<8x128xf32>
    %51 = vector.extract_strided_slice %49 {offsets = [0, 128], sizes = [8, 128], strides = [1, 1]} : vector<8x384xf32> to vector<8x128xf32>
    %52 = vector.extract_strided_slice %49 {offsets = [0, 256], sizes = [8, 128], strides = [1, 1]} : vector<8x384xf32> to vector<8x128xf32>
    %53 = vector.extract_strided_slice %43 {offsets = [0, 384], sizes = [8, 128], strides = [1, 1]} : vector<8x512xf32> to vector<8x128xf32>
    %54 = math.tanh %53 : vector<8x128xf32>
    %55 = arith.mulf %51, %29 : vector<8x128xf32>
    %56 = arith.mulf %50, %54 : vector<8x128xf32>
    %57 = arith.addf %55, %56 : vector<8x128xf32>
    %58 = math.tanh %57 : vector<8x128xf32>
    %59 = arith.mulf %52, %58 : vector<8x128xf32>
    %60 = arith.index_cast %c1_i32 : i32 to index
    %c0_20 = arith.constant 0 : index
    %c0_21 = arith.constant 0 : index
    %61 = vector.load %arg9[%60, %c0_20, %c0_21] : memref<8x8x128xf32, #tpu.memory_space<vmem>>, vector<1x8x128xf32>
    %62 = vector.shape_cast %61 : vector<1x8x128xf32> to vector<8x128xf32>
    %63 = vector.shape_cast %59 : vector<8x128xf32> to vector<1x8x128xf32>
    tpu.vector_store %arg9[%60, %c0_20, %c0_21], %63 {strides = array<i32>} : memref<8x8x128xf32, #tpu.memory_space<vmem>>, vector<1x8x128xf32>,
    %c2_i32 = arith.constant 2 : i32
    %64 = arith.index_cast %c2_i32 : i32 to index
    %c0_22 = arith.constant 0 : index
    %c0_23 = arith.constant 0 : index
    %65 = vector.load %arg8[%64, %c0_22, %c0_23] : memref<8x8x512xf32, #tpu.memory_space<vmem>>, vector<1x8x512xf32>
    %66 = vector.shape_cast %65 : vector<1x8x512xf32> to vector<8x512xf32>
    %67 = arith.truncf %59 : vector<8x128xf32> to vector<8x128xbf16>
    %c0_24 = arith.constant 0 : index
    %c0_25 = arith.constant 0 : index
    %c0_26 = arith.constant 0 : index
    %68 = vector.load %arg3[%c0_24, %c0_25, %c0_26] : memref<1x128x512xbf16, #tpu.memory_space<vmem>>, vector<1x128x512xbf16>
    %69 = vector.shape_cast %68 : vector<1x128x512xbf16> to vector<128x512xbf16>
    %cst_27 = arith.constant dense<0.000000e+00> : vector<8x512xf32>
    %70 = tpu.matmul %67, %69, %cst_27 {dimension_numbers = #tpu.dot_dimension_numbers<[1], [0], [0], [1], [0, 0, 1, 1], [], []>} : vector<8x128xbf16>, vector<128x512xbf16>, vector<8x512xf32> -> vector<8x512xf32>
    %71 = arith.addf %66, %70 : vector<8x512xf32>
    %72 = vector.extract_strided_slice %71 {offsets = [0, 0], sizes = [8, 384], strides = [1, 1]} : vector<8x512xf32> to vector<8x384xf32>
    %73 = arith.negf %72 : vector<8x384xf32>
    %74 = math.exp %73 : vector<8x384xf32>
    %cst_28 = arith.constant 1.000000e+00 : f32
    %75 = vector.broadcast %cst_28 : f32 to vector<8x384xf32>
    %76 = arith.addf %75, %74 : vector<8x384xf32>
    %77 = arith.divf %75, %76 : vector<8x384xf32>
    %78 = vector.extract_strided_slice %77 {offsets = [0, 0], sizes = [8, 128], strides = [1, 1]} : vector<8x384xf32> to vector<8x128xf32>
    %79 = vector.extract_strided_slice %77 {offsets = [0, 128], sizes = [8, 128], strides = [1, 1]} : vector<8x384xf32> to vector<8x128xf32>
    %80 = vector.extract_strided_slice %77 {offsets = [0, 256], sizes = [8, 128], strides = [1, 1]} : vector<8x384xf32> to vector<8x128xf32>
    %81 = vector.extract_strided_slice %71 {offsets = [0, 384], sizes = [8, 128], strides = [1, 1]} : vector<8x512xf32> to vector<8x128xf32>
    %82 = math.tanh %81 : vector<8x128xf32>
    %83 = arith.mulf %79, %57 : vector<8x128xf32>
    %84 = arith.mulf %78, %82 : vector<8x128xf32>
    %85 = arith.addf %83, %84 : vector<8x128xf32>
    %86 = math.tanh %85 : vector<8x128xf32>
    %87 = arith.mulf %80, %86 : vector<8x128xf32>
    %88 = arith.index_cast %c2_i32 : i32 to index
    %c0_29 = arith.constant 0 : index
    %c0_30 = arith.constant 0 : index
    %89 = vector.load %arg9[%88, %c0_29, %c0_30] : memref<8x8x128xf32, #tpu.memory_space<vmem>>, vector<1x8x128xf32>
    %90 = vector.shape_cast %89 : vector<1x8x128xf32> to vector<8x128xf32>
    %91 = vector.shape_cast %87 : vector<8x128xf32> to vector<1x8x128xf32>
    tpu.vector_store %arg9[%88, %c0_29, %c0_30], %91 {strides = array<i32>} : memref<8x8x128xf32, #tpu.memory_space<vmem>>, vector<1x8x128xf32>,
    %c3_i32 = arith.constant 3 : i32
    %92 = arith.index_cast %c3_i32 : i32 to index
    %c0_31 = arith.constant 0 : index
    %c0_32 = arith.constant 0 : index
    %93 = vector.load %arg8[%92, %c0_31, %c0_32] : memref<8x8x512xf32, #tpu.memory_space<vmem>>, vector<1x8x512xf32>
    %94 = vector.shape_cast %93 : vector<1x8x512xf32> to vector<8x512xf32>
    %95 = arith.truncf %87 : vector<8x128xf32> to vector<8x128xbf16>
    %c0_33 = arith.constant 0 : index
    %c0_34 = arith.constant 0 : index
    %c0_35 = arith.constant 0 : index
    %96 = vector.load %arg3[%c0_33, %c0_34, %c0_35] : memref<1x128x512xbf16, #tpu.memory_space<vmem>>, vector<1x128x512xbf16>
    %97 = vector.shape_cast %96 : vector<1x128x512xbf16> to vector<128x512xbf16>
    %cst_36 = arith.constant dense<0.000000e+00> : vector<8x512xf32>
    %98 = tpu.matmul %95, %97, %cst_36 {dimension_numbers = #tpu.dot_dimension_numbers<[1], [0], [0], [1], [0, 0, 1, 1], [], []>} : vector<8x128xbf16>, vector<128x512xbf16>, vector<8x512xf32> -> vector<8x512xf32>
    %99 = arith.addf %94, %98 : vector<8x512xf32>
    %100 = vector.extract_strided_slice %99 {offsets = [0, 0], sizes = [8, 384], strides = [1, 1]} : vector<8x512xf32> to vector<8x384xf32>
    %101 = arith.negf %100 : vector<8x384xf32>
    %102 = math.exp %101 : vector<8x384xf32>
    %cst_37 = arith.constant 1.000000e+00 : f32
    %103 = vector.broadcast %cst_37 : f32 to vector<8x384xf32>
    %104 = arith.addf %103, %102 : vector<8x384xf32>
    %105 = arith.divf %103, %104 : vector<8x384xf32>
    %106 = vector.extract_strided_slice %105 {offsets = [0, 0], sizes = [8, 128], strides = [1, 1]} : vector<8x384xf32> to vector<8x128xf32>
    %107 = vector.extract_strided_slice %105 {offsets = [0, 128], sizes = [8, 128], strides = [1, 1]} : vector<8x384xf32> to vector<8x128xf32>
    %108 = vector.extract_strided_slice %105 {offsets = [0, 256], sizes = [8, 128], strides = [1, 1]} : vector<8x384xf32> to vector<8x128xf32>
    %109 = vector.extract_strided_slice %99 {offsets = [0, 384], sizes = [8, 128], strides = [1, 1]} : vector<8x512xf32> to vector<8x128xf32>
    %110 = math.tanh %109 : vector<8x128xf32>
    %111 = arith.mulf %107, %85 : vector<8x128xf32>
    %112 = arith.mulf %106, %110 : vector<8x128xf32>
    %113 = arith.addf %111, %112 : vector<8x128xf32>
    %114 = math.tanh %113 : vector<8x128xf32>
    %115 = arith.mulf %108, %114 : vector<8x128xf32>
    %116 = arith.index_cast %c3_i32 : i32 to index
    %c0_38 = arith.constant 0 : index
    %c0_39 = arith.constant 0 : index
    %117 = vector.load %arg9[%116, %c0_38, %c0_39] : memref<8x8x128xf32, #tpu.memory_space<vmem>>, vector<1x8x128xf32>
    %118 = vector.shape_cast %117 : vector<1x8x128xf32> to vector<8x128xf32>
    %119 = vector.shape_cast %115 : vector<8x128xf32> to vector<1x8x128xf32>
    tpu.vector_store %arg9[%116, %c0_38, %c0_39], %119 {strides = array<i32>} : memref<8x8x128xf32, #tpu.memory_space<vmem>>, vector<1x8x128xf32>,
    %c4_i32 = arith.constant 4 : i32
    %120 = arith.index_cast %c4_i32 : i32 to index
    %c0_40 = arith.constant 0 : index
    %c0_41 = arith.constant 0 : index
    %121 = vector.load %arg8[%120, %c0_40, %c0_41] : memref<8x8x512xf32, #tpu.memory_space<vmem>>, vector<1x8x512xf32>
    %122 = vector.shape_cast %121 : vector<1x8x512xf32> to vector<8x512xf32>
    %123 = arith.truncf %115 : vector<8x128xf32> to vector<8x128xbf16>
    %c0_42 = arith.constant 0 : index
    %c0_43 = arith.constant 0 : index
    %c0_44 = arith.constant 0 : index
    %124 = vector.load %arg3[%c0_42, %c0_43, %c0_44] : memref<1x128x512xbf16, #tpu.memory_space<vmem>>, vector<1x128x512xbf16>
    %125 = vector.shape_cast %124 : vector<1x128x512xbf16> to vector<128x512xbf16>
    %cst_45 = arith.constant dense<0.000000e+00> : vector<8x512xf32>
    %126 = tpu.matmul %123, %125, %cst_45 {dimension_numbers = #tpu.dot_dimension_numbers<[1], [0], [0], [1], [0, 0, 1, 1], [], []>} : vector<8x128xbf16>, vector<128x512xbf16>, vector<8x512xf32> -> vector<8x512xf32>
    %127 = arith.addf %122, %126 : vector<8x512xf32>
    %128 = vector.extract_strided_slice %127 {offsets = [0, 0], sizes = [8, 384], strides = [1, 1]} : vector<8x512xf32> to vector<8x384xf32>
    %129 = arith.negf %128 : vector<8x384xf32>
    %130 = math.exp %129 : vector<8x384xf32>
    %cst_46 = arith.constant 1.000000e+00 : f32
    %131 = vector.broadcast %cst_46 : f32 to vector<8x384xf32>
    %132 = arith.addf %131, %130 : vector<8x384xf32>
    %133 = arith.divf %131, %132 : vector<8x384xf32>
    %134 = vector.extract_strided_slice %133 {offsets = [0, 0], sizes = [8, 128], strides = [1, 1]} : vector<8x384xf32> to vector<8x128xf32>
    %135 = vector.extract_strided_slice %133 {offsets = [0, 128], sizes = [8, 128], strides = [1, 1]} : vector<8x384xf32> to vector<8x128xf32>
    %136 = vector.extract_strided_slice %133 {offsets = [0, 256], sizes = [8, 128], strides = [1, 1]} : vector<8x384xf32> to vector<8x128xf32>
    %137 = vector.extract_strided_slice %127 {offsets = [0, 384], sizes = [8, 128], strides = [1, 1]} : vector<8x512xf32> to vector<8x128xf32>
    %138 = math.tanh %137 : vector<8x128xf32>
    %139 = arith.mulf %135, %113 : vector<8x128xf32>
    %140 = arith.mulf %134, %138 : vector<8x128xf32>
    %141 = arith.addf %139, %140 : vector<8x128xf32>
    %142 = math.tanh %141 : vector<8x128xf32>
    %143 = arith.mulf %136, %142 : vector<8x128xf32>
    %144 = arith.index_cast %c4_i32 : i32 to index
    %c0_47 = arith.constant 0 : index
    %c0_48 = arith.constant 0 : index
    %145 = vector.load %arg9[%144, %c0_47, %c0_48] : memref<8x8x128xf32, #tpu.memory_space<vmem>>, vector<1x8x128xf32>
    %146 = vector.shape_cast %145 : vector<1x8x128xf32> to vector<8x128xf32>
    %147 = vector.shape_cast %143 : vector<8x128xf32> to vector<1x8x128xf32>
    tpu.vector_store %arg9[%144, %c0_47, %c0_48], %147 {strides = array<i32>} : memref<8x8x128xf32, #tpu.memory_space<vmem>>, vector<1x8x128xf32>,
    %c5_i32 = arith.constant 5 : i32
    %148 = arith.index_cast %c5_i32 : i32 to index
    %c0_49 = arith.constant 0 : index
    %c0_50 = arith.constant 0 : index
    %149 = vector.load %arg8[%148, %c0_49, %c0_50] : memref<8x8x512xf32, #tpu.memory_space<vmem>>, vector<1x8x512xf32>
    %150 = vector.shape_cast %149 : vector<1x8x512xf32> to vector<8x512xf32>
    %151 = arith.truncf %143 : vector<8x128xf32> to vector<8x128xbf16>
    %c0_51 = arith.constant 0 : index
    %c0_52 = arith.constant 0 : index
    %c0_53 = arith.constant 0 : index
    %152 = vector.load %arg3[%c0_51, %c0_52, %c0_53] : memref<1x128x512xbf16, #tpu.memory_space<vmem>>, vector<1x128x512xbf16>
    %153 = vector.shape_cast %152 : vector<1x128x512xbf16> to vector<128x512xbf16>
    %cst_54 = arith.constant dense<0.000000e+00> : vector<8x512xf32>
    %154 = tpu.matmul %151, %153, %cst_54 {dimension_numbers = #tpu.dot_dimension_numbers<[1], [0], [0], [1], [0, 0, 1, 1], [], []>} : vector<8x128xbf16>, vector<128x512xbf16>, vector<8x512xf32> -> vector<8x512xf32>
    %155 = arith.addf %150, %154 : vector<8x512xf32>
    %156 = vector.extract_strided_slice %155 {offsets = [0, 0], sizes = [8, 384], strides = [1, 1]} : vector<8x512xf32> to vector<8x384xf32>
    %157 = arith.negf %156 : vector<8x384xf32>
    %158 = math.exp %157 : vector<8x384xf32>
    %cst_55 = arith.constant 1.000000e+00 : f32
    %159 = vector.broadcast %cst_55 : f32 to vector<8x384xf32>
    %160 = arith.addf %159, %158 : vector<8x384xf32>
    %161 = arith.divf %159, %160 : vector<8x384xf32>
    %162 = vector.extract_strided_slice %161 {offsets = [0, 0], sizes = [8, 128], strides = [1, 1]} : vector<8x384xf32> to vector<8x128xf32>
    %163 = vector.extract_strided_slice %161 {offsets = [0, 128], sizes = [8, 128], strides = [1, 1]} : vector<8x384xf32> to vector<8x128xf32>
    %164 = vector.extract_strided_slice %161 {offsets = [0, 256], sizes = [8, 128], strides = [1, 1]} : vector<8x384xf32> to vector<8x128xf32>
    %165 = vector.extract_strided_slice %155 {offsets = [0, 384], sizes = [8, 128], strides = [1, 1]} : vector<8x512xf32> to vector<8x128xf32>
    %166 = math.tanh %165 : vector<8x128xf32>
    %167 = arith.mulf %163, %141 : vector<8x128xf32>
    %168 = arith.mulf %162, %166 : vector<8x128xf32>
    %169 = arith.addf %167, %168 : vector<8x128xf32>
    %170 = math.tanh %169 : vector<8x128xf32>
    %171 = arith.mulf %164, %170 : vector<8x128xf32>
    %172 = arith.index_cast %c5_i32 : i32 to index
    %c0_56 = arith.constant 0 : index
    %c0_57 = arith.constant 0 : index
    %173 = vector.load %arg9[%172, %c0_56, %c0_57] : memref<8x8x128xf32, #tpu.memory_space<vmem>>, vector<1x8x128xf32>
    %174 = vector.shape_cast %173 : vector<1x8x128xf32> to vector<8x128xf32>
    %175 = vector.shape_cast %171 : vector<8x128xf32> to vector<1x8x128xf32>
    tpu.vector_store %arg9[%172, %c0_56, %c0_57], %175 {strides = array<i32>} : memref<8x8x128xf32, #tpu.memory_space<vmem>>, vector<1x8x128xf32>,
    %c6_i32 = arith.constant 6 : i32
    %176 = arith.index_cast %c6_i32 : i32 to index
    %c0_58 = arith.constant 0 : index
    %c0_59 = arith.constant 0 : index
    %177 = vector.load %arg8[%176, %c0_58, %c0_59] : memref<8x8x512xf32, #tpu.memory_space<vmem>>, vector<1x8x512xf32>
    %178 = vector.shape_cast %177 : vector<1x8x512xf32> to vector<8x512xf32>
    %179 = arith.truncf %171 : vector<8x128xf32> to vector<8x128xbf16>
    %c0_60 = arith.constant 0 : index
    %c0_61 = arith.constant 0 : index
    %c0_62 = arith.constant 0 : index
    %180 = vector.load %arg3[%c0_60, %c0_61, %c0_62] : memref<1x128x512xbf16, #tpu.memory_space<vmem>>, vector<1x128x512xbf16>
    %181 = vector.shape_cast %180 : vector<1x128x512xbf16> to vector<128x512xbf16>
    %cst_63 = arith.constant dense<0.000000e+00> : vector<8x512xf32>
    %182 = tpu.matmul %179, %181, %cst_63 {dimension_numbers = #tpu.dot_dimension_numbers<[1], [0], [0], [1], [0, 0, 1, 1], [], []>} : vector<8x128xbf16>, vector<128x512xbf16>, vector<8x512xf32> -> vector<8x512xf32>
    %183 = arith.addf %178, %182 : vector<8x512xf32>
    %184 = vector.extract_strided_slice %183 {offsets = [0, 0], sizes = [8, 384], strides = [1, 1]} : vector<8x512xf32> to vector<8x384xf32>
    %185 = arith.negf %184 : vector<8x384xf32>
    %186 = math.exp %185 : vector<8x384xf32>
    %cst_64 = arith.constant 1.000000e+00 : f32
    %187 = vector.broadcast %cst_64 : f32 to vector<8x384xf32>
    %188 = arith.addf %187, %186 : vector<8x384xf32>
    %189 = arith.divf %187, %188 : vector<8x384xf32>
    %190 = vector.extract_strided_slice %189 {offsets = [0, 0], sizes = [8, 128], strides = [1, 1]} : vector<8x384xf32> to vector<8x128xf32>
    %191 = vector.extract_strided_slice %189 {offsets = [0, 128], sizes = [8, 128], strides = [1, 1]} : vector<8x384xf32> to vector<8x128xf32>
    %192 = vector.extract_strided_slice %189 {offsets = [0, 256], sizes = [8, 128], strides = [1, 1]} : vector<8x384xf32> to vector<8x128xf32>
    %193 = vector.extract_strided_slice %183 {offsets = [0, 384], sizes = [8, 128], strides = [1, 1]} : vector<8x512xf32> to vector<8x128xf32>
    %194 = math.tanh %193 : vector<8x128xf32>
    %195 = arith.mulf %191, %169 : vector<8x128xf32>
    %196 = arith.mulf %190, %194 : vector<8x128xf32>
    %197 = arith.addf %195, %196 : vector<8x128xf32>
    %198 = math.tanh %197 : vector<8x128xf32>
    %199 = arith.mulf %192, %198 : vector<8x128xf32>
    %200 = arith.index_cast %c6_i32 : i32 to index
    %c0_65 = arith.constant 0 : index
    %c0_66 = arith.constant 0 : index
    %201 = vector.load %arg9[%200, %c0_65, %c0_66] : memref<8x8x128xf32, #tpu.memory_space<vmem>>, vector<1x8x128xf32>
    %202 = vector.shape_cast %201 : vector<1x8x128xf32> to vector<8x128xf32>
    %203 = vector.shape_cast %199 : vector<8x128xf32> to vector<1x8x128xf32>
    tpu.vector_store %arg9[%200, %c0_65, %c0_66], %203 {strides = array<i32>} : memref<8x8x128xf32, #tpu.memory_space<vmem>>, vector<1x8x128xf32>,
    %c7_i32 = arith.constant 7 : i32
    %204 = arith.index_cast %c7_i32 : i32 to index
    %c0_67 = arith.constant 0 : index
    %c0_68 = arith.constant 0 : index
    %205 = vector.load %arg8[%204, %c0_67, %c0_68] : memref<8x8x512xf32, #tpu.memory_space<vmem>>, vector<1x8x512xf32>
    %206 = vector.shape_cast %205 : vector<1x8x512xf32> to vector<8x512xf32>
    %207 = arith.truncf %199 : vector<8x128xf32> to vector<8x128xbf16>
    %c0_69 = arith.constant 0 : index
    %c0_70 = arith.constant 0 : index
    %c0_71 = arith.constant 0 : index
    %208 = vector.load %arg3[%c0_69, %c0_70, %c0_71] : memref<1x128x512xbf16, #tpu.memory_space<vmem>>, vector<1x128x512xbf16>
    %209 = vector.shape_cast %208 : vector<1x128x512xbf16> to vector<128x512xbf16>
    %cst_72 = arith.constant dense<0.000000e+00> : vector<8x512xf32>
    %210 = tpu.matmul %207, %209, %cst_72 {dimension_numbers = #tpu.dot_dimension_numbers<[1], [0], [0], [1], [0, 0, 1, 1], [], []>} : vector<8x128xbf16>, vector<128x512xbf16>, vector<8x512xf32> -> vector<8x512xf32>
    %211 = arith.addf %206, %210 : vector<8x512xf32>
    %212 = vector.extract_strided_slice %211 {offsets = [0, 0], sizes = [8, 384], strides = [1, 1]} : vector<8x512xf32> to vector<8x384xf32>
    %213 = arith.negf %212 : vector<8x384xf32>
    %214 = math.exp %213 : vector<8x384xf32>
    %cst_73 = arith.constant 1.000000e+00 : f32
    %215 = vector.broadcast %cst_73 : f32 to vector<8x384xf32>
    %216 = arith.addf %215, %214 : vector<8x384xf32>
    %217 = arith.divf %215, %216 : vector<8x384xf32>
    %218 = vector.extract_strided_slice %217 {offsets = [0, 0], sizes = [8, 128], strides = [1, 1]} : vector<8x384xf32> to vector<8x128xf32>
    %219 = vector.extract_strided_slice %217 {offsets = [0, 128], sizes = [8, 128], strides = [1, 1]} : vector<8x384xf32> to vector<8x128xf32>
    %220 = vector.extract_strided_slice %217 {offsets = [0, 256], sizes = [8, 128], strides = [1, 1]} : vector<8x384xf32> to vector<8x128xf32>
    %221 = vector.extract_strided_slice %211 {offsets = [0, 384], sizes = [8, 128], strides = [1, 1]} : vector<8x512xf32> to vector<8x128xf32>
    %222 = math.tanh %221 : vector<8x128xf32>
    %223 = arith.mulf %219, %197 : vector<8x128xf32>
    %224 = arith.mulf %218, %222 : vector<8x128xf32>
    %225 = arith.addf %223, %224 : vector<8x128xf32>
    %226 = math.tanh %225 : vector<8x128xf32>
    %227 = arith.mulf %220, %226 : vector<8x128xf32>
    %228 = arith.index_cast %c7_i32 : i32 to index
    %c0_74 = arith.constant 0 : index
    %c0_75 = arith.constant 0 : index
    %229 = vector.load %arg9[%228, %c0_74, %c0_75] : memref<8x8x128xf32, #tpu.memory_space<vmem>>, vector<1x8x128xf32>
    %230 = vector.shape_cast %229 : vector<1x8x128xf32> to vector<8x128xf32>
    %231 = vector.shape_cast %227 : vector<8x128xf32> to vector<1x8x128xf32>
    tpu.vector_store %arg9[%228, %c0_74, %c0_75], %231 {strides = array<i32>} : memref<8x8x128xf32, #tpu.memory_space<vmem>>, vector<1x8x128xf32>,
    %c8_i32 = arith.constant 8 : i32
    %c3_i32_76 = arith.constant 3 : i32
    %232 = arith.cmpi eq, %arg0, %c3_i32_76 : i32
    %233 = arith.extui %232 : i1 to i32
    %c0_i32_77 = arith.constant 0 : i32
    %234 = arith.cmpi ne, %233, %c0_i32_77 : i32
    scf.if %234 {
      %235 = arith.truncf %227 : vector<8x128xf32> to vector<8x128xbf16>
      %c0_78 = arith.constant 0 : index
      %c0_79 = arith.constant 0 : index
      %236 = vector.load %arg5[%c0_78, %c0_79] : memref<128x128xbf16, #tpu.memory_space<vmem>>, vector<128x128xbf16>
      %cst_80 = arith.constant dense<0.000000e+00> : vector<8x128xf32>
      %237 = tpu.matmul %235, %236, %cst_80 {dimension_numbers = #tpu.dot_dimension_numbers<[1], [0], [0], [1], [0, 0, 1, 1], [], []>} : vector<8x128xbf16>, vector<128x128xbf16>, vector<8x128xf32> -> vector<8x128xf32>
      %c0_81 = arith.constant 0 : index
      %c0_82 = arith.constant 0 : index
      %238 = vector.load %arg6[%c0_81, %c0_82] : memref<1x128xf32, #tpu.memory_space<vmem>>, vector<1x128xf32>
      %239 = vector.broadcast %238 : vector<1x128xf32> to vector<8x128xf32>
      %240 = arith.addf %237, %239 : vector<8x128xf32>
      %c0_83 = arith.constant 0 : index
      %c0_84 = arith.constant 0 : index
      %241 = vector.load %arg7[%c0_83, %c0_84] : memref<8x128xf32, #tpu.memory_space<vmem>>, vector<8x128xf32>
      tpu.vector_store %arg7[%c0_83, %c0_84], %240 {strides = array<i32>} : memref<8x128xf32, #tpu.memory_space<vmem>>, vector<8x128xf32>,
    } else {
    }
    return
  }
  func.func @transform_0(%arg0: i32) -> (i32, i32, i32) {
    %c0_i32 = arith.constant 0 : i32
    %c0_i32_0 = arith.constant 0 : i32
    %c0_i32_1 = arith.constant 0 : i32
    %c0_i32_2 = arith.constant 0 : i32
    return %c0_i32, %c0_i32_0, %c0_i32_1 : i32, i32, i32
  }
  func.func @transform_1(%arg0: i32) -> (i32, i32, i32) {
    %c0_i32 = arith.constant 0 : i32
    %c0_i32_0 = arith.constant 0 : i32
    %c0_i32_1 = arith.constant 0 : i32
    return %arg0, %c0_i32, %c0_i32_0 : i32, i32, i32
  }
  func.func @transform_2(%arg0: i32) -> (i32, i32, i32) {
    %c0_i32 = arith.constant 0 : i32
    %c0_i32_0 = arith.constant 0 : i32
    %c0_i32_1 = arith.constant 0 : i32
    return %arg0, %c0_i32, %c0_i32_0 : i32, i32, i32
  }
  func.func @transform_3(%arg0: i32) -> (i32, i32, i32) {
    %c0_i32 = arith.constant 0 : i32
    %c0_i32_0 = arith.constant 0 : i32
    %c0_i32_1 = arith.constant 0 : i32
    return %arg0, %c0_i32, %c0_i32_0 : i32, i32, i32
  }
  func.func @transform_4(%arg0: i32) -> (i32, i32) {
    %c0_i32 = arith.constant 0 : i32
    %c0_i32_0 = arith.constant 0 : i32
    %c0_i32_1 = arith.constant 0 : i32
    return %c0_i32, %c0_i32_0 : i32, i32
  }
  func.func @transform_5(%arg0: i32) -> (i32, i32) {
    %c0_i32 = arith.constant 0 : i32
    %c0_i32_0 = arith.constant 0 : i32
    %c0_i32_1 = arith.constant 0 : i32
    return %c0_i32, %c0_i32_0 : i32, i32
  }
  func.func @transform_6(%arg0: i32) -> (i32, i32) {
    %c0_i32 = arith.constant 0 : i32
    %c0_i32_0 = arith.constant 0 : i32
    %c0_i32_1 = arith.constant 0 : i32
    return %c0_i32, %c0_i32_0 : i32, i32
  }
}

</mosaic_0001>

<llo_original>
// kernel: rnn_forward.1
$region0: #{rnn_forward.1}
  #allocation0 [shape = 'u32[]', space=smem, size = 0x4, offset = 0x4, fixed_abs, tag = 'smem constant byte address 0x4 - core index']
  #allocation1 [shape = 'u32[144,128]{1,0:T(1,128)}', space=vmem, size = 0x12000, scoped, tag = 'internal scratch']
  #allocation2 [shape = 'f32[8,8,512]{2,1,0:T(8,128)}', space=vmem, size = 0x20000, scoped, tag = 'scratch operand']
  #allocation3 [shape = 'f32[8,8,128]{2,1,0:T(8,128)}', space=vmem, size = 0x8000, scoped, tag = 'scratch operand']
  %s0 = inlined_call_operand.vmem [shape: f32[8,8,128], index: 0, kind: input, shape index: {}]
  %s1 = inlined_call_operand.hbm [shape: bf16[4,128,512], index: 1, kind: input, shape index: {}]
  %s2 = inlined_call_operand.hbm [shape: bf16[4,128,512], index: 2, kind: input, shape index: {}]
  %s3 = inlined_call_operand.vmem [shape: f32[4,1,512], index: 3, kind: input, shape index: {}]
  %s4 = inlined_call_operand.vmem [shape: bf16[128,128], index: 4, kind: input, shape index: {}]
  %s5 = inlined_call_operand.vmem [shape: f32[1,128], index: 5, kind: input, shape index: {}]
  %s6 = inlined_call_operand.vmem [shape: f32[8,128], index: 6, kind: output, shape index: {}]
  %s7 = sld [smem:[#allocation0]]
  $region77: #{rnn_forward.1} parent=0
    _
  %s9 = ssub.s32 1, %s7
  %s10 = scalar_select 0, %s9, %s7
  $region1: #{rnn_forward.1} parent=0
    #allocation4 [shape = 'u8[262144]{0}', space=vmem, size = 0x40000, scoped, tag = 'input window, operand 1']
    #allocation5 [shape = 's32[2]{0}', space=sflag, size = 0x8, scoped, tag = 'scoped memory for rnn_forward.1']
    #allocation6 [shape = 'u8[262144]{0}', space=vmem, size = 0x40000, scoped, tag = 'input window, operand 2']
    #allocation7 [shape = 's32[2]{0}', space=sflag, size = 0x8, scoped, tag = 'scoped memory for rnn_forward.1']
    %11 = vsyncpa [#allocation5], 0
    %s12 = scalar_lea.sflag [#allocation5], 1
    %13 = vsyncpa %s12, 0
    %14 = vsyncpa [#allocation7], 0
    %s15 = scalar_lea.sflag [#allocation7], 1
    %16 = vsyncpa %s15, 0
    loop: start=0, step=1, limit=6
    $region2: #{rnn_forward.1} parent=1 // loop_pre_header
      _
    $region3: #{rnn_forward.1} parent=1 // loop_header
      %s18 = sphi 0, %s22
      %p19 = scmp.ge.s32.totalorder %s18, 6
      %s26 = sphi 0, %s26
      %s28 = sphi 0, %s26
      %s29 = sphi 0, %s28
      %s43 = sphi 0, %s29
      %s49 = sphi 0, %s51
      %s52 = sphi 0, %s49
      %s53 = sphi 0, %s52
      %s69 = sphi 0, %s53
      %s75 = sphi 0, %s77
      %s78 = sphi 0, %s75
      %s79 = sphi 0, %s78
      %s95 = sphi 0, %s79
      %s101 = sphi 0, %s103
      %s104 = sphi 0, %s101
      %s105 = sphi 0, %s104
      %s121 = sphi 0, %s105
      %s125 = sphi 0, %s125
      %s127 = sphi 0, %s125
      %s128 = sphi 0, %s127
      %s142 = sphi 0, %s128
      %s146 = sphi 0, %s146
      %s148 = sphi 0, %s146
      %s149 = sphi 0, %s148
      %s163 = sphi 0, %s149
      %s167 = sphi 0, %s167
      %s169 = sphi 0, %s167
      %s170 = sphi 0, %s169
      %s184 = sphi 0, %s170
    $region4: #{rnn_forward.1} parent=1 // loop_header_branch
      %21 = sbr.rel (%p19) target = $region8
    $region5: #{rnn_forward.1} parent=1 // loop_body
      %s23 = ssub.s32 %s18, 1
      %s24 = ssub.s32 %s18, 2
      %s25 = sadd.s32 %s18, 1
      %s27 = sadd.s32 %s26, 1
      %p30 = scmp.eq.s32.totalorder %s18, 3
      %p31 = scmp.ne.s32.totalorder %s26, %s28
      %p32 = scmp.eq.s32.totalorder %s18, 0
      %p33 = por %p31, %p32
      %p34 = scmp.ne.s32.totalorder %s26, %s28
      %p35 = scmp.eq.s32.totalorder %s23, 3
      %p36 = por %p34, %p35
      %p37 = scmp.ne.s32.totalorder %s28, %s29
      %p38 = scmp.eq.s32.totalorder %s23, 0
      %p39 = por %p37, %p38
      %p40 = scmp.ne.s32.totalorder %s28, %s29
      %p41 = scmp.eq.s32.totalorder %s24, 3
      %p42 = por %p40, %p41
      %p44 = scmp.ne.s32.totalorder %s29, %s43
      %p45 = scmp.eq.s32.totalorder %s24, 0
      %p46 = por %p44, %p45
      %s47 = ssub.s32 %s18, %s25
      %p48 = scmp.eq.s32.totalorder %s47, 0
      %s50 = sadd.s32 %s49, 1
      %s51 = scalar_select %p48, %s49, %s50
      %p54 = pneg %p48
      %p55 = scmp.eq.s32.totalorder %s18, 3
      %p56 = por %p54, %p55
      %p57 = scmp.ne.s32.totalorder %s49, %s52
      %p58 = scmp.eq.s32.totalorder %s18, 0
      %p59 = por %p57, %p58
      %p60 = scmp.ne.s32.totalorder %s49, %s52
      %p61 = scmp.eq.s32.totalorder %s23, 3
      %p62 = por %p60, %p61
      %p63 = scmp.ne.s32.totalorder %s52, %s53
      %p64 = scmp.eq.s32.totalorder %s23, 0
      %p65 = por %p63, %p64
      %p66 = scmp.ne.s32.totalorder %s52, %s53
      %p67 = scmp.eq.s32.totalorder %s24, 3
      %p68 = por %p66, %p67
      %p70 = scmp.ne.s32.totalorder %s53, %s69
      %p71 = scmp.eq.s32.totalorder %s24, 0
      %p72 = por %p70, %p71
      %s73 = ssub.s32 %s18, %s25
      %p74 = scmp.eq.s32.totalorder %s73, 0
      %s76 = sadd.s32 %s75, 1
      %s77 = scalar_select %p74, %s75, %s76
      %p80 = pneg %p74
      %p81 = scmp.eq.s32.totalorder %s18, 3
      %p82 = por %p80, %p81
      %p83 = scmp.ne.s32.totalorder %s75, %s78
      %p84 = scmp.eq.s32.totalorder %s18, 0
      %p85 = por %p83, %p84
      %p86 = scmp.ne.s32.totalorder %s75, %s78
      %p87 = scmp.eq.s32.totalorder %s23, 3
      %p88 = por %p86, %p87
      %p89 = scmp.ne.s32.totalorder %s78, %s79
      %p90 = scmp.eq.s32.totalorder %s23, 0
      %p91 = por %p89, %p90
      %p92 = scmp.ne.s32.totalorder %s78, %s79
      %p93 = scmp.eq.s32.totalorder %s24, 3
      %p94 = por %p92, %p93
      %p96 = scmp.ne.s32.totalorder %s79, %s95
      %p97 = scmp.eq.s32.totalorder %s24, 0
      %p98 = por %p96, %p97
      %s99 = ssub.s32 %s18, %s25
      %p100 = scmp.eq.s32.totalorder %s99, 0
      %s102 = sadd.s32 %s101, 1
      %s103 = scalar_select %p100, %s101, %s102
      %p106 = pneg %p100
      %p107 = scmp.eq.s32.totalorder %s18, 3
      %p108 = por %p106, %p107
      %p109 = scmp.ne.s32.totalorder %s101, %s104
      %p110 = scmp.eq.s32.totalorder %s18, 0
      %p111 = por %p109, %p110
      %p112 = scmp.ne.s32.totalorder %s101, %s104
      %p113 = scmp.eq.s32.totalorder %s23, 3
      %p114 = por %p112, %p113
      %p115 = scmp.ne.s32.totalorder %s104, %s105
      %p116 = scmp.eq.s32.totalorder %s23, 0
      %p117 = por %p115, %p116
      %p118 = scmp.ne.s32.totalorder %s104, %s105
      %p119 = scmp.eq.s32.totalorder %s24, 3
      %p120 = por %p118, %p119
      %p122 = scmp.ne.s32.totalorder %s105, %s121
      %p123 = scmp.eq.s32.totalorder %s24, 0
      %p124 = por %p122, %p123
      %s126 = sadd.s32 %s125, 1
      %p129 = scmp.eq.s32.totalorder %s18, 3
      %p130 = scmp.ne.s32.totalorder %s125, %s127
      %p131 = scmp.eq.s32.totalorder %s18, 0
      %p132 = por %p130, %p131
      %p133 = scmp.ne.s32.totalorder %s125, %s127
      %p134 = scmp.eq.s32.totalorder %s23, 3
      %p135 = por %p133, %p134
      %p136 = scmp.ne.s32.totalorder %s127, %s128
      %p137 = scmp.eq.s32.totalorder %s23, 0
      %p138 = por %p136, %p137
      %p139 = scmp.ne.s32.totalorder %s127, %s128
      %p140 = scmp.eq.s32.totalorder %s24, 3
      %p141 = por %p139, %p140
      %p143 = scmp.ne.s32.totalorder %s128, %s142
      %p144 = scmp.eq.s32.totalorder %s24, 0
      %p145 = por %p143, %p144
      %s147 = sadd.s32 %s146, 1
      %p150 = scmp.eq.s32.totalorder %s18, 3
      %p151 = scmp.ne.s32.totalorder %s146, %s148
      %p152 = scmp.eq.s32.totalorder %s18, 0
      %p153 = por %p151, %p152
      %p154 = scmp.ne.s32.totalorder %s146, %s148
      %p155 = scmp.eq.s32.totalorder %s23, 3
      %p156 = por %p154, %p155
      %p157 = scmp.ne.s32.totalorder %s148, %s149
      %p158 = scmp.eq.s32.totalorder %s23, 0
      %p159 = por %p157, %p158
      %p160 = scmp.ne.s32.totalorder %s148, %s149
      %p161 = scmp.eq.s32.totalorder %s24, 3
      %p162 = por %p160, %p161
      %p164 = scmp.ne.s32.totalorder %s149, %s163
      %p165 = scmp.eq.s32.totalorder %s24, 0
      %p166 = por %p164, %p165
      %s168 = sadd.s32 %s167, 1
      %p171 = scmp.eq.s32.totalorder %s18, 3
      %p172 = scmp.ne.s32.totalorder %s167, %s169
      %p173 = scmp.eq.s32.totalorder %s18, 0
      %p174 = por %p172, %p173
      %p175 = scmp.ne.s32.totalorder %s167, %s169
      %p176 = scmp.eq.s32.totalorder %s23, 3
      %p177 = por %p175, %p176
      %p178 = scmp.ne.s32.totalorder %s169, %s170
      %p179 = scmp.eq.s32.totalorder %s23, 0
      %p180 = por %p178, %p179
      %p181 = scmp.ne.s32.totalorder %s169, %s170
      %p182 = scmp.eq.s32.totalorder %s24, 3
      %p183 = por %p181, %p182
      %p185 = scmp.ne.s32.totalorder %s170, %s184
      %p186 = scmp.eq.s32.totalorder %s24, 0
      %p187 = por %p185, %p186
      %p188 = scmp.le.s32.totalorder 1, %s18
      %p189 = scmp.lt.s32.totalorder %s18, 5
      %p190 = pnand %p188, %p189
      %p191 = pneg %p190
      // Predicated region
      $region9: #{rnn_forward.1} parent=5 // pred_check
        _
      $region10: #{rnn_forward.1} parent=5 // pred_check_branch
        %193 = sbr.rel (%p190) target = $region12
      $region11: #{rnn_forward.1} parent=5 // pred_region
        %s194 = ssub.s32 %s18, 1
        // Predicated region
        $region13: #{rnn_forward.1} parent=11 // pred_check
          %p195 = pneg %p39
        $region14: #{rnn_forward.1} parent=11 // pred_check_branch
          %197 = sbr.rel (%p195) target = $region16
        $region15: #{rnn_forward.1} parent=11 // pred_region
          _
        $region16: #{rnn_forward.1} parent=11 // pred_fallthru
          _
        // Predicated region
        $region17: #{rnn_forward.1} parent=11 // pred_check
          %p198 = pneg %p138
        $region18: #{rnn_forward.1} parent=11 // pred_check_branch
          %200 = sbr.rel (%p198) target = $region20
        $region19: #{rnn_forward.1} parent=11 // pred_region
          _
        $region20: #{rnn_forward.1} parent=11 // pred_fallthru
          _
        // Predicated region
        $region21: #{rnn_forward.1} parent=11 // pred_check
          %p201 = pneg %p159
        $region22: #{rnn_forward.1} parent=11 // pred_check_branch
          %203 = sbr.rel (%p201) target = $region24
        $region23: #{rnn_forward.1} parent=11 // pred_region
          _
        $region24: #{rnn_forward.1} parent=11 // pred_fallthru
          _
      $region12: #{rnn_forward.1} parent=5 // pred_fallthru
        _
      %p204 = scmp.lt.s32.totalorder %s18, 4
      // Predicated region
      $region25: #{rnn_forward.1} parent=5 // pred_check
        %p205 = pneg %p204
      $region26: #{rnn_forward.1} parent=5 // pred_check_branch
        %207 = sbr.rel (%p205) target = $region28
      $region27: #{rnn_forward.1} parent=5 // pred_region
        // Predicated region
        $region29: #{rnn_forward.1} parent=27 // pred_check
          %p208 = pneg %p59
        $region30: #{rnn_forward.1} parent=27 // pred_check_branch
          %210 = sbr.rel (%p208) target = $region32
        $region31: #{rnn_forward.1} parent=27 // pred_region
          %s211 = sand.u32 %s49, 1
          %s212 = scalar_lea.sflag [#allocation5], %s211
          %s213 = sand.u32 %s49, 1
          %s214 = smul.addr %s213, 256
          %s215 = scalar_lea.vmem [#allocation4], %s214
          %s217 = ssub.s32 4096, 4096
          %218 = vsyncadd %s212, %s217
          %s219 = smul.addr %s18, 64
          %s220 = smul.addr %s219, 64
          %s221 = scalar_lea.hbm %s1, %s220
          %s222 = sshll.u32 %s215, 4
          %s223 = int_to_ptr.vmem [resolvable:$true] %s222
          %228 = dma.hbm_to_vmem [thread:$0]  %s221, 4096, %s223, %s212, 256, 256, 16
        $region32: #{rnn_forward.1} parent=27 // pred_fallthru
          _
        // Predicated region
        $region33: #{rnn_forward.1} parent=27 // pred_check
          %p229 = pneg %p85
        $region34: #{rnn_forward.1} parent=27 // pred_check_branch
          %231 = sbr.rel (%p229) target = $region36
        $region35: #{rnn_forward.1} parent=27 // pred_region
          %s232 = sand.u32 %s75, 1
          %s233 = scalar_lea.sflag [#allocation7], %s232
          %s234 = sand.u32 %s75, 1
          %s235 = smul.addr %s234, 256
          %s236 = scalar_lea.vmem [#allocation6], %s235
          %s238 = ssub.s32 4096, 4096
          %239 = vsyncadd %s233, %s238
          %s240 = smul.addr %s18, 64
          %s241 = smul.addr %s240, 64
          %s242 = scalar_lea.hbm %s2, %s241
          %s243 = sshll.u32 %s236, 4
          %s244 = int_to_ptr.vmem [resolvable:$true] %s243
          %249 = dma.hbm_to_vmem [thread:$0]  %s242, 4096, %s244, %s233, 256, 256, 16
        $region36: #{rnn_forward.1} parent=27 // pred_fallthru
          _
        // Predicated region
        $region37: #{rnn_forward.1} parent=27 // pred_check
          %p250 = pneg %p111
        $region38: #{rnn_forward.1} parent=27 // pred_check_branch
          %252 = sbr.rel (%p250) target = $region40
        $region39: #{rnn_forward.1} parent=27 // pred_region
          %p253 = scmp.lt.s32.totalorder %s18, 3
          %s254 = scalar_select %p253, %s18, 3
          %s255 = smul.addr %s254, 4
          %s256 = scalar_lea.vmem %s3, %s255
        $region40: #{rnn_forward.1} parent=27 // pred_fallthru
          _
      $region28: #{rnn_forward.1} parent=5 // pred_fallthru
        _
      %p257 = scmp.le.s32.totalorder 1, %s18
      %p258 = scmp.lt.s32.totalorder %s18, 5
      %p259 = pnand %p257, %p258
      %p260 = pneg %p259
      // Predicated region
      $region41: #{rnn_forward.1} parent=5 // pred_check
        _
      $region42: #{rnn_forward.1} parent=5 // pred_check_branch
        %262 = sbr.rel (%p259) target = $region44
      $region43: #{rnn_forward.1} parent=5 // pred_region
        %s263 = ssub.s32 %s18, 1
        %s264 = sand.u32 %s52, 1
        %s265 = scalar_lea.sflag [#allocation5], %s264
        %s266 = sand.u32 %s52, 1
        %s267 = smul.addr %s266, 256
        %s268 = scalar_lea.vmem [#allocation4], %s267
        // Predicated region
        $region45: #{rnn_forward.1} parent=43 // pred_check
          %p269 = pneg %p65
        $region46: #{rnn_forward.1} parent=43 // pred_check_branch
          %271 = sbr.rel (%p269) target = $region48
        $region47: #{rnn_forward.1} parent=43 // pred_region
          %272 = dma.done %s265, 4096
        $region48: #{rnn_forward.1} parent=43 // pred_fallthru
          _
        %s273 = sand.u32 %s78, 1
        %s274 = scalar_lea.sflag [#allocation7], %s273
        %s275 = sand.u32 %s78, 1
        %s276 = smul.addr %s275, 256
        %s277 = scalar_lea.vmem [#allocation6], %s276
        // Predicated region
        $region49: #{rnn_forward.1} parent=43 // pred_check
          %p278 = pneg %p91
        $region50: #{rnn_forward.1} parent=43 // pred_check_branch
          %280 = sbr.rel (%p278) target = $region52
        $region51: #{rnn_forward.1} parent=43 // pred_region
          %281 = dma.done %s274, 4096
        $region52: #{rnn_forward.1} parent=43 // pred_fallthru
          _
        %p282 = pneg %p39
        %p283 = pneg %p36
        %s284 = sand.u32 %s52, 1
        %s285 = scalar_lea.sflag [#allocation5], %s284
        %s286 = sand.u32 %s52, 1
        %s287 = smul.addr %s286, 256
        %s288 = scalar_lea.vmem [#allocation4], %s287
        %p289 = pneg %p65
        %p290 = pneg %p62
        %s291 = sand.u32 %s78, 1
        %s292 = scalar_lea.sflag [#allocation7], %s291
        %s293 = sand.u32 %s78, 1
        %s294 = smul.addr %s293, 256
        %s295 = scalar_lea.vmem [#allocation6], %s294
        %p296 = pneg %p91
        %p297 = pneg %p88
        %p298 = scmp.lt.s32.totalorder %s23, 3
        %s299 = scalar_select %p298, %s23, 3
        %s300 = smul.addr %s299, 4
        %s301 = scalar_lea.vmem %s3, %s300
        %p302 = pneg %p117
        %p303 = pneg %p114
        %p304 = pneg %p138
        %p305 = pneg %p135
        %p306 = pneg %p159
        %p307 = pneg %p156
        %p308 = pneg %p180
        %p309 = pneg %p177
        %p310 = scmp.lt.s32.totalorder %s23, 3
        %s311 = scalar_select %p310, %s23, 3
        %s312 = smul.addr %s311, 4
        %s313 = scalar_lea.vmem %s3, %s312
        %p315 = scmp.eq.s32.totalorder %s23, 0
        // Predicated region
        $region53: #{rnn_forward.1} parent=43 // pred_check
          %p316 = pneg %p315
        $region54: #{rnn_forward.1} parent=43 // pred_check_branch
          %318 = sbr.rel (%p316) target = $region56
        $region55: #{rnn_forward.1} parent=43 // pred_region
          %v319 = vld [vmem:[%s0] sm:$0xff]
          %v320 = vld [vmem:[%s0 + $0x8] sm:$0xff]
          %v321 = vld [vmem:[%s0 + $0x10] sm:$0xff]
          %v322 = vld [vmem:[%s0 + $0x18] sm:$0xff]
          %v323 = vld [vmem:[%s0 + $0x20] sm:$0xff]
          %v324 = vld [vmem:[%s0 + $0x28] sm:$0xff]
          %v325 = vld [vmem:[%s0 + $0x30] sm:$0xff]
          %v326 = vld [vmem:[%s0 + $0x38] sm:$0xff]
          %v327 = vpack.c.bf16 %v320, %v319
          %v328 = vpack.c.bf16 %v322, %v321
          %v329 = vpack.c.bf16 %v324, %v323
          %v330 = vpack.c.bf16 %v326, %v325
          %v331 = vld [vmem:[%s268] sm:$0xff]
          %v332 = vld [vmem:[%s268 + $0x8] sm:$0xff]
          %v333 = vld [vmem:[%s268 + $0x10] sm:$0xff]
          %v334 = vld [vmem:[%s268 + $0x18] sm:$0xff]
          %v335 = vld [vmem:[%s268 + $0x20] sm:$0xff]
          %v336 = vld [vmem:[%s268 + $0x28] sm:$0xff]
          %v337 = vld [vmem:[%s268 + $0x30] sm:$0xff]
          %v338 = vld [vmem:[%s268 + $0x38] sm:$0xff]
          %v339 = vld [vmem:[%s268 + $0x40] sm:$0xff]
          %v340 = vld [vmem:[%s268 + $0x48] sm:$0xff]
          %v341 = vld [vmem:[%s268 + $0x50] sm:$0xff]
          %v342 = vld [vmem:[%s268 + $0x58] sm:$0xff]
          %v343 = vld [vmem:[%s268 + $0x60] sm:$0xff]
          %v344 = vld [vmem:[%s268 + $0x68] sm:$0xff]
          %v345 = vld [vmem:[%s268 + $0x70] sm:$0xff]
          %v346 = vld [vmem:[%s268 + $0x78] sm:$0xff]
          %v347 = vld [vmem:[%s268 + $0x80] sm:$0xff]
          %v348 = vld [vmem:[%s268 + $0x88] sm:$0xff]
          %v349 = vld [vmem:[%s268 + $0x90] sm:$0xff]
          %v350 = vld [vmem:[%s268 + $0x98] sm:$0xff]
          %v351 = vld [vmem:[%s268 + $0xa0] sm:$0xff]
          %v352 = vld [vmem:[%s268 + $0xa8] sm:$0xff]
          %v353 = vld [vmem:[%s268 + $0xb0] sm:$0xff]
          %v354 = vld [vmem:[%s268 + $0xb8] sm:$0xff]
          %v355 = vld [vmem:[%s268 + $0xc0] sm:$0xff]
          %v356 = vld [vmem:[%s268 + $0xc8] sm:$0xff]
          %v357 = vld [vmem:[%s268 + $0xd0] sm:$0xff]
          %v358 = vld [vmem:[%s268 + $0xd8] sm:$0xff]
          %v359 = vld [vmem:[%s268 + $0xe0] sm:$0xff]
          %v360 = vld [vmem:[%s268 + $0xe8] sm:$0xff]
          %v361 = vld [vmem:[%s268 + $0xf0] sm:$0xff]
          %v362 = vld [vmem:[%s268 + $0xf8] sm:$0xff]
          %v363 = vld [vmem:[%s313] sm:$0xf]
          %v365 = vlaneseq
          %v366 = vshrl.u32 %v365, 7
          %v367 = vsub.s32 0, %v366
          %v368 = vrot.slane %v363, %v367
          %v369 = vlaneseq
          %v370 = vshrl.u32 %v369, 7
          %v371 = vsub.s32 1, %v370
          %v372 = vrot.slane %v363, %v371
          %v373 = vlaneseq
          %v374 = vshrl.u32 %v373, 7
          %v375 = vsub.s32 2, %v374
          %v376 = vrot.slane %v363, %v375
          %v377 = vlaneseq
          %v378 = vshrl.u32 %v377, 7
          %v379 = vsub.s32 3, %v378
          %v380 = vrot.slane %v363, %v379
          %v417 = vunpack.c.l.b16 %v331
          %v418 = vunpack.c.h.b16 %v331
          %v419 = vunpack.c.l.b16 %v332
          %v420 = vunpack.c.h.b16 %v332
          %v421 = vunpack.c.l.b16 %v333
          %v422 = vunpack.c.h.b16 %v333
          %v423 = vunpack.c.l.b16 %v334
          %v424 = vunpack.c.h.b16 %v334
          %v425 = vunpack.c.l.b16 %v335
          %v426 = vunpack.c.h.b16 %v335
          %v427 = vunpack.c.l.b16 %v336
          %v428 = vunpack.c.h.b16 %v336
          %v429 = vunpack.c.l.b16 %v337
          %v430 = vunpack.c.h.b16 %v337
          %v431 = vunpack.c.l.b16 %v338
          %v432 = vunpack.c.h.b16 %v338
          %v433 = vunpack.c.l.b16 %v339
          %v434 = vunpack.c.h.b16 %v339
          %v435 = vunpack.c.l.b16 %v340
          %v436 = vunpack.c.h.b16 %v340
          %v437 = vunpack.c.l.b16 %v341
          %v438 = vunpack.c.h.b16 %v341
          %v439 = vunpack.c.l.b16 %v342
          %v440 = vunpack.c.h.b16 %v342
          %v441 = vunpack.c.l.b16 %v343
          %v442 = vunpack.c.h.b16 %v343
          %v443 = vunpack.c.l.b16 %v344
          %v444 = vunpack.c.h.b16 %v344
          %v445 = vunpack.c.l.b16 %v345
          %v446 = vunpack.c.h.b16 %v345
          %v447 = vunpack.c.l.b16 %v346
          %v448 = vunpack.c.h.b16 %v346
          %v449 = vunpack.c.l.b16 %v347
          %v450 = vunpack.c.h.b16 %v347
          %v451 = vunpack.c.l.b16 %v348
          %v452 = vunpack.c.h.b16 %v348
          %v453 = vunpack.c.l.b16 %v349
          %v454 = vunpack.c.h.b16 %v349
          %v455 = vunpack.c.l.b16 %v350
          %v456 = vunpack.c.h.b16 %v350
          %v457 = vunpack.c.l.b16 %v351
          %v458 = vunpack.c.h.b16 %v351
          %v459 = vunpack.c.l.b16 %v352
          %v460 = vunpack.c.h.b16 %v352
          %v461 = vunpack.c.l.b16 %v353
          %v462 = vunpack.c.h.b16 %v353
          %v463 = vunpack.c.l.b16 %v354
          %v464 = vunpack.c.h.b16 %v354
          %v465 = vunpack.c.l.b16 %v355
          %v466 = vunpack.c.h.b16 %v355
          %v467 = vunpack.c.l.b16 %v356
          %v468 = vunpack.c.h.b16 %v356
          %v469 = vunpack.c.l.b16 %v357
          %v470 = vunpack.c.h.b16 %v357
          %v471 = vunpack.c.l.b16 %v358
          %v472 = vunpack.c.h.b16 %v358
          %v473 = vunpack.c.l.b16 %v359
          %v474 = vunpack.c.h.b16 %v359
          %v475 = vunpack.c.l.b16 %v360
          %v476 = vunpack.c.h.b16 %v360
          %v477 = vunpack.c.l.b16 %v361
          %v478 = vunpack.c.h.b16 %v361
          %v479 = vunpack.c.l.b16 %v362
          %v480 = vunpack.c.h.b16 %v362
          %v481 = vpack.c.b16 %v421, %v417
          %v482 = vpack.c.b16 %v422, %v418
          %v483 = vpack.c.b16 %v423, %v419
          %v484 = vpack.c.b16 %v424, %v420
          %v485 = vpack.c.b16 %v429, %v425
          %v486 = vpack.c.b16 %v430, %v426
          %v487 = vpack.c.b16 %v431, %v427
          %v488 = vpack.c.b16 %v432, %v428
          %v489 = vpack.c.b16 %v437, %v433
          %v490 = vpack.c.b16 %v438, %v434
          %v491 = vpack.c.b16 %v439, %v435
          %v492 = vpack.c.b16 %v440, %v436
          %v493 = vpack.c.b16 %v445, %v441
          %v494 = vpack.c.b16 %v446, %v442
          %v495 = vpack.c.b16 %v447, %v443
          %v496 = vpack.c.b16 %v448, %v444
          %v497 = vpack.c.b16 %v453, %v449
          %v498 = vpack.c.b16 %v454, %v450
          %v499 = vpack.c.b16 %v455, %v451
          %v500 = vpack.c.b16 %v456, %v452
          %v501 = vpack.c.b16 %v461, %v457
          %v502 = vpack.c.b16 %v462, %v458
          %v503 = vpack.c.b16 %v463, %v459
          %v504 = vpack.c.b16 %v464, %v460
          %v505 = vpack.c.b16 %v469, %v465
          %v506 = vpack.c.b16 %v470, %v466
          %v507 = vpack.c.b16 %v471, %v467
          %v508 = vpack.c.b16 %v472, %v468
          %v509 = vpack.c.b16 %v477, %v473
          %v510 = vpack.c.b16 %v478, %v474
          %v511 = vpack.c.b16 %v479, %v475
          %v512 = vpack.c.b16 %v480, %v476
          %545 = vmatprep.subr.bf16.mxu0 %v482
          %546 = vmatpush1.bf16.msra.mxu0 %v481
          %547 = vmatprep.subr.bf16.mxu0 %v486
          %548 = vmatpush1.bf16.msra.mxu0 %v485
          %549 = vmatprep.subr.bf16.mxu0 %v490
          %550 = vmatpush1.bf16.msra.mxu0 %v489
          %551 = vmatprep.subr.bf16.mxu0 %v494
          %552 = vmatpush1.bf16.msra.mxu0 %v493
          %553 = vmatprep.subr.bf16.mxu0 %v498
          %554 = vmatpush1.bf16.msra.mxu0 %v497
          %555 = vmatprep.subr.bf16.mxu0 %v502
          %556 = vmatpush1.bf16.msra.mxu0 %v501
          %557 = vmatprep.subr.bf16.mxu0 %v506
          %558 = vmatpush1.bf16.msra.mxu0 %v505
          %559 = vmatprep.subr.bf16.mxu0 %v510
          %560 = vmatpush1.bf16.msra.mxu0 %v509
          %561 = vmatprep.subr.bf16.mxu0 0
          %562 = vmatpush1.bf16.msra.mxu0 0
          %563 = vmatprep.subr.bf16.mxu0 0
          %564 = vmatpush1.bf16.msra.mxu0 0
          %565 = vmatprep.subr.bf16.mxu0 0
          %566 = vmatpush1.bf16.msra.mxu0 0
          %567 = vmatprep.subr.bf16.mxu0 0
          %568 = vmatpush1.bf16.msra.mxu0 0
          %569 = vmatprep.subr.bf16.mxu0 0
          %570 = vmatpush1.bf16.msra.mxu0 0
          %571 = vmatprep.subr.bf16.mxu0 0
          %572 = vmatpush1.bf16.msra.mxu0 0
          %573 = vmatprep.subr.bf16.mxu0 0
          %574 = vmatpush1.bf16.msra.mxu0 0
          %575 = vmatprep.subr.bf16.mxu0 0
          %576 = vmatpush1.bf16.msra.mxu0 0
          %577 = vmatprep.mubr.bf16.mxu0 0
          %578 = vmatmul.mubr.bf16.gmra.mrb[0].mxu0 %v327
          %v579 = vpop.f32.mrb[0].mxu0
          %v580 = vadd.f32 %v368, %v579
          %v581 = vpop.f32.mrb[0].mxu0
          %v582 = vadd.f32 %v372, %v581
          %v583 = vpop.f32.mrb[0].mxu0
          %v584 = vadd.f32 %v368, %v583
          %v585 = vpop.f32.mrb[0].mxu0
          %v586 = vadd.f32 %v372, %v585
          %587 = vmatprep.mubr.bf16.mxu0 0
          %588 = vmatmul.mubr.bf16.gmra.mrb[0].mxu0 %v328
          %v589 = vpop.f32.mrb[0].mxu0
          %v590 = vadd.f32 %v368, %v589
          %v591 = vpop.f32.mrb[0].mxu0
          %v592 = vadd.f32 %v372, %v591
          %v593 = vpop.f32.mrb[0].mxu0
          %v594 = vadd.f32 %v368, %v593
          %v595 = vpop.f32.mrb[0].mxu0
          %v596 = vadd.f32 %v372, %v595
          %597 = vmatprep.mubr.bf16.mxu0 0
          %598 = vmatmul.mubr.bf16.gmra.mrb[0].mxu0 %v329
          %v599 = vpop.f32.mrb[0].mxu0
          %v600 = vadd.f32 %v368, %v599
          %v601 = vpop.f32.mrb[0].mxu0
          %v602 = vadd.f32 %v372, %v601
          %v603 = vpop.f32.mrb[0].mxu0
          %v604 = vadd.f32 %v368, %v603
          %v605 = vpop.f32.mrb[0].mxu0
          %v606 = vadd.f32 %v372, %v605
          %607 = vmatprep.mubr.bf16.mxu0 0
          %608 = vmatmul.mubr.bf16.gmra.mrb[0].mxu0 %v330
          %v609 = vpop.f32.mrb[0].mxu0
          %v610 = vadd.f32 %v368, %v609
          %v611 = vpop.f32.mrb[0].mxu0
          %v612 = vadd.f32 %v372, %v611
          %v613 = vpop.f32.mrb[0].mxu0
          %v614 = vadd.f32 %v368, %v613
          %v615 = vpop.f32.mrb[0].mxu0
          %v616 = vadd.f32 %v372, %v615
          %617 = vdwg.mxu0
          %618 = vmatprep.subr.bf16.mxu0 %v484
          %619 = vmatpush1.bf16.msra.mxu0 %v483
          %620 = vmatprep.subr.bf16.mxu0 %v488
          %621 = vmatpush1.bf16.msra.mxu0 %v487
          %622 = vmatprep.subr.bf16.mxu0 %v492
          %623 = vmatpush1.bf16.msra.mxu0 %v491
          %624 = vmatprep.subr.bf16.mxu0 %v496
          %625 = vmatpush1.bf16.msra.mxu0 %v495
          %626 = vmatprep.subr.bf16.mxu0 %v500
          %627 = vmatpush1.bf16.msra.mxu0 %v499
          %628 = vmatprep.subr.bf16.mxu0 %v504
          %629 = vmatpush1.bf16.msra.mxu0 %v503
          %630 = vmatprep.subr.bf16.mxu0 %v508
          %631 = vmatpush1.bf16.msra.mxu0 %v507
          %632 = vmatprep.subr.bf16.mxu0 %v512
          %633 = vmatpush1.bf16.msra.mxu0 %v511
          %634 = vmatprep.subr.bf16.mxu0 0
          %635 = vmatpush1.bf16.msra.mxu0 0
          %636 = vmatprep.subr.bf16.mxu0 0
          %637 = vmatpush1.bf16.msra.mxu0 0
          %638 = vmatprep.subr.bf16.mxu0 0
          %639 = vmatpush1.bf16.msra.mxu0 0
          %640 = vmatprep.subr.bf16.mxu0 0
          %641 = vmatpush1.bf16.msra.mxu0 0
          %642 = vmatprep.subr.bf16.mxu0 0
          %643 = vmatpush1.bf16.msra.mxu0 0
          %644 = vmatprep.subr.bf16.mxu0 0
          %645 = vmatpush1.bf16.msra.mxu0 0
          %646 = vmatprep.subr.bf16.mxu0 0
          %647 = vmatpush1.bf16.msra.mxu0 0
          %648 = vmatprep.subr.bf16.mxu0 0
          %649 = vmatpush1.bf16.msra.mxu0 0
          %650 = vmatprep.mubr.bf16.mxu0 0
          %651 = vmatmul.mubr.bf16.gmra.mrb[0].mxu0 %v327
          %v652 = vpop.f32.mrb[0].mxu0
          %v653 = vadd.f32 %v376, %v652
          %v654 = vpop.f32.mrb[0].mxu0
          %v655 = vadd.f32 %v380, %v654
          %v656 = vpop.f32.mrb[0].mxu0
          %v657 = vadd.f32 %v376, %v656
          %v658 = vpop.f32.mrb[0].mxu0
          %v659 = vadd.f32 %v380, %v658
          %660 = vmatprep.mubr.bf16.mxu0 0
          %661 = vmatmul.mubr.bf16.gmra.mrb[0].mxu0 %v328
          %v662 = vpop.f32.mrb[0].mxu0
          %v663 = vadd.f32 %v376, %v662
          %v664 = vpop.f32.mrb[0].mxu0
          %v665 = vadd.f32 %v380, %v664
          %v666 = vpop.f32.mrb[0].mxu0
          %v667 = vadd.f32 %v376, %v666
          %v668 = vpop.f32.mrb[0].mxu0
          %v669 = vadd.f32 %v380, %v668
          %670 = vmatprep.mubr.bf16.mxu0 0
          %671 = vmatmul.mubr.bf16.gmra.mrb[0].mxu0 %v329
          %v672 = vpop.f32.mrb[0].mxu0
          %v673 = vadd.f32 %v376, %v672
          %v674 = vpop.f32.mrb[0].mxu0
          %v675 = vadd.f32 %v380, %v674
          %v676 = vpop.f32.mrb[0].mxu0
          %v677 = vadd.f32 %v376, %v676
          %v678 = vpop.f32.mrb[0].mxu0
          %v679 = vadd.f32 %v380, %v678
          %680 = vmatprep.mubr.bf16.mxu0 0
          %681 = vmatmul.mubr.bf16.gmra.mrb[0].mxu0 %v330
          %v682 = vpop.f32.mrb[0].mxu0
          %v683 = vadd.f32 %v376, %v682
          %v684 = vpop.f32.mrb[0].mxu0
          %v685 = vadd.f32 %v380, %v684
          %v686 = vpop.f32.mrb[0].mxu0
          %v687 = vadd.f32 %v376, %v686
          %v688 = vpop.f32.mrb[0].mxu0
          %v689 = vadd.f32 %v380, %v688
          %690 = vdwg.mxu0
          %691 = vst [vmem:[#allocation2] sm:$0xff] %v580
          %692 = vst [vmem:[#allocation2 + $0x8] sm:$0xff] %v582
          %693 = vst [vmem:[#allocation2 + $0x10] sm:$0xff] %v653
          %694 = vst [vmem:[#allocation2 + $0x18] sm:$0xff] %v655
          %695 = vst [vmem:[#allocation2 + $0x20] sm:$0xff] %v584
          %696 = vst [vmem:[#allocation2 + $0x28] sm:$0xff] %v586
          %697 = vst [vmem:[#allocation2 + $0x30] sm:$0xff] %v657
          %698 = vst [vmem:[#allocation2 + $0x38] sm:$0xff] %v659
          %699 = vst [vmem:[#allocation2 + $0x40] sm:$0xff] %v590
          %700 = vst [vmem:[#allocation2 + $0x48] sm:$0xff] %v592
          %701 = vst [vmem:[#allocation2 + $0x50] sm:$0xff] %v663
          %702 = vst [vmem:[#allocation2 + $0x58] sm:$0xff] %v665
          %703 = vst [vmem:[#allocation2 + $0x60] sm:$0xff] %v594
          %704 = vst [vmem:[#allocation2 + $0x68] sm:$0xff] %v596
          %705 = vst [vmem:[#allocation2 + $0x70] sm:$0xff] %v667
          %706 = vst [vmem:[#allocation2 + $0x78] sm:$0xff] %v669
          %707 = vst [vmem:[#allocation2 + $0x80] sm:$0xff] %v600
          %708 = vst [vmem:[#allocation2 + $0x88] sm:$0xff] %v602
          %709 = vst [vmem:[#allocation2 + $0x90] sm:$0xff] %v673
          %710 = vst [vmem:[#allocation2 + $0x98] sm:$0xff] %v675
          %711 = vst [vmem:[#allocation2 + $0xa0] sm:$0xff] %v604
          %712 = vst [vmem:[#allocation2 + $0xa8] sm:$0xff] %v606
          %713 = vst [vmem:[#allocation2 + $0xb0] sm:$0xff] %v677
          %714 = vst [vmem:[#allocation2 + $0xb8] sm:$0xff] %v679
          %715 = vst [vmem:[#allocation2 + $0xc0] sm:$0xff] %v610
          %716 = vst [vmem:[#allocation2 + $0xc8] sm:$0xff] %v612
          %717 = vst [vmem:[#allocation2 + $0xd0] sm:$0xff] %v683
          %718 = vst [vmem:[#allocation2 + $0xd8] sm:$0xff] %v685
          %719 = vst [vmem:[#allocation2 + $0xe0] sm:$0xff] %v614
          %720 = vst [vmem:[#allocation2 + $0xe8] sm:$0xff] %v616
          %721 = vst [vmem:[#allocation2 + $0xf0] sm:$0xff] %v687
          %722 = vst [vmem:[#allocation2 + $0xf8] sm:$0xff] %v689
        $region56: #{rnn_forward.1} parent=43 // pred_fallthru
          _
        %p723 = scmp.gt.s32.totalorder %s23, 0
        // Predicated region
        $region57: #{rnn_forward.1} parent=43 // pred_check
          %p724 = pneg %p723
        $region58: #{rnn_forward.1} parent=43 // pred_check_branch
          %726 = sbr.rel (%p724) target = $region60
        $region59: #{rnn_forward.1} parent=43 // pred_region
          %v727 = vld [vmem:[#allocation3] sm:$0xff]
          %v728 = vld [vmem:[#allocation3 + $0x8] sm:$0xff]
          %v729 = vld [vmem:[#allocation3 + $0x10] sm:$0xff]
          %v730 = vld [vmem:[#allocation3 + $0x18] sm:$0xff]
          %v731 = vld [vmem:[#allocation3 + $0x20] sm:$0xff]
          %v732 = vld [vmem:[#allocation3 + $0x28] sm:$0xff]
          %v733 = vld [vmem:[#allocation3 + $0x30] sm:$0xff]
          %v734 = vld [vmem:[#allocation3 + $0x38] sm:$0xff]
          %v735 = vpack.c.bf16 %v728, %v727
          %v736 = vpack.c.bf16 %v730, %v729
          %v737 = vpack.c.bf16 %v732, %v731
          %v738 = vpack.c.bf16 %v734, %v733
          %v739 = vld [vmem:[%s268] sm:$0xff]
          %v740 = vld [vmem:[%s268 + $0x8] sm:$0xff]
          %v741 = vld [vmem:[%s268 + $0x10] sm:$0xff]
          %v742 = vld [vmem:[%s268 + $0x18] sm:$0xff]
          %v743 = vld [vmem:[%s268 + $0x20] sm:$0xff]
          %v744 = vld [vmem:[%s268 + $0x28] sm:$0xff]
          %v745 = vld [vmem:[%s268 + $0x30] sm:$0xff]
          %v746 = vld [vmem:[%s268 + $0x38] sm:$0xff]
          %v747 = vld [vmem:[%s268 + $0x40] sm:$0xff]
          %v748 = vld [vmem:[%s268 + $0x48] sm:$0xff]
          %v749 = vld [vmem:[%s268 + $0x50] sm:$0xff]
          %v750 = vld [vmem:[%s268 + $0x58] sm:$0xff]
          %v751 = vld [vmem:[%s268 + $0x60] sm:$0xff]
          %v752 = vld [vmem:[%s268 + $0x68] sm:$0xff]
          %v753 = vld [vmem:[%s268 + $0x70] sm:$0xff]
          %v754 = vld [vmem:[%s268 + $0x78] sm:$0xff]
          %v755 = vld [vmem:[%s268 + $0x80] sm:$0xff]
          %v756 = vld [vmem:[%s268 + $0x88] sm:$0xff]
          %v757 = vld [vmem:[%s268 + $0x90] sm:$0xff]
          %v758 = vld [vmem:[%s268 + $0x98] sm:$0xff]
          %v759 = vld [vmem:[%s268 + $0xa0] sm:$0xff]
          %v760 = vld [vmem:[%s268 + $0xa8] sm:$0xff]
          %v761 = vld [vmem:[%s268 + $0xb0] sm:$0xff]
          %v762 = vld [vmem:[%s268 + $0xb8] sm:$0xff]
          %v763 = vld [vmem:[%s268 + $0xc0] sm:$0xff]
          %v764 = vld [vmem:[%s268 + $0xc8] sm:$0xff]
          %v765 = vld [vmem:[%s268 + $0xd0] sm:$0xff]
          %v766 = vld [vmem:[%s268 + $0xd8] sm:$0xff]
          %v767 = vld [vmem:[%s268 + $0xe0] sm:$0xff]
          %v768 = vld [vmem:[%s268 + $0xe8] sm:$0xff]
          %v769 = vld [vmem:[%s268 + $0xf0] sm:$0xff]
          %v770 = vld [vmem:[%s268 + $0xf8] sm:$0xff]
          %v771 = vld [vmem:[%s313] sm:$0xf]
          %v773 = vlaneseq
          %v774 = vshrl.u32 %v773, 7
          %v775 = vsub.s32 0, %v774
          %v776 = vrot.slane %v771, %v775
          %v777 = vlaneseq
          %v778 = vshrl.u32 %v777, 7
          %v779 = vsub.s32 1, %v778
          %v780 = vrot.slane %v771, %v779
          %v781 = vlaneseq
          %v782 = vshrl.u32 %v781, 7
          %v783 = vsub.s32 2, %v782
          %v784 = vrot.slane %v771, %v783
          %v785 = vlaneseq
          %v786 = vshrl.u32 %v785, 7
          %v787 = vsub.s32 3, %v786
          %v788 = vrot.slane %v771, %v787
          %v825 = vunpack.c.l.b16 %v739
          %v826 = vunpack.c.h.b16 %v739
          %v827 = vunpack.c.l.b16 %v740
          %v828 = vunpack.c.h.b16 %v740
          %v829 = vunpack.c.l.b16 %v741
          %v830 = vunpack.c.h.b16 %v741
          %v831 = vunpack.c.l.b16 %v742
          %v832 = vunpack.c.h.b16 %v742
          %v833 = vunpack.c.l.b16 %v743
          %v834 = vunpack.c.h.b16 %v743
          %v835 = vunpack.c.l.b16 %v744
          %v836 = vunpack.c.h.b16 %v744
          %v837 = vunpack.c.l.b16 %v745
          %v838 = vunpack.c.h.b16 %v745
          %v839 = vunpack.c.l.b16 %v746
          %v840 = vunpack.c.h.b16 %v746
          %v841 = vunpack.c.l.b16 %v747
          %v842 = vunpack.c.h.b16 %v747
          %v843 = vunpack.c.l.b16 %v748
          %v844 = vunpack.c.h.b16 %v748
          %v845 = vunpack.c.l.b16 %v749
          %v846 = vunpack.c.h.b16 %v749
          %v847 = vunpack.c.l.b16 %v750
          %v848 = vunpack.c.h.b16 %v750
          %v849 = vunpack.c.l.b16 %v751
          %v850 = vunpack.c.h.b16 %v751
          %v851 = vunpack.c.l.b16 %v752
          %v852 = vunpack.c.h.b16 %v752
          %v853 = vunpack.c.l.b16 %v753
          %v854 = vunpack.c.h.b16 %v753
          %v855 = vunpack.c.l.b16 %v754
          %v856 = vunpack.c.h.b16 %v754
          %v857 = vunpack.c.l.b16 %v755
          %v858 = vunpack.c.h.b16 %v755
          %v859 = vunpack.c.l.b16 %v756
          %v860 = vunpack.c.h.b16 %v756
          %v861 = vunpack.c.l.b16 %v757
          %v862 = vunpack.c.h.b16 %v757
          %v863 = vunpack.c.l.b16 %v758
          %v864 = vunpack.c.h.b16 %v758
          %v865 = vunpack.c.l.b16 %v759
          %v866 = vunpack.c.h.b16 %v759
          %v867 = vunpack.c.l.b16 %v760
          %v868 = vunpack.c.h.b16 %v760
          %v869 = vunpack.c.l.b16 %v761
          %v870 = vunpack.c.h.b16 %v761
          %v871 = vunpack.c.l.b16 %v762
          %v872 = vunpack.c.h.b16 %v762
          %v873 = vunpack.c.l.b16 %v763
          %v874 = vunpack.c.h.b16 %v763
          %v875 = vunpack.c.l.b16 %v764
          %v876 = vunpack.c.h.b16 %v764
          %v877 = vunpack.c.l.b16 %v765
          %v878 = vunpack.c.h.b16 %v765
          %v879 = vunpack.c.l.b16 %v766
          %v880 = vunpack.c.h.b16 %v766
          %v881 = vunpack.c.l.b16 %v767
          %v882 = vunpack.c.h.b16 %v767
          %v883 = vunpack.c.l.b16 %v768
          %v884 = vunpack.c.h.b16 %v768
          %v885 = vunpack.c.l.b16 %v769
          %v886 = vunpack.c.h.b16 %v769
          %v887 = vunpack.c.l.b16 %v770
          %v888 = vunpack.c.h.b16 %v770
          %v889 = vpack.c.b16 %v829, %v825
          %v890 = vpack.c.b16 %v830, %v826
          %v891 = vpack.c.b16 %v831, %v827
          %v892 = vpack.c.b16 %v832, %v828
          %v893 = vpack.c.b16 %v837, %v833
          %v894 = vpack.c.b16 %v838, %v834
          %v895 = vpack.c.b16 %v839, %v835
          %v896 = vpack.c.b16 %v840, %v836
          %v897 = vpack.c.b16 %v845, %v841
          %v898 = vpack.c.b16 %v846, %v842
          %v899 = vpack.c.b16 %v847, %v843
          %v900 = vpack.c.b16 %v848, %v844
          %v901 = vpack.c.b16 %v853, %v849
          %v902 = vpack.c.b16 %v854, %v850
          %v903 = vpack.c.b16 %v855, %v851
          %v904 = vpack.c.b16 %v856, %v852
          %v905 = vpack.c.b16 %v861, %v857
          %v906 = vpack.c.b16 %v862, %v858
          %v907 = vpack.c.b16 %v863, %v859
          %v908 = vpack.c.b16 %v864, %v860
          %v909 = vpack.c.b16 %v869, %v865
          %v910 = vpack.c.b16 %v870, %v866
          %v911 = vpack.c.b16 %v871, %v867
          %v912 = vpack.c.b16 %v872, %v868
          %v913 = vpack.c.b16 %v877, %v873
          %v914 = vpack.c.b16 %v878, %v874
          %v915 = vpack.c.b16 %v879, %v875
          %v916 = vpack.c.b16 %v880, %v876
          %v917 = vpack.c.b16 %v885, %v881
          %v918 = vpack.c.b16 %v886, %v882
          %v919 = vpack.c.b16 %v887, %v883
          %v920 = vpack.c.b16 %v888, %v884
          %953 = vmatprep.subr.bf16.mxu0 %v890
          %954 = vmatpush1.bf16.msra.mxu0 %v889
          %955 = vmatprep.subr.bf16.mxu0 %v894
          %956 = vmatpush1.bf16.msra.mxu0 %v893
          %957 = vmatprep.subr.bf16.mxu0 %v898
          %958 = vmatpush1.bf16.msra.mxu0 %v897
          %959 = vmatprep.subr.bf16.mxu0 %v902
          %960 = vmatpush1.bf16.msra.mxu0 %v901
          %961 = vmatprep.subr.bf16.mxu0 %v906
          %962 = vmatpush1.bf16.msra.mxu0 %v905
          %963 = vmatprep.subr.bf16.mxu0 %v910
          %964 = vmatpush1.bf16.msra.mxu0 %v909
          %965 = vmatprep.subr.bf16.mxu0 %v914
          %966 = vmatpush1.bf16.msra.mxu0 %v913
          %967 = vmatprep.subr.bf16.mxu0 %v918
          %968 = vmatpush1.bf16.msra.mxu0 %v917
          %969 = vmatprep.subr.bf16.mxu0 0
          %970 = vmatpush1.bf16.msra.mxu0 0
          %971 = vmatprep.subr.bf16.mxu0 0
          %972 = vmatpush1.bf16.msra.mxu0 0
          %973 = vmatprep.subr.bf16.mxu0 0
          %974 = vmatpush1.bf16.msra.mxu0 0
          %975 = vmatprep.subr.bf16.mxu0 0
          %976 = vmatpush1.bf16.msra.mxu0 0
          %977 = vmatprep.subr.bf16.mxu0 0
          %978 = vmatpush1.bf16.msra.mxu0 0
          %979 = vmatprep.subr.bf16.mxu0 0
          %980 = vmatpush1.bf16.msra.mxu0 0
          %981 = vmatprep.subr.bf16.mxu0 0
          %982 = vmatpush1.bf16.msra.mxu0 0
          %983 = vmatprep.subr.bf16.mxu0 0
          %984 = vmatpush1.bf16.msra.mxu0 0
          %985 = vmatprep.mubr.bf16.mxu0 0
          %986 = vmatmul.mubr.bf16.gmra.mrb[0].mxu0 %v735
          %v987 = vpop.f32.mrb[0].mxu0
          %v988 = vadd.f32 %v776, %v987
          %v989 = vpop.f32.mrb[0].mxu0
          %v990 = vadd.f32 %v780, %v989
          %v991 = vpop.f32.mrb[0].mxu0
          %v992 = vadd.f32 %v776, %v991
          %v993 = vpop.f32.mrb[0].mxu0
          %v994 = vadd.f32 %v780, %v993
          %995 = vmatprep.mubr.bf16.mxu0 0
          %996 = vmatmul.mubr.bf16.gmra.mrb[0].mxu0 %v736
          %v997 = vpop.f32.mrb[0].mxu0
          %v998 = vadd.f32 %v776, %v997
          %v999 = vpop.f32.mrb[0].mxu0
          %v1000 = vadd.f32 %v780, %v999
          %v1001 = vpop.f32.mrb[0].mxu0
          %v1002 = vadd.f32 %v776, %v1001
          %v1003 = vpop.f32.mrb[0].mxu0
          %v1004 = vadd.f32 %v780, %v1003
          %1005 = vmatprep.mubr.bf16.mxu0 0
          %1006 = vmatmul.mubr.bf16.gmra.mrb[0].mxu0 %v737
          %v1007 = vpop.f32.mrb[0].mxu0
          %v1008 = vadd.f32 %v776, %v1007
          %v1009 = vpop.f32.mrb[0].mxu0
          %v1010 = vadd.f32 %v780, %v1009
          %v1011 = vpop.f32.mrb[0].mxu0
          %v1012 = vadd.f32 %v776, %v1011
          %v1013 = vpop.f32.mrb[0].mxu0
          %v1014 = vadd.f32 %v780, %v1013
          %1015 = vmatprep.mubr.bf16.mxu0 0
          %1016 = vmatmul.mubr.bf16.gmra.mrb[0].mxu0 %v738
          %v1017 = vpop.f32.mrb[0].mxu0
          %v1018 = vadd.f32 %v776, %v1017
          %v1019 = vpop.f32.mrb[0].mxu0
          %v1020 = vadd.f32 %v780, %v1019
          %v1021 = vpop.f32.mrb[0].mxu0
          %v1022 = vadd.f32 %v776, %v1021
          %v1023 = vpop.f32.mrb[0].mxu0
          %v1024 = vadd.f32 %v780, %v1023
          %1025 = vdwg.mxu0
          %1026 = vmatprep.subr.bf16.mxu0 %v892
          %1027 = vmatpush1.bf16.msra.mxu0 %v891
          %1028 = vmatprep.subr.bf16.mxu0 %v896
          %1029 = vmatpush1.bf16.msra.mxu0 %v895
          %1030 = vmatprep.subr.bf16.mxu0 %v900
          %1031 = vmatpush1.bf16.msra.mxu0 %v899
          %1032 = vmatprep.subr.bf16.mxu0 %v904
          %1033 = vmatpush1.bf16.msra.mxu0 %v903
          %1034 = vmatprep.subr.bf16.mxu0 %v908
          %1035 = vmatpush1.bf16.msra.mxu0 %v907
          %1036 = vmatprep.subr.bf16.mxu0 %v912
          %1037 = vmatpush1.bf16.msra.mxu0 %v911
          %1038 = vmatprep.subr.bf16.mxu0 %v916
          %1039 = vmatpush1.bf16.msra.mxu0 %v915
          %1040 = vmatprep.subr.bf16.mxu0 %v920
          %1041 = vmatpush1.bf16.msra.mxu0 %v919
          %1042 = vmatprep.subr.bf16.mxu0 0
          %1043 = vmatpush1.bf16.msra.mxu0 0
          %1044 = vmatprep.subr.bf16.mxu0 0
          %1045 = vmatpush1.bf16.msra.mxu0 0
          %1046 = vmatprep.subr.bf16.mxu0 0
          %1047 = vmatpush1.bf16.msra.mxu0 0
          %1048 = vmatprep.subr.bf16.mxu0 0
          %1049 = vmatpush1.bf16.msra.mxu0 0
          %1050 = vmatprep.subr.bf16.mxu0 0
          %1051 = vmatpush1.bf16.msra.mxu0 0
          %1052 = vmatprep.subr.bf16.mxu0 0
          %1053 = vmatpush1.bf16.msra.mxu0 0
          %1054 = vmatprep.subr.bf16.mxu0 0
          %1055 = vmatpush1.bf16.msra.mxu0 0
          %1056 = vmatprep.subr.bf16.mxu0 0
          %1057 = vmatpush1.bf16.msra.mxu0 0
          %1058 = vmatprep.mubr.bf16.mxu0 0
          %1059 = vmatmul.mubr.bf16.gmra.mrb[0].mxu0 %v735
          %v1060 = vpop.f32.mrb[0].mxu0
          %v1061 = vadd.f32 %v784, %v1060
          %v1062 = vpop.f32.mrb[0].mxu0
          %v1063 = vadd.f32 %v788, %v1062
          %v1064 = vpop.f32.mrb[0].mxu0
          %v1065 = vadd.f32 %v784, %v1064
          %v1066 = vpop.f32.mrb[0].mxu0
          %v1067 = vadd.f32 %v788, %v1066
          %1068 = vmatprep.mubr.bf16.mxu0 0
          %1069 = vmatmul.mubr.bf16.gmra.mrb[0].mxu0 %v736
          %v1070 = vpop.f32.mrb[0].mxu0
          %v1071 = vadd.f32 %v784, %v1070
          %v1072 = vpop.f32.mrb[0].mxu0
          %v1073 = vadd.f32 %v788, %v1072
          %v1074 = vpop.f32.mrb[0].mxu0
          %v1075 = vadd.f32 %v784, %v1074
          %v1076 = vpop.f32.mrb[0].mxu0
          %v1077 = vadd.f32 %v788, %v1076
          %1078 = vmatprep.mubr.bf16.mxu0 0
          %1079 = vmatmul.mubr.bf16.gmra.mrb[0].mxu0 %v737
          %v1080 = vpop.f32.mrb[0].mxu0
          %v1081 = vadd.f32 %v784, %v1080
          %v1082 = vpop.f32.mrb[0].mxu0
          %v1083 = vadd.f32 %v788, %v1082
          %v1084 = vpop.f32.mrb[0].mxu0
          %v1085 = vadd.f32 %v784, %v1084
          %v1086 = vpop.f32.mrb[0].mxu0
          %v1087 = vadd.f32 %v788, %v1086
          %1088 = vmatprep.mubr.bf16.mxu0 0
          %1089 = vmatmul.mubr.bf16.gmra.mrb[0].mxu0 %v738
          %v1090 = vpop.f32.mrb[0].mxu0
          %v1091 = vadd.f32 %v784, %v1090
          %v1092 = vpop.f32.mrb[0].mxu0
          %v1093 = vadd.f32 %v788, %v1092
          %v1094 = vpop.f32.mrb[0].mxu0
          %v1095 = vadd.f32 %v784, %v1094
          %v1096 = vpop.f32.mrb[0].mxu0
          %v1097 = vadd.f32 %v788, %v1096
          %1098 = vdwg.mxu0
          %1099 = vst [vmem:[#allocation2] sm:$0xff] %v988
          %1100 = vst [vmem:[#allocation2 + $0x8] sm:$0xff] %v990
          %1101 = vst [vmem:[#allocation2 + $0x10] sm:$0xff] %v1061
          %1102 = vst [vmem:[#allocation2 + $0x18] sm:$0xff] %v1063
          %1103 = vst [vmem:[#allocation2 + $0x20] sm:$0xff] %v992
          %1104 = vst [vmem:[#allocation2 + $0x28] sm:$0xff] %v994
          %1105 = vst [vmem:[#allocation2 + $0x30] sm:$0xff] %v1065
          %1106 = vst [vmem:[#allocation2 + $0x38] sm:$0xff] %v1067
          %1107 = vst [vmem:[#allocation2 + $0x40] sm:$0xff] %v998
          %1108 = vst [vmem:[#allocation2 + $0x48] sm:$0xff] %v1000
          %1109 = vst [vmem:[#allocation2 + $0x50] sm:$0xff] %v1071
          %1110 = vst [vmem:[#allocation2 + $0x58] sm:$0xff] %v1073
          %1111 = vst [vmem:[#allocation2 + $0x60] sm:$0xff] %v1002
          %1112 = vst [vmem:[#allocation2 + $0x68] sm:$0xff] %v1004
          %1113 = vst [vmem:[#allocation2 + $0x70] sm:$0xff] %v1075
          %1114 = vst [vmem:[#allocation2 + $0x78] sm:$0xff] %v1077
          %1115 = vst [vmem:[#allocation2 + $0x80] sm:$0xff] %v1008
          %1116 = vst [vmem:[#allocation2 + $0x88] sm:$0xff] %v1010
          %1117 = vst [vmem:[#allocation2 + $0x90] sm:$0xff] %v1081
          %1118 = vst [vmem:[#allocation2 + $0x98] sm:$0xff] %v1083
          %1119 = vst [vmem:[#allocation2 + $0xa0] sm:$0xff] %v1012
          %1120 = vst [vmem:[#allocation2 + $0xa8] sm:$0xff] %v1014
          %1121 = vst [vmem:[#allocation2 + $0xb0] sm:$0xff] %v1085
          %1122 = vst [vmem:[#allocation2 + $0xb8] sm:$0xff] %v1087
          %1123 = vst [vmem:[#allocation2 + $0xc0] sm:$0xff] %v1018
          %1124 = vst [vmem:[#allocation2 + $0xc8] sm:$0xff] %v1020
          %1125 = vst [vmem:[#allocation2 + $0xd0] sm:$0xff] %v1091
          %1126 = vst [vmem:[#allocation2 + $0xd8] sm:$0xff] %v1093
          %1127 = vst [vmem:[#allocation2 + $0xe0] sm:$0xff] %v1022
          %1128 = vst [vmem:[#allocation2 + $0xe8] sm:$0xff] %v1024
          %1129 = vst [vmem:[#allocation2 + $0xf0] sm:$0xff] %v1095
          %1130 = vst [vmem:[#allocation2 + $0xf8] sm:$0xff] %v1097
        $region60: #{rnn_forward.1} parent=43 // pred_fallthru
          _
        %v1131 = vld [vmem:[#allocation2] sm:$0xff]
        %v1132 = vld [vmem:[#allocation2 + $0x8] sm:$0xff]
        %v1133 = vld [vmem:[#allocation2 + $0x10] sm:$0xff]
        %v1134 = vld [vmem:[#allocation2 + $0x18] sm:$0xff]
        %v1135 = vld [vmem:[%s277] sm:$0xff]
        %v1136 = vld [vmem:[%s277 + $0x8] sm:$0xff]
        %v1137 = vld [vmem:[%s277 + $0x10] sm:$0xff]
        %v1138 = vld [vmem:[%s277 + $0x18] sm:$0xff]
        %v1139 = vld [vmem:[%s277 + $0x20] sm:$0xff]
        %v1140 = vld [vmem:[%s277 + $0x28] sm:$0xff]
        %v1141 = vld [vmem:[%s277 + $0x30] sm:$0xff]
        %v1142 = vld [vmem:[%s277 + $0x38] sm:$0xff]
        %v1143 = vld [vmem:[%s277 + $0x40] sm:$0xff]
        %v1144 = vld [vmem:[%s277 + $0x48] sm:$0xff]
        %v1145 = vld [vmem:[%s277 + $0x50] sm:$0xff]
        %v1146 = vld [vmem:[%s277 + $0x58] sm:$0xff]
        %v1147 = vld [vmem:[%s277 + $0x60] sm:$0xff]
        %v1148 = vld [vmem:[%s277 + $0x68] sm:$0xff]
        %v1149 = vld [vmem:[%s277 + $0x70] sm:$0xff]
        %v1150 = vld [vmem:[%s277 + $0x78] sm:$0xff]
        %v1151 = vld [vmem:[%s277 + $0x80] sm:$0xff]
        %v1152 = vld [vmem:[%s277 + $0x88] sm:$0xff]
        %v1153 = vld [vmem:[%s277 + $0x90] sm:$0xff]
        %v1154 = vld [vmem:[%s277 + $0x98] sm:$0xff]
        %v1155 = vld [vmem:[%s277 + $0xa0] sm:$0xff]
        %v1156 = vld [vmem:[%s277 + $0xa8] sm:$0xff]
        %v1157 = vld [vmem:[%s277 + $0xb0] sm:$0xff]
        %v1158 = vld [vmem:[%s277 + $0xb8] sm:$0xff]
        %v1159 = vld [vmem:[%s277 + $0xc0] sm:$0xff]
        %v1160 = vld [vmem:[%s277 + $0xc8] sm:$0xff]
        %v1161 = vld [vmem:[%s277 + $0xd0] sm:$0xff]
        %v1162 = vld [vmem:[%s277 + $0xd8] sm:$0xff]
        %v1163 = vld [vmem:[%s277 + $0xe0] sm:$0xff]
        %v1164 = vld [vmem:[%s277 + $0xe8] sm:$0xff]
        %v1165 = vld [vmem:[%s277 + $0xf0] sm:$0xff]
        %v1166 = vld [vmem:[%s277 + $0xf8] sm:$0xff]
        %v1199 = vunpack.c.l.b16 %v1135
        %v1200 = vunpack.c.h.b16 %v1135
        %v1201 = vunpack.c.l.b16 %v1136
        %v1202 = vunpack.c.h.b16 %v1136
        %v1203 = vunpack.c.l.b16 %v1137
        %v1204 = vunpack.c.h.b16 %v1137
        %v1205 = vunpack.c.l.b16 %v1138
        %v1206 = vunpack.c.h.b16 %v1138
        %v1207 = vunpack.c.l.b16 %v1139
        %v1208 = vunpack.c.h.b16 %v1139
        %v1209 = vunpack.c.l.b16 %v1140
        %v1210 = vunpack.c.h.b16 %v1140
        %v1211 = vunpack.c.l.b16 %v1141
        %v1212 = vunpack.c.h.b16 %v1141
        %v1213 = vunpack.c.l.b16 %v1142
        %v1214 = vunpack.c.h.b16 %v1142
        %v1215 = vunpack.c.l.b16 %v1143
        %v1216 = vunpack.c.h.b16 %v1143
        %v1217 = vunpack.c.l.b16 %v1144
        %v1218 = vunpack.c.h.b16 %v1144
        %v1219 = vunpack.c.l.b16 %v1145
        %v1220 = vunpack.c.h.b16 %v1145
        %v1221 = vunpack.c.l.b16 %v1146
        %v1222 = vunpack.c.h.b16 %v1146
        %v1223 = vunpack.c.l.b16 %v1147
        %v1224 = vunpack.c.h.b16 %v1147
        %v1225 = vunpack.c.l.b16 %v1148
        %v1226 = vunpack.c.h.b16 %v1148
        %v1227 = vunpack.c.l.b16 %v1149
        %v1228 = vunpack.c.h.b16 %v1149
        %v1229 = vunpack.c.l.b16 %v1150
        %v1230 = vunpack.c.h.b16 %v1150
        %v1231 = vunpack.c.l.b16 %v1151
        %v1232 = vunpack.c.h.b16 %v1151
        %v1233 = vunpack.c.l.b16 %v1152
        %v1234 = vunpack.c.h.b16 %v1152
        %v1235 = vunpack.c.l.b16 %v1153
        %v1236 = vunpack.c.h.b16 %v1153
        %v1237 = vunpack.c.l.b16 %v1154
        %v1238 = vunpack.c.h.b16 %v1154
        %v1239 = vunpack.c.l.b16 %v1155
        %v1240 = vunpack.c.h.b16 %v1155
        %v1241 = vunpack.c.l.b16 %v1156
        %v1242 = vunpack.c.h.b16 %v1156
        %v1243 = vunpack.c.l.b16 %v1157
        %v1244 = vunpack.c.h.b16 %v1157
        %v1245 = vunpack.c.l.b16 %v1158
        %v1246 = vunpack.c.h.b16 %v1158
        %v1247 = vunpack.c.l.b16 %v1159
        %v1248 = vunpack.c.h.b16 %v1159
        %v1249 = vunpack.c.l.b16 %v1160
        %v1250 = vunpack.c.h.b16 %v1160
        %v1251 = vunpack.c.l.b16 %v1161
        %v1252 = vunpack.c.h.b16 %v1161
        %v1253 = vunpack.c.l.b16 %v1162
        %v1254 = vunpack.c.h.b16 %v1162
        %v1255 = vunpack.c.l.b16 %v1163
        %v1256 = vunpack.c.h.b16 %v1163
        %v1257 = vunpack.c.l.b16 %v1164
        %v1258 = vunpack.c.h.b16 %v1164
        %v1259 = vunpack.c.l.b16 %v1165
        %v1260 = vunpack.c.h.b16 %v1165
        %v1261 = vunpack.c.l.b16 %v1166
        %v1262 = vunpack.c.h.b16 %v1166
        %v1263 = vpack.c.b16 %v1203, %v1199
        %v1264 = vpack.c.b16 %v1204, %v1200
        %v1265 = vpack.c.b16 %v1205, %v1201
        %v1266 = vpack.c.b16 %v1206, %v1202
        %v1267 = vpack.c.b16 %v1211, %v1207
        %v1268 = vpack.c.b16 %v1212, %v1208
        %v1269 = vpack.c.b16 %v1213, %v1209
        %v1270 = vpack.c.b16 %v1214, %v1210
        %v1271 = vpack.c.b16 %v1219, %v1215
        %v1272 = vpack.c.b16 %v1220, %v1216
        %v1273 = vpack.c.b16 %v1221, %v1217
        %v1274 = vpack.c.b16 %v1222, %v1218
        %v1275 = vpack.c.b16 %v1227, %v1223
        %v1276 = vpack.c.b16 %v1228, %v1224
        %v1277 = vpack.c.b16 %v1229, %v1225
        %v1278 = vpack.c.b16 %v1230, %v1226
        %v1279 = vpack.c.b16 %v1235, %v1231
        %v1280 = vpack.c.b16 %v1236, %v1232
        %v1281 = vpack.c.b16 %v1237, %v1233
        %v1282 = vpack.c.b16 %v1238, %v1234
        %v1283 = vpack.c.b16 %v1243, %v1239
        %v1284 = vpack.c.b16 %v1244, %v1240
        %v1285 = vpack.c.b16 %v1245, %v1241
        %v1286 = vpack.c.b16 %v1246, %v1242
        %v1287 = vpack.c.b16 %v1251, %v1247
        %v1288 = vpack.c.b16 %v1252, %v1248
        %v1289 = vpack.c.b16 %v1253, %v1249
        %v1290 = vpack.c.b16 %v1254, %v1250
        %v1291 = vpack.c.b16 %v1259, %v1255
        %v1292 = vpack.c.b16 %v1260, %v1256
        %v1293 = vpack.c.b16 %v1261, %v1257
        %v1294 = vpack.c.b16 %v1262, %v1258
        %1327 = vmatprep.subr.bf16.mxu0 %v1264
        %1328 = vmatpush1.bf16.msra.mxu0 %v1263
        %1329 = vmatprep.subr.bf16.mxu0 %v1268
        %1330 = vmatpush1.bf16.msra.mxu0 %v1267
        %1331 = vmatprep.subr.bf16.mxu0 %v1272
        %1332 = vmatpush1.bf16.msra.mxu0 %v1271
        %1333 = vmatprep.subr.bf16.mxu0 %v1276
        %1334 = vmatpush1.bf16.msra.mxu0 %v1275
        %1335 = vmatprep.subr.bf16.mxu0 %v1280
        %1336 = vmatpush1.bf16.msra.mxu0 %v1279
        %1337 = vmatprep.subr.bf16.mxu0 %v1284
        %1338 = vmatpush1.bf16.msra.mxu0 %v1283
        %1339 = vmatprep.subr.bf16.mxu0 %v1288
        %1340 = vmatpush1.bf16.msra.mxu0 %v1287
        %1341 = vmatprep.subr.bf16.mxu0 %v1292
        %1342 = vmatpush1.bf16.msra.mxu0 %v1291
        %1343 = vmatprep.subr.bf16.mxu0 0
        %1344 = vmatpush1.bf16.msra.mxu0 0
        %1345 = vmatprep.subr.bf16.mxu0 0
        %1346 = vmatpush1.bf16.msra.mxu0 0
        %1347 = vmatprep.subr.bf16.mxu0 0
        %1348 = vmatpush1.bf16.msra.mxu0 0
        %1349 = vmatprep.subr.bf16.mxu0 0
        %1350 = vmatpush1.bf16.msra.mxu0 0
        %1351 = vmatprep.subr.bf16.mxu0 0
        %1352 = vmatpush1.bf16.msra.mxu0 0
        %1353 = vmatprep.subr.bf16.mxu0 0
        %1354 = vmatpush1.bf16.msra.mxu0 0
        %1355 = vmatprep.subr.bf16.mxu0 0
        %1356 = vmatpush1.bf16.msra.mxu0 0
        %1357 = vmatprep.subr.bf16.mxu0 0
        %1358 = vmatpush1.bf16.msra.mxu0 0
        %1359 = vmatprep.mubr.bf16.mxu0 0
        %1360 = vmatmul.mubr.bf16.gmra.mrb[0].mxu0 0
        %v1361 = vpop.f32.mrb[0].mxu0
        %v1362 = vadd.f32 0.0, %v1361
        %v1363 = vpop.f32.mrb[0].mxu0
        %v1364 = vadd.f32 0.0, %v1363
        %v1365 = vpop.f32.mrb[0].mxu0
        %v1366 = vpop.f32.mrb[0].mxu0
        %1367 = vdwg.mxu0
        %1368 = vmatprep.subr.bf16.mxu0 %v1266
        %1369 = vmatpush1.bf16.msra.mxu0 %v1265
        %1370 = vmatprep.subr.bf16.mxu0 %v1270
        %1371 = vmatpush1.bf16.msra.mxu0 %v1269
        %1372 = vmatprep.subr.bf16.mxu0 %v1274
        %1373 = vmatpush1.bf16.msra.mxu0 %v1273
        %1374 = vmatprep.subr.bf16.mxu0 %v1278
        %1375 = vmatpush1.bf16.msra.mxu0 %v1277
        %1376 = vmatprep.subr.bf16.mxu0 %v1282
        %1377 = vmatpush1.bf16.msra.mxu0 %v1281
        %1378 = vmatprep.subr.bf16.mxu0 %v1286
        %1379 = vmatpush1.bf16.msra.mxu0 %v1285
        %1380 = vmatprep.subr.bf16.mxu0 %v1290
        %1381 = vmatpush1.bf16.msra.mxu0 %v1289
        %1382 = vmatprep.subr.bf16.mxu0 %v1294
        %1383 = vmatpush1.bf16.msra.mxu0 %v1293
        %1384 = vmatprep.subr.bf16.mxu0 0
        %1385 = vmatpush1.bf16.msra.mxu0 0
        %1386 = vmatprep.subr.bf16.mxu0 0
        %1387 = vmatpush1.bf16.msra.mxu0 0
        %1388 = vmatprep.subr.bf16.mxu0 0
        %1389 = vmatpush1.bf16.msra.mxu0 0
        %1390 = vmatprep.subr.bf16.mxu0 0
        %1391 = vmatpush1.bf16.msra.mxu0 0
        %1392 = vmatprep.subr.bf16.mxu0 0
        %1393 = vmatpush1.bf16.msra.mxu0 0
        %1394 = vmatprep.subr.bf16.mxu0 0
        %1395 = vmatpush1.bf16.msra.mxu0 0
        %1396 = vmatprep.subr.bf16.mxu0 0
        %1397 = vmatpush1.bf16.msra.mxu0 0
        %1398 = vmatprep.subr.bf16.mxu0 0
        %1399 = vmatpush1.bf16.msra.mxu0 0
        %1400 = vmatprep.mubr.bf16.mxu0 0
        %1401 = vmatmul.mubr.bf16.gmra.mrb[0].mxu0 0
        %v1402 = vpop.f32.mrb[0].mxu0
        %v1403 = vadd.f32 0.0, %v1402
        %v1404 = vpop.f32.mrb[0].mxu0
        %v1405 = vadd.f32 0.0, %v1404
        %v1406 = vpop.f32.mrb[0].mxu0
        %v1407 = vpop.f32.mrb[0].mxu0
        %1408 = vdwg.mxu0
        %v1409 = vadd.f32 %v1131, %v1362
        %v1410 = vadd.f32 %v1132, %v1364
        %v1411 = vadd.f32 %v1133, %v1403
        %v1412 = vadd.f32 %v1134, %v1405
        %v1413 = vxor.u32 %v1409, 2147483648
        %v1414 = vxor.u32 %v1410, 2147483648
        %v1415 = vxor.u32 %v1411, 2147483648
        %v1416 = vmul.f32 %v1413, 1.442695
        %v1417 = vpow.pop %v1416
        %v1418 = vmul.f32 %v1414, 1.442695
        %v1419 = vpow.pop %v1418
        %v1420 = vmul.f32 %v1415, 1.442695
        %v1421 = vpow.pop %v1420
        %v1422 = vadd.f32 %v1417, 1.0
        %v1423 = vadd.f32 %v1419, 1.0
        %v1424 = vadd.f32 %v1421, 1.0
        %v1425 = vrcp.pop %v1422
        %v1426 = vmul.f32 1.0, %v1425
        %v1427 = vrcp.pop %v1423
        %v1428 = vmul.f32 1.0, %v1427
        %v1429 = vrcp.pop %v1424
        %v1430 = vmul.f32 1.0, %v1429
        %v1431 = vtanh.pop %v1412
        %v1432 = vmul.f32 %v1428, 0.0
        %v1433 = vmul.f32 %v1426, %v1431
        %v1434 = vadd.f32 %v1432, %v1433
        %v1435 = vtanh.pop %v1434
        %v1436 = vmul.f32 %v1430, %v1435
        %1437 = vst [vmem:[#allocation3] sm:$0xff] %v1436
        %s1438 = scalar_lea.vmem [#allocation2], 32
        %v1439 = vld [vmem:[%s1438] sm:$0xff]
        %v1440 = vld [vmem:[%s1438 + $0x8] sm:$0xff]
        %v1441 = vld [vmem:[%s1438 + $0x10] sm:$0xff]
        %v1442 = vld [vmem:[%s1438 + $0x18] sm:$0xff]
        %v1443 = vpack.c.bf16 %v1436, %v1436
        %v1444 = vld [vmem:[%s277] sm:$0xff]
        %v1445 = vld [vmem:[%s277 + $0x8] sm:$0xff]
        %v1446 = vld [vmem:[%s277 + $0x10] sm:$0xff]
        %v1447 = vld [vmem:[%s277 + $0x18] sm:$0xff]
        %v1448 = vld [vmem:[%s277 + $0x20] sm:$0xff]
        %v1449 = vld [vmem:[%s277 + $0x28] sm:$0xff]
        %v1450 = vld [vmem:[%s277 + $0x30] sm:$0xff]
        %v1451 = vld [vmem:[%s277 + $0x38] sm:$0xff]
        %v1452 = vld [vmem:[%s277 + $0x40] sm:$0xff]
        %v1453 = vld [vmem:[%s277 + $0x48] sm:$0xff]
        %v1454 = vld [vmem:[%s277 + $0x50] sm:$0xff]
        %v1455 = vld [vmem:[%s277 + $0x58] sm:$0xff]
        %v1456 = vld [vmem:[%s277 + $0x60] sm:$0xff]
        %v1457 = vld [vmem:[%s277 + $0x68] sm:$0xff]
        %v1458 = vld [vmem:[%s277 + $0x70] sm:$0xff]
        %v1459 = vld [vmem:[%s277 + $0x78] sm:$0xff]
        %v1460 = vld [vmem:[%s277 + $0x80] sm:$0xff]
        %v1461 = vld [vmem:[%s277 + $0x88] sm:$0xff]
        %v1462 = vld [vmem:[%s277 + $0x90] sm:$0xff]
        %v1463 = vld [vmem:[%s277 + $0x98] sm:$0xff]
        %v1464 = vld [vmem:[%s277 + $0xa0] sm:$0xff]
        %v1465 = vld [vmem:[%s277 + $0xa8] sm:$0xff]
        %v1466 = vld [vmem:[%s277 + $0xb0] sm:$0xff]
        %v1467 = vld [vmem:[%s277 + $0xb8] sm:$0xff]
        %v1468 = vld [vmem:[%s277 + $0xc0] sm:$0xff]
        %v1469 = vld [vmem:[%s277 + $0xc8] sm:$0xff]
        %v1470 = vld [vmem:[%s277 + $0xd0] sm:$0xff]
        %v1471 = vld [vmem:[%s277 + $0xd8] sm:$0xff]
        %v1472 = vld [vmem:[%s277 + $0xe0] sm:$0xff]
        %v1473 = vld [vmem:[%s277 + $0xe8] sm:$0xff]
        %v1474 = vld [vmem:[%s277 + $0xf0] sm:$0xff]
        %v1475 = vld [vmem:[%s277 + $0xf8] sm:$0xff]
        %v1508 = vunpack.c.l.b16 %v1444
        %v1509 = vunpack.c.h.b16 %v1444
        %v1510 = vunpack.c.l.b16 %v1445
        %v1511 = vunpack.c.h.b16 %v1445
        %v1512 = vunpack.c.l.b16 %v1446
        %v1513 = vunpack.c.h.b16 %v1446
        %v1514 = vunpack.c.l.b16 %v1447
        %v1515 = vunpack.c.h.b16 %v1447
        %v1516 = vunpack.c.l.b16 %v1448
        %v1517 = vunpack.c.h.b16 %v1448
        %v1518 = vunpack.c.l.b16 %v1449
        %v1519 = vunpack.c.h.b16 %v1449
        %v1520 = vunpack.c.l.b16 %v1450
        %v1521 = vunpack.c.h.b16 %v1450
        %v1522 = vunpack.c.l.b16 %v1451
        %v1523 = vunpack.c.h.b16 %v1451
        %v1524 = vunpack.c.l.b16 %v1452
        %v1525 = vunpack.c.h.b16 %v1452
        %v1526 = vunpack.c.l.b16 %v1453
        %v1527 = vunpack.c.h.b16 %v1453
        %v1528 = vunpack.c.l.b16 %v1454
        %v1529 = vunpack.c.h.b16 %v1454
        %v1530 = vunpack.c.l.b16 %v1455
        %v1531 = vunpack.c.h.b16 %v1455
        %v1532 = vunpack.c.l.b16 %v1456
        %v1533 = vunpack.c.h.b16 %v1456
        %v1534 = vunpack.c.l.b16 %v1457
        %v1535 = vunpack.c.h.b16 %v1457
        %v1536 = vunpack.c.l.b16 %v1458
        %v1537 = vunpack.c.h.b16 %v1458
        %v1538 = vunpack.c.l.b16 %v1459
        %v1539 = vunpack.c.h.b16 %v1459
        %v1540 = vunpack.c.l.b16 %v1460
        %v1541 = vunpack.c.h.b16 %v1460
        %v1542 = vunpack.c.l.b16 %v1461
        %v1543 = vunpack.c.h.b16 %v1461
        %v1544 = vunpack.c.l.b16 %v1462
        %v1545 = vunpack.c.h.b16 %v1462
        %v1546 = vunpack.c.l.b16 %v1463
        %v1547 = vunpack.c.h.b16 %v1463
        %v1548 = vunpack.c.l.b16 %v1464
        %v1549 = vunpack.c.h.b16 %v1464
        %v1550 = vunpack.c.l.b16 %v1465
        %v1551 = vunpack.c.h.b16 %v1465
        %v1552 = vunpack.c.l.b16 %v1466
        %v1553 = vunpack.c.h.b16 %v1466
        %v1554 = vunpack.c.l.b16 %v1467
        %v1555 = vunpack.c.h.b16 %v1467
        %v1556 = vunpack.c.l.b16 %v1468
        %v1557 = vunpack.c.h.b16 %v1468
        %v1558 = vunpack.c.l.b16 %v1469
        %v1559 = vunpack.c.h.b16 %v1469
        %v1560 = vunpack.c.l.b16 %v1470
        %v1561 = vunpack.c.h.b16 %v1470
        %v1562 = vunpack.c.l.b16 %v1471
        %v1563 = vunpack.c.h.b16 %v1471
        %v1564 = vunpack.c.l.b16 %v1472
        %v1565 = vunpack.c.h.b16 %v1472
        %v1566 = vunpack.c.l.b16 %v1473
        %v1567 = vunpack.c.h.b16 %v1473
        %v1568 = vunpack.c.l.b16 %v1474
        %v1569 = vunpack.c.h.b16 %v1474
        %v1570 = vunpack.c.l.b16 %v1475
        %v1571 = vunpack.c.h.b16 %v1475
        %v1572 = vpack.c.b16 %v1512, %v1508
        %v1573 = vpack.c.b16 %v1513, %v1509
        %v1574 = vpack.c.b16 %v1514, %v1510
        %v1575 = vpack.c.b16 %v1515, %v1511
        %v1576 = vpack.c.b16 %v1520, %v1516
        %v1577 = vpack.c.b16 %v1521, %v1517
        %v1578 = vpack.c.b16 %v1522, %v1518
        %v1579 = vpack.c.b16 %v1523, %v1519
        %v1580 = vpack.c.b16 %v1528, %v1524
        %v1581 = vpack.c.b16 %v1529, %v1525
        %v1582 = vpack.c.b16 %v1530, %v1526
        %v1583 = vpack.c.b16 %v1531, %v1527
        %v1584 = vpack.c.b16 %v1536, %v1532
        %v1585 = vpack.c.b16 %v1537, %v1533
        %v1586 = vpack.c.b16 %v1538, %v1534
        %v1587 = vpack.c.b16 %v1539, %v1535
        %v1588 = vpack.c.b16 %v1544, %v1540
        %v1589 = vpack.c.b16 %v1545, %v1541
        %v1590 = vpack.c.b16 %v1546, %v1542
        %v1591 = vpack.c.b16 %v1547, %v1543
        %v1592 = vpack.c.b16 %v1552, %v1548
        %v1593 = vpack.c.b16 %v1553, %v1549
        %v1594 = vpack.c.b16 %v1554, %v1550
        %v1595 = vpack.c.b16 %v1555, %v1551
        %v1596 = vpack.c.b16 %v1560, %v1556
        %v1597 = vpack.c.b16 %v1561, %v1557
        %v1598 = vpack.c.b16 %v1562, %v1558
        %v1599 = vpack.c.b16 %v1563, %v1559
        %v1600 = vpack.c.b16 %v1568, %v1564
        %v1601 = vpack.c.b16 %v1569, %v1565
        %v1602 = vpack.c.b16 %v1570, %v1566
        %v1603 = vpack.c.b16 %v1571, %v1567
        %1636 = vmatprep.subr.bf16.mxu0 %v1573
        %1637 = vmatpush1.bf16.msra.mxu0 %v1572
        %1638 = vmatprep.subr.bf16.mxu0 %v1577
        %1639 = vmatpush1.bf16.msra.mxu0 %v1576
        %1640 = vmatprep.subr.bf16.mxu0 %v1581
        %1641 = vmatpush1.bf16.msra.mxu0 %v1580
        %1642 = vmatprep.subr.bf16.mxu0 %v1585
        %1643 = vmatpush1.bf16.msra.mxu0 %v1584
        %1644 = vmatprep.subr.bf16.mxu0 %v1589
        %1645 = vmatpush1.bf16.msra.mxu0 %v1588
        %1646 = vmatprep.subr.bf16.mxu0 %v1593
        %1647 = vmatpush1.bf16.msra.mxu0 %v1592
        %1648 = vmatprep.subr.bf16.mxu0 %v1597
        %1649 = vmatpush1.bf16.msra.mxu0 %v1596
        %1650 = vmatprep.subr.bf16.mxu0 %v1601
        %1651 = vmatpush1.bf16.msra.mxu0 %v1600
        %1652 = vmatprep.subr.bf16.mxu0 0
        %1653 = vmatpush1.bf16.msra.mxu0 0
        %1654 = vmatprep.subr.bf16.mxu0 0
        %1655 = vmatpush1.bf16.msra.mxu0 0
        %1656 = vmatprep.subr.bf16.mxu0 0
        %1657 = vmatpush1.bf16.msra.mxu0 0
        %1658 = vmatprep.subr.bf16.mxu0 0
        %1659 = vmatpush1.bf16.msra.mxu0 0
        %1660 = vmatprep.subr.bf16.mxu0 0
        %1661 = vmatpush1.bf16.msra.mxu0 0
        %1662 = vmatprep.subr.bf16.mxu0 0
        %1663 = vmatpush1.bf16.msra.mxu0 0
        %1664 = vmatprep.subr.bf16.mxu0 0
        %1665 = vmatpush1.bf16.msra.mxu0 0
        %1666 = vmatprep.subr.bf16.mxu0 0
        %1667 = vmatpush1.bf16.msra.mxu0 0
        %1668 = vmatprep.mubr.bf16.mxu0 0
        %1669 = vmatmul.mubr.bf16.gmra.mrb[0].mxu0 %v1443
        %v1670 = vpop.f32.mrb[0].mxu0
        %v1671 = vadd.f32 0.0, %v1670
        %v1672 = vpop.f32.mrb[0].mxu0
        %v1673 = vadd.f32 0.0, %v1672
        %v1674 = vpop.f32.mrb[0].mxu0
        %v1675 = vpop.f32.mrb[0].mxu0
        %1676 = vdwg.mxu0
        %1677 = vmatprep.subr.bf16.mxu0 %v1575
        %1678 = vmatpush1.bf16.msra.mxu0 %v1574
        %1679 = vmatprep.subr.bf16.mxu0 %v1579
        %1680 = vmatpush1.bf16.msra.mxu0 %v1578
        %1681 = vmatprep.subr.bf16.mxu0 %v1583
        %1682 = vmatpush1.bf16.msra.mxu0 %v1582
        %1683 = vmatprep.subr.bf16.mxu0 %v1587
        %1684 = vmatpush1.bf16.msra.mxu0 %v1586
        %1685 = vmatprep.subr.bf16.mxu0 %v1591
        %1686 = vmatpush1.bf16.msra.mxu0 %v1590
        %1687 = vmatprep.subr.bf16.mxu0 %v1595
        %1688 = vmatpush1.bf16.msra.mxu0 %v1594
        %1689 = vmatprep.subr.bf16.mxu0 %v1599
        %1690 = vmatpush1.bf16.msra.mxu0 %v1598
        %1691 = vmatprep.subr.bf16.mxu0 %v1603
        %1692 = vmatpush1.bf16.msra.mxu0 %v1602
        %1693 = vmatprep.subr.bf16.mxu0 0
        %1694 = vmatpush1.bf16.msra.mxu0 0
        %1695 = vmatprep.subr.bf16.mxu0 0
        %1696 = vmatpush1.bf16.msra.mxu0 0
        %1697 = vmatprep.subr.bf16.mxu0 0
        %1698 = vmatpush1.bf16.msra.mxu0 0
        %1699 = vmatprep.subr.bf16.mxu0 0
        %1700 = vmatpush1.bf16.msra.mxu0 0
        %1701 = vmatprep.subr.bf16.mxu0 0
        %1702 = vmatpush1.bf16.msra.mxu0 0
        %1703 = vmatprep.subr.bf16.mxu0 0
        %1704 = vmatpush1.bf16.msra.mxu0 0
        %1705 = vmatprep.subr.bf16.mxu0 0
        %1706 = vmatpush1.bf16.msra.mxu0 0
        %1707 = vmatprep.subr.bf16.mxu0 0
        %1708 = vmatpush1.bf16.msra.mxu0 0
        %1709 = vmatprep.mubr.bf16.mxu0 0
        %1710 = vmatmul.mubr.bf16.gmra.mrb[0].mxu0 %v1443
        %v1711 = vpop.f32.mrb[0].mxu0
        %v1712 = vadd.f32 0.0, %v1711
        %v1713 = vpop.f32.mrb[0].mxu0
        %v1714 = vadd.f32 0.0, %v1713
        %v1715 = vpop.f32.mrb[0].mxu0
        %v1716 = vpop.f32.mrb[0].mxu0
        %1717 = vdwg.mxu0
        %v1718 = vadd.f32 %v1439, %v1671
        %v1719 = vadd.f32 %v1440, %v1673
        %v1720 = vadd.f32 %v1441, %v1712
        %v1721 = vadd.f32 %v1442, %v1714
        %v1722 = vxor.u32 %v1718, 2147483648
        %v1723 = vxor.u32 %v1719, 2147483648
        %v1724 = vxor.u32 %v1720, 2147483648
        %v1725 = vmul.f32 %v1722, 1.442695
        %v1726 = vpow.pop %v1725
        %v1727 = vmul.f32 %v1723, 1.442695
        %v1728 = vpow.pop %v1727
        %v1729 = vmul.f32 %v1724, 1.442695
        %v1730 = vpow.pop %v1729
        %v1731 = vadd.f32 %v1726, 1.0
        %v1732 = vadd.f32 %v1728, 1.0
        %v1733 = vadd.f32 %v1730, 1.0
        %v1734 = vrcp.pop %v1731
        %v1735 = vmul.f32 1.0, %v1734
        %v1736 = vrcp.pop %v1732
        %v1737 = vmul.f32 1.0, %v1736
        %v1738 = vrcp.pop %v1733
        %v1739 = vmul.f32 1.0, %v1738
        %v1740 = vtanh.pop %v1721
        %v1741 = vmul.f32 %v1737, %v1434
        %v1742 = vmul.f32 %v1735, %v1740
        %v1743 = vadd.f32 %v1741, %v1742
        %v1744 = vtanh.pop %v1743
        %v1745 = vmul.f32 %v1739, %v1744
        %s1746 = scalar_lea.vmem [#allocation3], 8
        %1747 = vst [vmem:[%s1746] sm:$0xff] %v1745
        %s1748 = scalar_lea.vmem [#allocation2], 64
        %v1749 = vld [vmem:[%s1748] sm:$0xff]
        %v1750 = vld [vmem:[%s1748 + $0x8] sm:$0xff]
        %v1751 = vld [vmem:[%s1748 + $0x10] sm:$0xff]
        %v1752 = vld [vmem:[%s1748 + $0x18] sm:$0xff]
        %v1753 = vpack.c.bf16 %v1745, %v1745
        %v1754 = vld [vmem:[%s277] sm:$0xff]
        %v1755 = vld [vmem:[%s277 + $0x8] sm:$0xff]
        %v1756 = vld [vmem:[%s277 + $0x10] sm:$0xff]
        %v1757 = vld [vmem:[%s277 + $0x18] sm:$0xff]
        %v1758 = vld [vmem:[%s277 + $0x20] sm:$0xff]
        %v1759 = vld [vmem:[%s277 + $0x28] sm:$0xff]
        %v1760 = vld [vmem:[%s277 + $0x30] sm:$0xff]
        %v1761 = vld [vmem:[%s277 + $0x38] sm:$0xff]
        %v1762 = vld [vmem:[%s277 + $0x40] sm:$0xff]
        %v1763 = vld [vmem:[%s277 + $0x48] sm:$0xff]
        %v1764 = vld [vmem:[%s277 + $0x50] sm:$0xff]
        %v1765 = vld [vmem:[%s277 + $0x58] sm:$0xff]
        %v1766 = vld [vmem:[%s277 + $0x60] sm:$0xff]
        %v1767 = vld [vmem:[%s277 + $0x68] sm:$0xff]
        %v1768 = vld [vmem:[%s277 + $0x70] sm:$0xff]
        %v1769 = vld [vmem:[%s277 + $0x78] sm:$0xff]
        %v1770 = vld [vmem:[%s277 + $0x80] sm:$0xff]
        %v1771 = vld [vmem:[%s277 + $0x88] sm:$0xff]
        %v1772 = vld [vmem:[%s277 + $0x90] sm:$0xff]
        %v1773 = vld [vmem:[%s277 + $0x98] sm:$0xff]
        %v1774 = vld [vmem:[%s277 + $0xa0] sm:$0xff]
        %v1775 = vld [vmem:[%s277 + $0xa8] sm:$0xff]
        %v1776 = vld [vmem:[%s277 + $0xb0] sm:$0xff]
        %v1777 = vld [vmem:[%s277 + $0xb8] sm:$0xff]
        %v1778 = vld [vmem:[%s277 + $0xc0] sm:$0xff]
        %v1779 = vld [vmem:[%s277 + $0xc8] sm:$0xff]
        %v1780 = vld [vmem:[%s277 + $0xd0] sm:$0xff]
        %v1781 = vld [vmem:[%s277 + $0xd8] sm:$0xff]
        %v1782 = vld [vmem:[%s277 + $0xe0] sm:$0xff]
        %v1783 = vld [vmem:[%s277 + $0xe8] sm:$0xff]
        %v1784 = vld [vmem:[%s277 + $0xf0] sm:$0xff]
        %v1785 = vld [vmem:[%s277 + $0xf8] sm:$0xff]
        %v1818 = vunpack.c.l.b16 %v1754
        %v1819 = vunpack.c.h.b16 %v1754
        %v1820 = vunpack.c.l.b16 %v1755
        %v1821 = vunpack.c.h.b16 %v1755
        %v1822 = vunpack.c.l.b16 %v1756
        %v1823 = vunpack.c.h.b16 %v1756
        %v1824 = vunpack.c.l.b16 %v1757
        %v1825 = vunpack.c.h.b16 %v1757
        %v1826 = vunpack.c.l.b16 %v1758
        %v1827 = vunpack.c.h.b16 %v1758
        %v1828 = vunpack.c.l.b16 %v1759
        %v1829 = vunpack.c.h.b16 %v1759
        %v1830 = vunpack.c.l.b16 %v1760
        %v1831 = vunpack.c.h.b16 %v1760
        %v1832 = vunpack.c.l.b16 %v1761
        %v1833 = vunpack.c.h.b16 %v1761
        %v1834 = vunpack.c.l.b16 %v1762
        %v1835 = vunpack.c.h.b16 %v1762
        %v1836 = vunpack.c.l.b16 %v1763
        %v1837 = vunpack.c.h.b16 %v1763
        %v1838 = vunpack.c.l.b16 %v1764
        %v1839 = vunpack.c.h.b16 %v1764
        %v1840 = vunpack.c.l.b16 %v1765
        %v1841 = vunpack.c.h.b16 %v1765
        %v1842 = vunpack.c.l.b16 %v1766
        %v1843 = vunpack.c.h.b16 %v1766
        %v1844 = vunpack.c.l.b16 %v1767
        %v1845 = vunpack.c.h.b16 %v1767
        %v1846 = vunpack.c.l.b16 %v1768
        %v1847 = vunpack.c.h.b16 %v1768
        %v1848 = vunpack.c.l.b16 %v1769
        %v1849 = vunpack.c.h.b16 %v1769
        %v1850 = vunpack.c.l.b16 %v1770
        %v1851 = vunpack.c.h.b16 %v1770
        %v1852 = vunpack.c.l.b16 %v1771
        %v1853 = vunpack.c.h.b16 %v1771
        %v1854 = vunpack.c.l.b16 %v1772
        %v1855 = vunpack.c.h.b16 %v1772
        %v1856 = vunpack.c.l.b16 %v1773
        %v1857 = vunpack.c.h.b16 %v1773
        %v1858 = vunpack.c.l.b16 %v1774
        %v1859 = vunpack.c.h.b16 %v1774
        %v1860 = vunpack.c.l.b16 %v1775
        %v1861 = vunpack.c.h.b16 %v1775
        %v1862 = vunpack.c.l.b16 %v1776
        %v1863 = vunpack.c.h.b16 %v1776
        %v1864 = vunpack.c.l.b16 %v1777
        %v1865 = vunpack.c.h.b16 %v1777
        %v1866 = vunpack.c.l.b16 %v1778
        %v1867 = vunpack.c.h.b16 %v1778
        %v1868 = vunpack.c.l.b16 %v1779
        %v1869 = vunpack.c.h.b16 %v1779
        %v1870 = vunpack.c.l.b16 %v1780
        %v1871 = vunpack.c.h.b16 %v1780
        %v1872 = vunpack.c.l.b16 %v1781
        %v1873 = vunpack.c.h.b16 %v1781
        %v1874 = vunpack.c.l.b16 %v1782
        %v1875 = vunpack.c.h.b16 %v1782
        %v1876 = vunpack.c.l.b16 %v1783
        %v1877 = vunpack.c.h.b16 %v1783
        %v1878 = vunpack.c.l.b16 %v1784
        %v1879 = vunpack.c.h.b16 %v1784
        %v1880 = vunpack.c.l.b16 %v1785
        %v1881 = vunpack.c.h.b16 %v1785
        %v1882 = vpack.c.b16 %v1822, %v1818
        %v1883 = vpack.c.b16 %v1823, %v1819
        %v1884 = vpack.c.b16 %v1824, %v1820
        %v1885 = vpack.c.b16 %v1825, %v1821
        %v1886 = vpack.c.b16 %v1830, %v1826
        %v1887 = vpack.c.b16 %v1831, %v1827
        %v1888 = vpack.c.b16 %v1832, %v1828
        %v1889 = vpack.c.b16 %v1833, %v1829
        %v1890 = vpack.c.b16 %v1838, %v1834
        %v1891 = vpack.c.b16 %v1839, %v1835
        %v1892 = vpack.c.b16 %v1840, %v1836
        %v1893 = vpack.c.b16 %v1841, %v1837
        %v1894 = vpack.c.b16 %v1846, %v1842
        %v1895 = vpack.c.b16 %v1847, %v1843
        %v1896 = vpack.c.b16 %v1848, %v1844
        %v1897 = vpack.c.b16 %v1849, %v1845
        %v1898 = vpack.c.b16 %v1854, %v1850
        %v1899 = vpack.c.b16 %v1855, %v1851
        %v1900 = vpack.c.b16 %v1856, %v1852
        %v1901 = vpack.c.b16 %v1857, %v1853
        %v1902 = vpack.c.b16 %v1862, %v1858
        %v1903 = vpack.c.b16 %v1863, %v1859
        %v1904 = vpack.c.b16 %v1864, %v1860
        %v1905 = vpack.c.b16 %v1865, %v1861
        %v1906 = vpack.c.b16 %v1870, %v1866
        %v1907 = vpack.c.b16 %v1871, %v1867
        %v1908 = vpack.c.b16 %v1872, %v1868
        %v1909 = vpack.c.b16 %v1873, %v1869
        %v1910 = vpack.c.b16 %v1878, %v1874
        %v1911 = vpack.c.b16 %v1879, %v1875
        %v1912 = vpack.c.b16 %v1880, %v1876
        %v1913 = vpack.c.b16 %v1881, %v1877
        %1946 = vmatprep.subr.bf16.mxu0 %v1883
        %1947 = vmatpush1.bf16.msra.mxu0 %v1882
        %1948 = vmatprep.subr.bf16.mxu0 %v1887
        %1949 = vmatpush1.bf16.msra.mxu0 %v1886
        %1950 = vmatprep.subr.bf16.mxu0 %v1891
        %1951 = vmatpush1.bf16.msra.mxu0 %v1890
        %1952 = vmatprep.subr.bf16.mxu0 %v1895
        %1953 = vmatpush1.bf16.msra.mxu0 %v1894
        %1954 = vmatprep.subr.bf16.mxu0 %v1899
        %1955 = vmatpush1.bf16.msra.mxu0 %v1898
        %1956 = vmatprep.subr.bf16.mxu0 %v1903
        %1957 = vmatpush1.bf16.msra.mxu0 %v1902
        %1958 = vmatprep.subr.bf16.mxu0 %v1907
        %1959 = vmatpush1.bf16.msra.mxu0 %v1906
        %1960 = vmatprep.subr.bf16.mxu0 %v1911
        %1961 = vmatpush1.bf16.msra.mxu0 %v1910
        %1962 = vmatprep.subr.bf16.mxu0 0
        %1963 = vmatpush1.bf16.msra.mxu0 0
        %1964 = vmatprep.subr.bf16.mxu0 0
        %1965 = vmatpush1.bf16.msra.mxu0 0
        %1966 = vmatprep.subr.bf16.mxu0 0
        %1967 = vmatpush1.bf16.msra.mxu0 0
        %1968 = vmatprep.subr.bf16.mxu0 0
        %1969 = vmatpush1.bf16.msra.mxu0 0
        %1970 = vmatprep.subr.bf16.mxu0 0
        %1971 = vmatpush1.bf16.msra.mxu0 0
        %1972 = vmatprep.subr.bf16.mxu0 0
        %1973 = vmatpush1.bf16.msra.mxu0 0
        %1974 = vmatprep.subr.bf16.mxu0 0
        %1975 = vmatpush1.bf16.msra.mxu0 0
        %1976 = vmatprep.subr.bf16.mxu0 0
        %1977 = vmatpush1.bf16.msra.mxu0 0
        %1978 = vmatprep.mubr.bf16.mxu0 0
        %1979 = vmatmul.mubr.bf16.gmra.mrb[0].mxu0 %v1753
        %v1980 = vpop.f32.mrb[0].mxu0
        %v1981 = vadd.f32 0.0, %v1980
        %v1982 = vpop.f32.mrb[0].mxu0
        %v1983 = vadd.f32 0.0, %v1982
        %v1984 = vpop.f32.mrb[0].mxu0
        %v1985 = vpop.f32.mrb[0].mxu0
        %1986 = vdwg.mxu0
        %1987 = vmatprep.subr.bf16.mxu0 %v1885
        %1988 = vmatpush1.bf16.msra.mxu0 %v1884
        %1989 = vmatprep.subr.bf16.mxu0 %v1889
        %1990 = vmatpush1.bf16.msra.mxu0 %v1888
        %1991 = vmatprep.subr.bf16.mxu0 %v1893
        %1992 = vmatpush1.bf16.msra.mxu0 %v1892
        %1993 = vmatprep.subr.bf16.mxu0 %v1897
        %1994 = vmatpush1.bf16.msra.mxu0 %v1896
        %1995 = vmatprep.subr.bf16.mxu0 %v1901
        %1996 = vmatpush1.bf16.msra.mxu0 %v1900
        %1997 = vmatprep.subr.bf16.mxu0 %v1905
        %1998 = vmatpush1.bf16.msra.mxu0 %v1904
        %1999 = vmatprep.subr.bf16.mxu0 %v1909
        %2000 = vmatpush1.bf16.msra.mxu0 %v1908
        %2001 = vmatprep.subr.bf16.mxu0 %v1913
        %2002 = vmatpush1.bf16.msra.mxu0 %v1912
        %2003 = vmatprep.subr.bf16.mxu0 0
        %2004 = vmatpush1.bf16.msra.mxu0 0
        %2005 = vmatprep.subr.bf16.mxu0 0
        %2006 = vmatpush1.bf16.msra.mxu0 0
        %2007 = vmatprep.subr.bf16.mxu0 0
        %2008 = vmatpush1.bf16.msra.mxu0 0
        %2009 = vmatprep.subr.bf16.mxu0 0
        %2010 = vmatpush1.bf16.msra.mxu0 0
        %2011 = vmatprep.subr.bf16.mxu0 0
        %2012 = vmatpush1.bf16.msra.mxu0 0
        %2013 = vmatprep.subr.bf16.mxu0 0
        %2014 = vmatpush1.bf16.msra.mxu0 0
        %2015 = vmatprep.subr.bf16.mxu0 0
        %2016 = vmatpush1.bf16.msra.mxu0 0
        %2017 = vmatprep.subr.bf16.mxu0 0
        %2018 = vmatpush1.bf16.msra.mxu0 0
        %2019 = vmatprep.mubr.bf16.mxu0 0
        %2020 = vmatmul.mubr.bf16.gmra.mrb[0].mxu0 %v1753
        %v2021 = vpop.f32.mrb[0].mxu0
        %v2022 = vadd.f32 0.0, %v2021
        %v2023 = vpop.f32.mrb[0].mxu0
        %v2024 = vadd.f32 0.0, %v2023
        %v2025 = vpop.f32.mrb[0].mxu0
        %v2026 = vpop.f32.mrb[0].mxu0
        %2027 = vdwg.mxu0
        %v2028 = vadd.f32 %v1749, %v1981
        %v2029 = vadd.f32 %v1750, %v1983
        %v2030 = vadd.f32 %v1751, %v2022
        %v2031 = vadd.f32 %v1752, %v2024
        %v2032 = vxor.u32 %v2028, 2147483648
        %v2033 = vxor.u32 %v2029, 2147483648
        %v2034 = vxor.u32 %v2030, 2147483648
        %v2035 = vmul.f32 %v2032, 1.442695
        %v2036 = vpow.pop %v2035
        %v2037 = vmul.f32 %v2033, 1.442695
        %v2038 = vpow.pop %v2037
        %v2039 = vmul.f32 %v2034, 1.442695
        %v2040 = vpow.pop %v2039
        %v2041 = vadd.f32 %v2036, 1.0
        %v2042 = vadd.f32 %v2038, 1.0
        %v2043 = vadd.f32 %v2040, 1.0
        %v2044 = vrcp.pop %v2041
        %v2045 = vmul.f32 1.0, %v2044
        %v2046 = vrcp.pop %v2042
        %v2047 = vmul.f32 1.0, %v2046
        %v2048 = vrcp.pop %v2043
        %v2049 = vmul.f32 1.0, %v2048
        %v2050 = vtanh.pop %v2031
        %v2051 = vmul.f32 %v2047, %v1743
        %v2052 = vmul.f32 %v2045, %v2050
        %v2053 = vadd.f32 %v2051, %v2052
        %v2054 = vtanh.pop %v2053
        %v2055 = vmul.f32 %v2049, %v2054
        %s2056 = scalar_lea.vmem [#allocation3], 16
        %2057 = vst [vmem:[%s2056] sm:$0xff] %v2055
        %s2058 = scalar_lea.vmem [#allocation2], 96
        %v2059 = vld [vmem:[%s2058] sm:$0xff]
        %v2060 = vld [vmem:[%s2058 + $0x8] sm:$0xff]
        %v2061 = vld [vmem:[%s2058 + $0x10] sm:$0xff]
        %v2062 = vld [vmem:[%s2058 + $0x18] sm:$0xff]
        %v2063 = vpack.c.bf16 %v2055, %v2055
        %v2064 = vld [vmem:[%s277] sm:$0xff]
        %v2065 = vld [vmem:[%s277 + $0x8] sm:$0xff]
        %v2066 = vld [vmem:[%s277 + $0x10] sm:$0xff]
        %v2067 = vld [vmem:[%s277 + $0x18] sm:$0xff]
        %v2068 = vld [vmem:[%s277 + $0x20] sm:$0xff]
        %v2069 = vld [vmem:[%s277 + $0x28] sm:$0xff]
        %v2070 = vld [vmem:[%s277 + $0x30] sm:$0xff]
        %v2071 = vld [vmem:[%s277 + $0x38] sm:$0xff]
        %v2072 = vld [vmem:[%s277 + $0x40] sm:$0xff]
        %v2073 = vld [vmem:[%s277 + $0x48] sm:$0xff]
        %v2074 = vld [vmem:[%s277 + $0x50] sm:$0xff]
        %v2075 = vld [vmem:[%s277 + $0x58] sm:$0xff]
        %v2076 = vld [vmem:[%s277 + $0x60] sm:$0xff]
        %v2077 = vld [vmem:[%s277 + $0x68] sm:$0xff]
        %v2078 = vld [vmem:[%s277 + $0x70] sm:$0xff]
        %v2079 = vld [vmem:[%s277 + $0x78] sm:$0xff]
        %v2080 = vld [vmem:[%s277 + $0x80] sm:$0xff]
        %v2081 = vld [vmem:[%s277 + $0x88] sm:$0xff]
        %v2082 = vld [vmem:[%s277 + $0x90] sm:$0xff]
        %v2083 = vld [vmem:[%s277 + $0x98] sm:$0xff]
        %v2084 = vld [vmem:[%s277 + $0xa0] sm:$0xff]
        %v2085 = vld [vmem:[%s277 + $0xa8] sm:$0xff]
        %v2086 = vld [vmem:[%s277 + $0xb0] sm:$0xff]
        %v2087 = vld [vmem:[%s277 + $0xb8] sm:$0xff]
        %v2088 = vld [vmem:[%s277 + $0xc0] sm:$0xff]
        %v2089 = vld [vmem:[%s277 + $0xc8] sm:$0xff]
        %v2090 = vld [vmem:[%s277 + $0xd0] sm:$0xff]
        %v2091 = vld [vmem:[%s277 + $0xd8] sm:$0xff]
        %v2092 = vld [vmem:[%s277 + $0xe0] sm:$0xff]
        %v2093 = vld [vmem:[%s277 + $0xe8] sm:$0xff]
        %v2094 = vld [vmem:[%s277 + $0xf0] sm:$0xff]
        %v2095 = vld [vmem:[%s277 + $0xf8] sm:$0xff]
        %v2128 = vunpack.c.l.b16 %v2064
        %v2129 = vunpack.c.h.b16 %v2064
        %v2130 = vunpack.c.l.b16 %v2065
        %v2131 = vunpack.c.h.b16 %v2065
        %v2132 = vunpack.c.l.b16 %v2066
        %v2133 = vunpack.c.h.b16 %v2066
        %v2134 = vunpack.c.l.b16 %v2067
        %v2135 = vunpack.c.h.b16 %v2067
        %v2136 = vunpack.c.l.b16 %v2068
        %v2137 = vunpack.c.h.b16 %v2068
        %v2138 = vunpack.c.l.b16 %v2069
        %v2139 = vunpack.c.h.b16 %v2069
        %v2140 = vunpack.c.l.b16 %v2070
        %v2141 = vunpack.c.h.b16 %v2070
        %v2142 = vunpack.c.l.b16 %v2071
        %v2143 = vunpack.c.h.b16 %v2071
        %v2144 = vunpack.c.l.b16 %v2072
        %v2145 = vunpack.c.h.b16 %v2072
        %v2146 = vunpack.c.l.b16 %v2073
        %v2147 = vunpack.c.h.b16 %v2073
        %v2148 = vunpack.c.l.b16 %v2074
        %v2149 = vunpack.c.h.b16 %v2074
        %v2150 = vunpack.c.l.b16 %v2075
        %v2151 = vunpack.c.h.b16 %v2075
        %v2152 = vunpack.c.l.b16 %v2076
        %v2153 = vunpack.c.h.b16 %v2076
        %v2154 = vunpack.c.l.b16 %v2077
        %v2155 = vunpack.c.h.b16 %v2077
        %v2156 = vunpack.c.l.b16 %v2078
        %v2157 = vunpack.c.h.b16 %v2078
        %v2158 = vunpack.c.l.b16 %v2079
        %v2159 = vunpack.c.h.b16 %v2079
        %v2160 = vunpack.c.l.b16 %v2080
        %v2161 = vunpack.c.h.b16 %v2080
        %v2162 = vunpack.c.l.b16 %v2081
        %v2163 = vunpack.c.h.b16 %v2081
        %v2164 = vunpack.c.l.b16 %v2082
        %v2165 = vunpack.c.h.b16 %v2082
        %v2166 = vunpack.c.l.b16 %v2083
        %v2167 = vunpack.c.h.b16 %v2083
        %v2168 = vunpack.c.l.b16 %v2084
        %v2169 = vunpack.c.h.b16 %v2084
        %v2170 = vunpack.c.l.b16 %v2085
        %v2171 = vunpack.c.h.b16 %v2085
        %v2172 = vunpack.c.l.b16 %v2086
        %v2173 = vunpack.c.h.b16 %v2086
        %v2174 = vunpack.c.l.b16 %v2087
        %v2175 = vunpack.c.h.b16 %v2087
        %v2176 = vunpack.c.l.b16 %v2088
        %v2177 = vunpack.c.h.b16 %v2088
        %v2178 = vunpack.c.l.b16 %v2089
        %v2179 = vunpack.c.h.b16 %v2089
        %v2180 = vunpack.c.l.b16 %v2090
        %v2181 = vunpack.c.h.b16 %v2090
        %v2182 = vunpack.c.l.b16 %v2091
        %v2183 = vunpack.c.h.b16 %v2091
        %v2184 = vunpack.c.l.b16 %v2092
        %v2185 = vunpack.c.h.b16 %v2092
        %v2186 = vunpack.c.l.b16 %v2093
        %v2187 = vunpack.c.h.b16 %v2093
        %v2188 = vunpack.c.l.b16 %v2094
        %v2189 = vunpack.c.h.b16 %v2094
        %v2190 = vunpack.c.l.b16 %v2095
        %v2191 = vunpack.c.h.b16 %v2095
        %v2192 = vpack.c.b16 %v2132, %v2128
        %v2193 = vpack.c.b16 %v2133, %v2129
        %v2194 = vpack.c.b16 %v2134, %v2130
        %v2195 = vpack.c.b16 %v2135, %v2131
        %v2196 = vpack.c.b16 %v2140, %v2136
        %v2197 = vpack.c.b16 %v2141, %v2137
        %v2198 = vpack.c.b16 %v2142, %v2138
        %v2199 = vpack.c.b16 %v2143, %v2139
        %v2200 = vpack.c.b16 %v2148, %v2144
        %v2201 = vpack.c.b16 %v2149, %v2145
        %v2202 = vpack.c.b16 %v2150, %v2146
        %v2203 = vpack.c.b16 %v2151, %v2147
        %v2204 = vpack.c.b16 %v2156, %v2152
        %v2205 = vpack.c.b16 %v2157, %v2153
        %v2206 = vpack.c.b16 %v2158, %v2154
        %v2207 = vpack.c.b16 %v2159, %v2155
        %v2208 = vpack.c.b16 %v2164, %v2160
        %v2209 = vpack.c.b16 %v2165, %v2161
        %v2210 = vpack.c.b16 %v2166, %v2162
        %v2211 = vpack.c.b16 %v2167, %v2163
        %v2212 = vpack.c.b16 %v2172, %v2168
        %v2213 = vpack.c.b16 %v2173, %v2169
        %v2214 = vpack.c.b16 %v2174, %v2170
        %v2215 = vpack.c.b16 %v2175, %v2171
        %v2216 = vpack.c.b16 %v2180, %v2176
        %v2217 = vpack.c.b16 %v2181, %v2177
        %v2218 = vpack.c.b16 %v2182, %v2178
        %v2219 = vpack.c.b16 %v2183, %v2179
        %v2220 = vpack.c.b16 %v2188, %v2184
        %v2221 = vpack.c.b16 %v2189, %v2185
        %v2222 = vpack.c.b16 %v2190, %v2186
        %v2223 = vpack.c.b16 %v2191, %v2187
        %2256 = vmatprep.subr.bf16.mxu0 %v2193
        %2257 = vmatpush1.bf16.msra.mxu0 %v2192
        %2258 = vmatprep.subr.bf16.mxu0 %v2197
        %2259 = vmatpush1.bf16.msra.mxu0 %v2196
        %2260 = vmatprep.subr.bf16.mxu0 %v2201
        %2261 = vmatpush1.bf16.msra.mxu0 %v2200
        %2262 = vmatprep.subr.bf16.mxu0 %v2205
        %2263 = vmatpush1.bf16.msra.mxu0 %v2204
        %2264 = vmatprep.subr.bf16.mxu0 %v2209
        %2265 = vmatpush1.bf16.msra.mxu0 %v2208
        %2266 = vmatprep.subr.bf16.mxu0 %v2213
        %2267 = vmatpush1.bf16.msra.mxu0 %v2212
        %2268 = vmatprep.subr.bf16.mxu0 %v2217
        %2269 = vmatpush1.bf16.msra.mxu0 %v2216
        %2270 = vmatprep.subr.bf16.mxu0 %v2221
        %2271 = vmatpush1.bf16.msra.mxu0 %v2220
        %2272 = vmatprep.subr.bf16.mxu0 0
        %2273 = vmatpush1.bf16.msra.mxu0 0
        %2274 = vmatprep.subr.bf16.mxu0 0
        %2275 = vmatpush1.bf16.msra.mxu0 0
        %2276 = vmatprep.subr.bf16.mxu0 0
        %2277 = vmatpush1.bf16.msra.mxu0 0
        %2278 = vmatprep.subr.bf16.mxu0 0
        %2279 = vmatpush1.bf16.msra.mxu0 0
        %2280 = vmatprep.subr.bf16.mxu0 0
        %2281 = vmatpush1.bf16.msra.mxu0 0
        %2282 = vmatprep.subr.bf16.mxu0 0
        %2283 = vmatpush1.bf16.msra.mxu0 0
        %2284 = vmatprep.subr.bf16.mxu0 0
        %2285 = vmatpush1.bf16.msra.mxu0 0
        %2286 = vmatprep.subr.bf16.mxu0 0
        %2287 = vmatpush1.bf16.msra.mxu0 0
        %2288 = vmatprep.mubr.bf16.mxu0 0
        %2289 = vmatmul.mubr.bf16.gmra.mrb[0].mxu0 %v2063
        %v2290 = vpop.f32.mrb[0].mxu0
        %v2291 = vadd.f32 0.0, %v2290
        %v2292 = vpop.f32.mrb[0].mxu0
        %v2293 = vadd.f32 0.0, %v2292
        %v2294 = vpop.f32.mrb[0].mxu0
        %v2295 = vpop.f32.mrb[0].mxu0
        %2296 = vdwg.mxu0
        %2297 = vmatprep.subr.bf16.mxu0 %v2195
        %2298 = vmatpush1.bf16.msra.mxu0 %v2194
        %2299 = vmatprep.subr.bf16.mxu0 %v2199
        %2300 = vmatpush1.bf16.msra.mxu0 %v2198
        %2301 = vmatprep.subr.bf16.mxu0 %v2203
        %2302 = vmatpush1.bf16.msra.mxu0 %v2202
        %2303 = vmatprep.subr.bf16.mxu0 %v2207
        %2304 = vmatpush1.bf16.msra.mxu0 %v2206
        %2305 = vmatprep.subr.bf16.mxu0 %v2211
        %2306 = vmatpush1.bf16.msra.mxu0 %v2210
        %2307 = vmatprep.subr.bf16.mxu0 %v2215
        %2308 = vmatpush1.bf16.msra.mxu0 %v2214
        %2309 = vmatprep.subr.bf16.mxu0 %v2219
        %2310 = vmatpush1.bf16.msra.mxu0 %v2218
        %2311 = vmatprep.subr.bf16.mxu0 %v2223
        %2312 = vmatpush1.bf16.msra.mxu0 %v2222
        %2313 = vmatprep.subr.bf16.mxu0 0
        %2314 = vmatpush1.bf16.msra.mxu0 0
        %2315 = vmatprep.subr.bf16.mxu0 0
        %2316 = vmatpush1.bf16.msra.mxu0 0
        %2317 = vmatprep.subr.bf16.mxu0 0
        %2318 = vmatpush1.bf16.msra.mxu0 0
        %2319 = vmatprep.subr.bf16.mxu0 0
        %2320 = vmatpush1.bf16.msra.mxu0 0
        %2321 = vmatprep.subr.bf16.mxu0 0
        %2322 = vmatpush1.bf16.msra.mxu0 0
        %2323 = vmatprep.subr.bf16.mxu0 0
        %2324 = vmatpush1.bf16.msra.mxu0 0
        %2325 = vmatprep.subr.bf16.mxu0 0
        %2326 = vmatpush1.bf16.msra.mxu0 0
        %2327 = vmatprep.subr.bf16.mxu0 0
        %2328 = vmatpush1.bf16.msra.mxu0 0
        %2329 = vmatprep.mubr.bf16.mxu0 0
        %2330 = vmatmul.mubr.bf16.gmra.mrb[0].mxu0 %v2063
        %v2331 = vpop.f32.mrb[0].mxu0
        %v2332 = vadd.f32 0.0, %v2331
        %v2333 = vpop.f32.mrb[0].mxu0
        %v2334 = vadd.f32 0.0, %v2333
        %v2335 = vpop.f32.mrb[0].mxu0
        %v2336 = vpop.f32.mrb[0].mxu0
        %2337 = vdwg.mxu0
        %v2338 = vadd.f32 %v2059, %v2291
        %v2339 = vadd.f32 %v2060, %v2293
        %v2340 = vadd.f32 %v2061, %v2332
        %v2341 = vadd.f32 %v2062, %v2334
        %v2342 = vxor.u32 %v2338, 2147483648
        %v2343 = vxor.u32 %v2339, 2147483648
        %v2344 = vxor.u32 %v2340, 2147483648
        %v2345 = vmul.f32 %v2342, 1.442695
        %v2346 = vpow.pop %v2345
        %v2347 = vmul.f32 %v2343, 1.442695
        %v2348 = vpow.pop %v2347
        %v2349 = vmul.f32 %v2344, 1.442695
        %v2350 = vpow.pop %v2349
        %v2351 = vadd.f32 %v2346, 1.0
        %v2352 = vadd.f32 %v2348, 1.0
        %v2353 = vadd.f32 %v2350, 1.0
        %v2354 = vrcp.pop %v2351
        %v2355 = vmul.f32 1.0, %v2354
        %v2356 = vrcp.pop %v2352
        %v2357 = vmul.f32 1.0, %v2356
        %v2358 = vrcp.pop %v2353
        %v2359 = vmul.f32 1.0, %v2358
        %v2360 = vtanh.pop %v2341
        %v2361 = vmul.f32 %v2357, %v2053
        %v2362 = vmul.f32 %v2355, %v2360
        %v2363 = vadd.f32 %v2361, %v2362
        %v2364 = vtanh.pop %v2363
        %v2365 = vmul.f32 %v2359, %v2364
        %s2366 = scalar_lea.vmem [#allocation3], 24
        %2367 = vst [vmem:[%s2366] sm:$0xff] %v2365
        %s2368 = scalar_lea.vmem [#allocation2], 128
        %v2369 = vld [vmem:[%s2368] sm:$0xff]
        %v2370 = vld [vmem:[%s2368 + $0x8] sm:$0xff]
        %v2371 = vld [vmem:[%s2368 + $0x10] sm:$0xff]
        %v2372 = vld [vmem:[%s2368 + $0x18] sm:$0xff]
        %v2373 = vpack.c.bf16 %v2365, %v2365
        %v2374 = vld [vmem:[%s277] sm:$0xff]
        %v2375 = vld [vmem:[%s277 + $0x8] sm:$0xff]
        %v2376 = vld [vmem:[%s277 + $0x10] sm:$0xff]
        %v2377 = vld [vmem:[%s277 + $0x18] sm:$0xff]
        %v2378 = vld [vmem:[%s277 + $0x20] sm:$0xff]
        %v2379 = vld [vmem:[%s277 + $0x28] sm:$0xff]
        %v2380 = vld [vmem:[%s277 + $0x30] sm:$0xff]
        %v2381 = vld [vmem:[%s277 + $0x38] sm:$0xff]
        %v2382 = vld [vmem:[%s277 + $0x40] sm:$0xff]
        %v2383 = vld [vmem:[%s277 + $0x48] sm:$0xff]
        %v2384 = vld [vmem:[%s277 + $0x50] sm:$0xff]
        %v2385 = vld [vmem:[%s277 + $0x58] sm:$0xff]
        %v2386 = vld [vmem:[%s277 + $0x60] sm:$0xff]
        %v2387 = vld [vmem:[%s277 + $0x68] sm:$0xff]
        %v2388 = vld [vmem:[%s277 + $0x70] sm:$0xff]
        %v2389 = vld [vmem:[%s277 + $0x78] sm:$0xff]
        %v2390 = vld [vmem:[%s277 + $0x80] sm:$0xff]
        %v2391 = vld [vmem:[%s277 + $0x88] sm:$0xff]
        %v2392 = vld [vmem:[%s277 + $0x90] sm:$0xff]
        %v2393 = vld [vmem:[%s277 + $0x98] sm:$0xff]
        %v2394 = vld [vmem:[%s277 + $0xa0] sm:$0xff]
        %v2395 = vld [vmem:[%s277 + $0xa8] sm:$0xff]
        %v2396 = vld [vmem:[%s277 + $0xb0] sm:$0xff]
        %v2397 = vld [vmem:[%s277 + $0xb8] sm:$0xff]
        %v2398 = vld [vmem:[%s277 + $0xc0] sm:$0xff]
        %v2399 = vld [vmem:[%s277 + $0xc8] sm:$0xff]
        %v2400 = vld [vmem:[%s277 + $0xd0] sm:$0xff]
        %v2401 = vld [vmem:[%s277 + $0xd8] sm:$0xff]
        %v2402 = vld [vmem:[%s277 + $0xe0] sm:$0xff]
        %v2403 = vld [vmem:[%s277 + $0xe8] sm:$0xff]
        %v2404 = vld [vmem:[%s277 + $0xf0] sm:$0xff]
        %v2405 = vld [vmem:[%s277 + $0xf8] sm:$0xff]
        %v2438 = vunpack.c.l.b16 %v2374
        %v2439 = vunpack.c.h.b16 %v2374
        %v2440 = vunpack.c.l.b16 %v2375
        %v2441 = vunpack.c.h.b16 %v2375
        %v2442 = vunpack.c.l.b16 %v2376
        %v2443 = vunpack.c.h.b16 %v2376
        %v2444 = vunpack.c.l.b16 %v2377
        %v2445 = vunpack.c.h.b16 %v2377
        %v2446 = vunpack.c.l.b16 %v2378
        %v2447 = vunpack.c.h.b16 %v2378
        %v2448 = vunpack.c.l.b16 %v2379
        %v2449 = vunpack.c.h.b16 %v2379
        %v2450 = vunpack.c.l.b16 %v2380
        %v2451 = vunpack.c.h.b16 %v2380
        %v2452 = vunpack.c.l.b16 %v2381
        %v2453 = vunpack.c.h.b16 %v2381
        %v2454 = vunpack.c.l.b16 %v2382
        %v2455 = vunpack.c.h.b16 %v2382
        %v2456 = vunpack.c.l.b16 %v2383
        %v2457 = vunpack.c.h.b16 %v2383
        %v2458 = vunpack.c.l.b16 %v2384
        %v2459 = vunpack.c.h.b16 %v2384
        %v2460 = vunpack.c.l.b16 %v2385
        %v2461 = vunpack.c.h.b16 %v2385
        %v2462 = vunpack.c.l.b16 %v2386
        %v2463 = vunpack.c.h.b16 %v2386
        %v2464 = vunpack.c.l.b16 %v2387
        %v2465 = vunpack.c.h.b16 %v2387
        %v2466 = vunpack.c.l.b16 %v2388
        %v2467 = vunpack.c.h.b16 %v2388
        %v2468 = vunpack.c.l.b16 %v2389
        %v2469 = vunpack.c.h.b16 %v2389
        %v2470 = vunpack.c.l.b16 %v2390
        %v2471 = vunpack.c.h.b16 %v2390
        %v2472 = vunpack.c.l.b16 %v2391
        %v2473 = vunpack.c.h.b16 %v2391
        %v2474 = vunpack.c.l.b16 %v2392
        %v2475 = vunpack.c.h.b16 %v2392
        %v2476 = vunpack.c.l.b16 %v2393
        %v2477 = vunpack.c.h.b16 %v2393
        %v2478 = vunpack.c.l.b16 %v2394
        %v2479 = vunpack.c.h.b16 %v2394
        %v2480 = vunpack.c.l.b16 %v2395
        %v2481 = vunpack.c.h.b16 %v2395
        %v2482 = vunpack.c.l.b16 %v2396
        %v2483 = vunpack.c.h.b16 %v2396
        %v2484 = vunpack.c.l.b16 %v2397
        %v2485 = vunpack.c.h.b16 %v2397
        %v2486 = vunpack.c.l.b16 %v2398
        %v2487 = vunpack.c.h.b16 %v2398
        %v2488 = vunpack.c.l.b16 %v2399
        %v2489 = vunpack.c.h.b16 %v2399
        %v2490 = vunpack.c.l.b16 %v2400
        %v2491 = vunpack.c.h.b16 %v2400
        %v2492 = vunpack.c.l.b16 %v2401
        %v2493 = vunpack.c.h.b16 %v2401
        %v2494 = vunpack.c.l.b16 %v2402
        %v2495 = vunpack.c.h.b16 %v2402
        %v2496 = vunpack.c.l.b16 %v2403
        %v2497 = vunpack.c.h.b16 %v2403
        %v2498 = vunpack.c.l.b16 %v2404
        %v2499 = vunpack.c.h.b16 %v2404
        %v2500 = vunpack.c.l.b16 %v2405
        %v2501 = vunpack.c.h.b16 %v2405
        %v2502 = vpack.c.b16 %v2442, %v2438
        %v2503 = vpack.c.b16 %v2443, %v2439
        %v2504 = vpack.c.b16 %v2444, %v2440
        %v2505 = vpack.c.b16 %v2445, %v2441
        %v2506 = vpack.c.b16 %v2450, %v2446
        %v2507 = vpack.c.b16 %v2451, %v2447
        %v2508 = vpack.c.b16 %v2452, %v2448
        %v2509 = vpack.c.b16 %v2453, %v2449
        %v2510 = vpack.c.b16 %v2458, %v2454
        %v2511 = vpack.c.b16 %v2459, %v2455
        %v2512 = vpack.c.b16 %v2460, %v2456
        %v2513 = vpack.c.b16 %v2461, %v2457
        %v2514 = vpack.c.b16 %v2466, %v2462
        %v2515 = vpack.c.b16 %v2467, %v2463
        %v2516 = vpack.c.b16 %v2468, %v2464
        %v2517 = vpack.c.b16 %v2469, %v2465
        %v2518 = vpack.c.b16 %v2474, %v2470
        %v2519 = vpack.c.b16 %v2475, %v2471
        %v2520 = vpack.c.b16 %v2476, %v2472
        %v2521 = vpack.c.b16 %v2477, %v2473
        %v2522 = vpack.c.b16 %v2482, %v2478
        %v2523 = vpack.c.b16 %v2483, %v2479
        %v2524 = vpack.c.b16 %v2484, %v2480
        %v2525 = vpack.c.b16 %v2485, %v2481
        %v2526 = vpack.c.b16 %v2490, %v2486
        %v2527 = vpack.c.b16 %v2491, %v2487
        %v2528 = vpack.c.b16 %v2492, %v2488
        %v2529 = vpack.c.b16 %v2493, %v2489
        %v2530 = vpack.c.b16 %v2498, %v2494
        %v2531 = vpack.c.b16 %v2499, %v2495
        %v2532 = vpack.c.b16 %v2500, %v2496
        %v2533 = vpack.c.b16 %v2501, %v2497
        %2566 = vmatprep.subr.bf16.mxu0 %v2503
        %2567 = vmatpush1.bf16.msra.mxu0 %v2502
        %2568 = vmatprep.subr.bf16.mxu0 %v2507
        %2569 = vmatpush1.bf16.msra.mxu0 %v2506
        %2570 = vmatprep.subr.bf16.mxu0 %v2511
        %2571 = vmatpush1.bf16.msra.mxu0 %v2510
        %2572 = vmatprep.subr.bf16.mxu0 %v2515
        %2573 = vmatpush1.bf16.msra.mxu0 %v2514
        %2574 = vmatprep.subr.bf16.mxu0 %v2519
        %2575 = vmatpush1.bf16.msra.mxu0 %v2518
        %2576 = vmatprep.subr.bf16.mxu0 %v2523
        %2577 = vmatpush1.bf16.msra.mxu0 %v2522
        %2578 = vmatprep.subr.bf16.mxu0 %v2527
        %2579 = vmatpush1.bf16.msra.mxu0 %v2526
        %2580 = vmatprep.subr.bf16.mxu0 %v2531
        %2581 = vmatpush1.bf16.msra.mxu0 %v2530
        %2582 = vmatprep.subr.bf16.mxu0 0
        %2583 = vmatpush1.bf16.msra.mxu0 0
        %2584 = vmatprep.subr.bf16.mxu0 0
        %2585 = vmatpush1.bf16.msra.mxu0 0
        %2586 = vmatprep.subr.bf16.mxu0 0
        %2587 = vmatpush1.bf16.msra.mxu0 0
        %2588 = vmatprep.subr.bf16.mxu0 0
        %2589 = vmatpush1.bf16.msra.mxu0 0
        %2590 = vmatprep.subr.bf16.mxu0 0
        %2591 = vmatpush1.bf16.msra.mxu0 0
        %2592 = vmatprep.subr.bf16.mxu0 0
        %2593 = vmatpush1.bf16.msra.mxu0 0
        %2594 = vmatprep.subr.bf16.mxu0 0
        %2595 = vmatpush1.bf16.msra.mxu0 0
        %2596 = vmatprep.subr.bf16.mxu0 0
        %2597 = vmatpush1.bf16.msra.mxu0 0
        %2598 = vmatprep.mubr.bf16.mxu0 0
        %2599 = vmatmul.mubr.bf16.gmra.mrb[0].mxu0 %v2373
        %v2600 = vpop.f32.mrb[0].mxu0
        %v2601 = vadd.f32 0.0, %v2600
        %v2602 = vpop.f32.mrb[0].mxu0
        %v2603 = vadd.f32 0.0, %v2602
        %v2604 = vpop.f32.mrb[0].mxu0
        %v2605 = vpop.f32.mrb[0].mxu0
        %2606 = vdwg.mxu0
        %2607 = vmatprep.subr.bf16.mxu0 %v2505
        %2608 = vmatpush1.bf16.msra.mxu0 %v2504
        %2609 = vmatprep.subr.bf16.mxu0 %v2509
        %2610 = vmatpush1.bf16.msra.mxu0 %v2508
        %2611 = vmatprep.subr.bf16.mxu0 %v2513
        %2612 = vmatpush1.bf16.msra.mxu0 %v2512
        %2613 = vmatprep.subr.bf16.mxu0 %v2517
        %2614 = vmatpush1.bf16.msra.mxu0 %v2516
        %2615 = vmatprep.subr.bf16.mxu0 %v2521
        %2616 = vmatpush1.bf16.msra.mxu0 %v2520
        %2617 = vmatprep.subr.bf16.mxu0 %v2525
        %2618 = vmatpush1.bf16.msra.mxu0 %v2524
        %2619 = vmatprep.subr.bf16.mxu0 %v2529
        %2620 = vmatpush1.bf16.msra.mxu0 %v2528
        %2621 = vmatprep.subr.bf16.mxu0 %v2533
        %2622 = vmatpush1.bf16.msra.mxu0 %v2532
        %2623 = vmatprep.subr.bf16.mxu0 0
        %2624 = vmatpush1.bf16.msra.mxu0 0
        %2625 = vmatprep.subr.bf16.mxu0 0
        %2626 = vmatpush1.bf16.msra.mxu0 0
        %2627 = vmatprep.subr.bf16.mxu0 0
        %2628 = vmatpush1.bf16.msra.mxu0 0
        %2629 = vmatprep.subr.bf16.mxu0 0
        %2630 = vmatpush1.bf16.msra.mxu0 0
        %2631 = vmatprep.subr.bf16.mxu0 0
        %2632 = vmatpush1.bf16.msra.mxu0 0
        %2633 = vmatprep.subr.bf16.mxu0 0
        %2634 = vmatpush1.bf16.msra.mxu0 0
        %2635 = vmatprep.subr.bf16.mxu0 0
        %2636 = vmatpush1.bf16.msra.mxu0 0
        %2637 = vmatprep.subr.bf16.mxu0 0
        %2638 = vmatpush1.bf16.msra.mxu0 0
        %2639 = vmatprep.mubr.bf16.mxu0 0
        %2640 = vmatmul.mubr.bf16.gmra.mrb[0].mxu0 %v2373
        %v2641 = vpop.f32.mrb[0].mxu0
        %v2642 = vadd.f32 0.0, %v2641
        %v2643 = vpop.f32.mrb[0].mxu0
        %v2644 = vadd.f32 0.0, %v2643
        %v2645 = vpop.f32.mrb[0].mxu0
        %v2646 = vpop.f32.mrb[0].mxu0
        %2647 = vdwg.mxu0
        %v2648 = vadd.f32 %v2369, %v2601
        %v2649 = vadd.f32 %v2370, %v2603
        %v2650 = vadd.f32 %v2371, %v2642
        %v2651 = vadd.f32 %v2372, %v2644
        %v2652 = vxor.u32 %v2648, 2147483648
        %v2653 = vxor.u32 %v2649, 2147483648
        %v2654 = vxor.u32 %v2650, 2147483648
        %v2655 = vmul.f32 %v2652, 1.442695
        %v2656 = vpow.pop %v2655
        %v2657 = vmul.f32 %v2653, 1.442695
        %v2658 = vpow.pop %v2657
        %v2659 = vmul.f32 %v2654, 1.442695
        %v2660 = vpow.pop %v2659
        %v2661 = vadd.f32 %v2656, 1.0
        %v2662 = vadd.f32 %v2658, 1.0
        %v2663 = vadd.f32 %v2660, 1.0
        %v2664 = vrcp.pop %v2661
        %v2665 = vmul.f32 1.0, %v2664
        %v2666 = vrcp.pop %v2662
        %v2667 = vmul.f32 1.0, %v2666
        %v2668 = vrcp.pop %v2663
        %v2669 = vmul.f32 1.0, %v2668
        %v2670 = vtanh.pop %v2651
        %v2671 = vmul.f32 %v2667, %v2363
        %v2672 = vmul.f32 %v2665, %v2670
        %v2673 = vadd.f32 %v2671, %v2672
        %v2674 = vtanh.pop %v2673
        %v2675 = vmul.f32 %v2669, %v2674
        %s2676 = scalar_lea.vmem [#allocation3], 32
        %2677 = vst [vmem:[%s2676] sm:$0xff] %v2675
        %s2678 = scalar_lea.vmem [#allocation2], 160
        %v2679 = vld [vmem:[%s2678] sm:$0xff]
        %v2680 = vld [vmem:[%s2678 + $0x8] sm:$0xff]
        %v2681 = vld [vmem:[%s2678 + $0x10] sm:$0xff]
        %v2682 = vld [vmem:[%s2678 + $0x18] sm:$0xff]
        %v2683 = vpack.c.bf16 %v2675, %v2675
        %v2684 = vld [vmem:[%s277] sm:$0xff]
        %v2685 = vld [vmem:[%s277 + $0x8] sm:$0xff]
        %v2686 = vld [vmem:[%s277 + $0x10] sm:$0xff]
        %v2687 = vld [vmem:[%s277 + $0x18] sm:$0xff]
        %v2688 = vld [vmem:[%s277 + $0x20] sm:$0xff]
        %v2689 = vld [vmem:[%s277 + $0x28] sm:$0xff]
        %v2690 = vld [vmem:[%s277 + $0x30] sm:$0xff]
        %v2691 = vld [vmem:[%s277 + $0x38] sm:$0xff]
        %v2692 = vld [vmem:[%s277 + $0x40] sm:$0xff]
        %v2693 = vld [vmem:[%s277 + $0x48] sm:$0xff]
        %v2694 = vld [vmem:[%s277 + $0x50] sm:$0xff]
        %v2695 = vld [vmem:[%s277 + $0x58] sm:$0xff]
        %v2696 = vld [vmem:[%s277 + $0x60] sm:$0xff]
        %v2697 = vld [vmem:[%s277 + $0x68] sm:$0xff]
        %v2698 = vld [vmem:[%s277 + $0x70] sm:$0xff]
        %v2699 = vld [vmem:[%s277 + $0x78] sm:$0xff]
        %v2700 = vld [vmem:[%s277 + $0x80] sm:$0xff]
        %v2701 = vld [vmem:[%s277 + $0x88] sm:$0xff]
        %v2702 = vld [vmem:[%s277 + $0x90] sm:$0xff]
        %v2703 = vld [vmem:[%s277 + $0x98] sm:$0xff]
        %v2704 = vld [vmem:[%s277 + $0xa0] sm:$0xff]
        %v2705 = vld [vmem:[%s277 + $0xa8] sm:$0xff]
        %v2706 = vld [vmem:[%s277 + $0xb0] sm:$0xff]
        %v2707 = vld [vmem:[%s277 + $0xb8] sm:$0xff]
        %v2708 = vld [vmem:[%s277 + $0xc0] sm:$0xff]
        %v2709 = vld [vmem:[%s277 + $0xc8] sm:$0xff]
        %v2710 = vld [vmem:[%s277 + $0xd0] sm:$0xff]
        %v2711 = vld [vmem:[%s277 + $0xd8] sm:$0xff]
        %v2712 = vld [vmem:[%s277 + $0xe0] sm:$0xff]
        %v2713 = vld [vmem:[%s277 + $0xe8] sm:$0xff]
        %v2714 = vld [vmem:[%s277 + $0xf0] sm:$0xff]
        %v2715 = vld [vmem:[%s277 + $0xf8] sm:$0xff]
        %v2748 = vunpack.c.l.b16 %v2684
        %v2749 = vunpack.c.h.b16 %v2684
        %v2750 = vunpack.c.l.b16 %v2685
        %v2751 = vunpack.c.h.b16 %v2685
        %v2752 = vunpack.c.l.b16 %v2686
        %v2753 = vunpack.c.h.b16 %v2686
        %v2754 = vunpack.c.l.b16 %v2687
        %v2755 = vunpack.c.h.b16 %v2687
        %v2756 = vunpack.c.l.b16 %v2688
        %v2757 = vunpack.c.h.b16 %v2688
        %v2758 = vunpack.c.l.b16 %v2689
        %v2759 = vunpack.c.h.b16 %v2689
        %v2760 = vunpack.c.l.b16 %v2690
        %v2761 = vunpack.c.h.b16 %v2690
        %v2762 = vunpack.c.l.b16 %v2691
        %v2763 = vunpack.c.h.b16 %v2691
        %v2764 = vunpack.c.l.b16 %v2692
        %v2765 = vunpack.c.h.b16 %v2692
        %v2766 = vunpack.c.l.b16 %v2693
        %v2767 = vunpack.c.h.b16 %v2693
        %v2768 = vunpack.c.l.b16 %v2694
        %v2769 = vunpack.c.h.b16 %v2694
        %v2770 = vunpack.c.l.b16 %v2695
        %v2771 = vunpack.c.h.b16 %v2695
        %v2772 = vunpack.c.l.b16 %v2696
        %v2773 = vunpack.c.h.b16 %v2696
        %v2774 = vunpack.c.l.b16 %v2697
        %v2775 = vunpack.c.h.b16 %v2697
        %v2776 = vunpack.c.l.b16 %v2698
        %v2777 = vunpack.c.h.b16 %v2698
        %v2778 = vunpack.c.l.b16 %v2699
        %v2779 = vunpack.c.h.b16 %v2699
        %v2780 = vunpack.c.l.b16 %v2700
        %v2781 = vunpack.c.h.b16 %v2700
        %v2782 = vunpack.c.l.b16 %v2701
        %v2783 = vunpack.c.h.b16 %v2701
        %v2784 = vunpack.c.l.b16 %v2702
        %v2785 = vunpack.c.h.b16 %v2702
        %v2786 = vunpack.c.l.b16 %v2703
        %v2787 = vunpack.c.h.b16 %v2703
        %v2788 = vunpack.c.l.b16 %v2704
        %v2789 = vunpack.c.h.b16 %v2704
        %v2790 = vunpack.c.l.b16 %v2705
        %v2791 = vunpack.c.h.b16 %v2705
        %v2792 = vunpack.c.l.b16 %v2706
        %v2793 = vunpack.c.h.b16 %v2706
        %v2794 = vunpack.c.l.b16 %v2707
        %v2795 = vunpack.c.h.b16 %v2707
        %v2796 = vunpack.c.l.b16 %v2708
        %v2797 = vunpack.c.h.b16 %v2708
        %v2798 = vunpack.c.l.b16 %v2709
        %v2799 = vunpack.c.h.b16 %v2709
        %v2800 = vunpack.c.l.b16 %v2710
        %v2801 = vunpack.c.h.b16 %v2710
        %v2802 = vunpack.c.l.b16 %v2711
        %v2803 = vunpack.c.h.b16 %v2711
        %v2804 = vunpack.c.l.b16 %v2712
        %v2805 = vunpack.c.h.b16 %v2712
        %v2806 = vunpack.c.l.b16 %v2713
        %v2807 = vunpack.c.h.b16 %v2713
        %v2808 = vunpack.c.l.b16 %v2714
        %v2809 = vunpack.c.h.b16 %v2714
        %v2810 = vunpack.c.l.b16 %v2715
        %v2811 = vunpack.c.h.b16 %v2715
        %v2812 = vpack.c.b16 %v2752, %v2748
        %v2813 = vpack.c.b16 %v2753, %v2749
        %v2814 = vpack.c.b16 %v2754, %v2750
        %v2815 = vpack.c.b16 %v2755, %v2751
        %v2816 = vpack.c.b16 %v2760, %v2756
        %v2817 = vpack.c.b16 %v2761, %v2757
        %v2818 = vpack.c.b16 %v2762, %v2758
        %v2819 = vpack.c.b16 %v2763, %v2759
        %v2820 = vpack.c.b16 %v2768, %v2764
        %v2821 = vpack.c.b16 %v2769, %v2765
        %v2822 = vpack.c.b16 %v2770, %v2766
        %v2823 = vpack.c.b16 %v2771, %v2767
        %v2824 = vpack.c.b16 %v2776, %v2772
        %v2825 = vpack.c.b16 %v2777, %v2773
        %v2826 = vpack.c.b16 %v2778, %v2774
        %v2827 = vpack.c.b16 %v2779, %v2775
        %v2828 = vpack.c.b16 %v2784, %v2780
        %v2829 = vpack.c.b16 %v2785, %v2781
        %v2830 = vpack.c.b16 %v2786, %v2782
        %v2831 = vpack.c.b16 %v2787, %v2783
        %v2832 = vpack.c.b16 %v2792, %v2788
        %v2833 = vpack.c.b16 %v2793, %v2789
        %v2834 = vpack.c.b16 %v2794, %v2790
        %v2835 = vpack.c.b16 %v2795, %v2791
        %v2836 = vpack.c.b16 %v2800, %v2796
        %v2837 = vpack.c.b16 %v2801, %v2797
        %v2838 = vpack.c.b16 %v2802, %v2798
        %v2839 = vpack.c.b16 %v2803, %v2799
        %v2840 = vpack.c.b16 %v2808, %v2804
        %v2841 = vpack.c.b16 %v2809, %v2805
        %v2842 = vpack.c.b16 %v2810, %v2806
        %v2843 = vpack.c.b16 %v2811, %v2807
        %2876 = vmatprep.subr.bf16.mxu0 %v2813
        %2877 = vmatpush1.bf16.msra.mxu0 %v2812
        %2878 = vmatprep.subr.bf16.mxu0 %v2817
        %2879 = vmatpush1.bf16.msra.mxu0 %v2816
        %2880 = vmatprep.subr.bf16.mxu0 %v2821
        %2881 = vmatpush1.bf16.msra.mxu0 %v2820
        %2882 = vmatprep.subr.bf16.mxu0 %v2825
        %2883 = vmatpush1.bf16.msra.mxu0 %v2824
        %2884 = vmatprep.subr.bf16.mxu0 %v2829
        %2885 = vmatpush1.bf16.msra.mxu0 %v2828
        %2886 = vmatprep.subr.bf16.mxu0 %v2833
        %2887 = vmatpush1.bf16.msra.mxu0 %v2832
        %2888 = vmatprep.subr.bf16.mxu0 %v2837
        %2889 = vmatpush1.bf16.msra.mxu0 %v2836
        %2890 = vmatprep.subr.bf16.mxu0 %v2841
        %2891 = vmatpush1.bf16.msra.mxu0 %v2840
        %2892 = vmatprep.subr.bf16.mxu0 0
        %2893 = vmatpush1.bf16.msra.mxu0 0
        %2894 = vmatprep.subr.bf16.mxu0 0
        %2895 = vmatpush1.bf16.msra.mxu0 0
        %2896 = vmatprep.subr.bf16.mxu0 0
        %2897 = vmatpush1.bf16.msra.mxu0 0
        %2898 = vmatprep.subr.bf16.mxu0 0
        %2899 = vmatpush1.bf16.msra.mxu0 0
        %2900 = vmatprep.subr.bf16.mxu0 0
        %2901 = vmatpush1.bf16.msra.mxu0 0
        %2902 = vmatprep.subr.bf16.mxu0 0
        %2903 = vmatpush1.bf16.msra.mxu0 0
        %2904 = vmatprep.subr.bf16.mxu0 0
        %2905 = vmatpush1.bf16.msra.mxu0 0
        %2906 = vmatprep.subr.bf16.mxu0 0
        %2907 = vmatpush1.bf16.msra.mxu0 0
        %2908 = vmatprep.mubr.bf16.mxu0 0
        %2909 = vmatmul.mubr.bf16.gmra.mrb[0].mxu0 %v2683
        %v2910 = vpop.f32.mrb[0].mxu0
        %v2911 = vadd.f32 0.0, %v2910
        %v2912 = vpop.f32.mrb[0].mxu0
        %v2913 = vadd.f32 0.0, %v2912
        %v2914 = vpop.f32.mrb[0].mxu0
        %v2915 = vpop.f32.mrb[0].mxu0
        %2916 = vdwg.mxu0
        %2917 = vmatprep.subr.bf16.mxu0 %v2815
        %2918 = vmatpush1.bf16.msra.mxu0 %v2814
        %2919 = vmatprep.subr.bf16.mxu0 %v2819
        %2920 = vmatpush1.bf16.msra.mxu0 %v2818
        %2921 = vmatprep.subr.bf16.mxu0 %v2823
        %2922 = vmatpush1.bf16.msra.mxu0 %v2822
        %2923 = vmatprep.subr.bf16.mxu0 %v2827
        %2924 = vmatpush1.bf16.msra.mxu0 %v2826
        %2925 = vmatprep.subr.bf16.mxu0 %v2831
        %2926 = vmatpush1.bf16.msra.mxu0 %v2830
        %2927 = vmatprep.subr.bf16.mxu0 %v2835
        %2928 = vmatpush1.bf16.msra.mxu0 %v2834
        %2929 = vmatprep.subr.bf16.mxu0 %v2839
        %2930 = vmatpush1.bf16.msra.mxu0 %v2838
        %2931 = vmatprep.subr.bf16.mxu0 %v2843
        %2932 = vmatpush1.bf16.msra.mxu0 %v2842
        %2933 = vmatprep.subr.bf16.mxu0 0
        %2934 = vmatpush1.bf16.msra.mxu0 0
        %2935 = vmatprep.subr.bf16.mxu0 0
        %2936 = vmatpush1.bf16.msra.mxu0 0
        %2937 = vmatprep.subr.bf16.mxu0 0
        %2938 = vmatpush1.bf16.msra.mxu0 0
        %2939 = vmatprep.subr.bf16.mxu0 0
        %2940 = vmatpush1.bf16.msra.mxu0 0
        %2941 = vmatprep.subr.bf16.mxu0 0
        %2942 = vmatpush1.bf16.msra.mxu0 0
        %2943 = vmatprep.subr.bf16.mxu0 0
        %2944 = vmatpush1.bf16.msra.mxu0 0
        %2945 = vmatprep.subr.bf16.mxu0 0
        %2946 = vmatpush1.bf16.msra.mxu0 0
        %2947 = vmatprep.subr.bf16.mxu0 0
        %2948 = vmatpush1.bf16.msra.mxu0 0
        %2949 = vmatprep.mubr.bf16.mxu0 0
        %2950 = vmatmul.mubr.bf16.gmra.mrb[0].mxu0 %v2683
        %v2951 = vpop.f32.mrb[0].mxu0
        %v2952 = vadd.f32 0.0, %v2951
        %v2953 = vpop.f32.mrb[0].mxu0
        %v2954 = vadd.f32 0.0, %v2953
        %v2955 = vpop.f32.mrb[0].mxu0
        %v2956 = vpop.f32.mrb[0].mxu0
        %2957 = vdwg.mxu0
        %v2958 = vadd.f32 %v2679, %v2911
        %v2959 = vadd.f32 %v2680, %v2913
        %v2960 = vadd.f32 %v2681, %v2952
        %v2961 = vadd.f32 %v2682, %v2954
        %v2962 = vxor.u32 %v2958, 2147483648
        %v2963 = vxor.u32 %v2959, 2147483648
        %v2964 = vxor.u32 %v2960, 2147483648
        %v2965 = vmul.f32 %v2962, 1.442695
        %v2966 = vpow.pop %v2965
        %v2967 = vmul.f32 %v2963, 1.442695
        %v2968 = vpow.pop %v2967
        %v2969 = vmul.f32 %v2964, 1.442695
        %v2970 = vpow.pop %v2969
        %v2971 = vadd.f32 %v2966, 1.0
        %v2972 = vadd.f32 %v2968, 1.0
        %v2973 = vadd.f32 %v2970, 1.0
        %v2974 = vrcp.pop %v2971
        %v2975 = vmul.f32 1.0, %v2974
        %v2976 = vrcp.pop %v2972
        %v2977 = vmul.f32 1.0, %v2976
        %v2978 = vrcp.pop %v2973
        %v2979 = vmul.f32 1.0, %v2978
        %v2980 = vtanh.pop %v2961
        %v2981 = vmul.f32 %v2977, %v2673
        %v2982 = vmul.f32 %v2975, %v2980
        %v2983 = vadd.f32 %v2981, %v2982
        %v2984 = vtanh.pop %v2983
        %v2985 = vmul.f32 %v2979, %v2984
        %s2986 = scalar_lea.vmem [#allocation3], 40
        %2987 = vst [vmem:[%s2986] sm:$0xff] %v2985
        %s2988 = scalar_lea.vmem [#allocation2], 192
        %v2989 = vld [vmem:[%s2988] sm:$0xff]
        %v2990 = vld [vmem:[%s2988 + $0x8] sm:$0xff]
        %v2991 = vld [vmem:[%s2988 + $0x10] sm:$0xff]
        %v2992 = vld [vmem:[%s2988 + $0x18] sm:$0xff]
        %v2993 = vpack.c.bf16 %v2985, %v2985
        %v2994 = vld [vmem:[%s277] sm:$0xff]
        %v2995 = vld [vmem:[%s277 + $0x8] sm:$0xff]
        %v2996 = vld [vmem:[%s277 + $0x10] sm:$0xff]
        %v2997 = vld [vmem:[%s277 + $0x18] sm:$0xff]
        %v2998 = vld [vmem:[%s277 + $0x20] sm:$0xff]
        %v2999 = vld [vmem:[%s277 + $0x28] sm:$0xff]
        %v3000 = vld [vmem:[%s277 + $0x30] sm:$0xff]
        %v3001 = vld [vmem:[%s277 + $0x38] sm:$0xff]
        %v3002 = vld [vmem:[%s277 + $0x40] sm:$0xff]
        %v3003 = vld [vmem:[%s277 + $0x48] sm:$0xff]
        %v3004 = vld [vmem:[%s277 + $0x50] sm:$0xff]
        %v3005 = vld [vmem:[%s277 + $0x58] sm:$0xff]
        %v3006 = vld [vmem:[%s277 + $0x60] sm:$0xff]
        %v3007 = vld [vmem:[%s277 + $0x68] sm:$0xff]
        %v3008 = vld [vmem:[%s277 + $0x70] sm:$0xff]
        %v3009 = vld [vmem:[%s277 + $0x78] sm:$0xff]
        %v3010 = vld [vmem:[%s277 + $0x80] sm:$0xff]
        %v3011 = vld [vmem:[%s277 + $0x88] sm:$0xff]
        %v3012 = vld [vmem:[%s277 + $0x90] sm:$0xff]
        %v3013 = vld [vmem:[%s277 + $0x98] sm:$0xff]
        %v3014 = vld [vmem:[%s277 + $0xa0] sm:$0xff]
        %v3015 = vld [vmem:[%s277 + $0xa8] sm:$0xff]
        %v3016 = vld [vmem:[%s277 + $0xb0] sm:$0xff]
        %v3017 = vld [vmem:[%s277 + $0xb8] sm:$0xff]
        %v3018 = vld [vmem:[%s277 + $0xc0] sm:$0xff]
        %v3019 = vld [vmem:[%s277 + $0xc8] sm:$0xff]
        %v3020 = vld [vmem:[%s277 + $0xd0] sm:$0xff]
        %v3021 = vld [vmem:[%s277 + $0xd8] sm:$0xff]
        %v3022 = vld [vmem:[%s277 + $0xe0] sm:$0xff]
        %v3023 = vld [vmem:[%s277 + $0xe8] sm:$0xff]
        %v3024 = vld [vmem:[%s277 + $0xf0] sm:$0xff]
        %v3025 = vld [vmem:[%s277 + $0xf8] sm:$0xff]
        %v3058 = vunpack.c.l.b16 %v2994
        %v3059 = vunpack.c.h.b16 %v2994
        %v3060 = vunpack.c.l.b16 %v2995
        %v3061 = vunpack.c.h.b16 %v2995
        %v3062 = vunpack.c.l.b16 %v2996
        %v3063 = vunpack.c.h.b16 %v2996
        %v3064 = vunpack.c.l.b16 %v2997
        %v3065 = vunpack.c.h.b16 %v2997
        %v3066 = vunpack.c.l.b16 %v2998
        %v3067 = vunpack.c.h.b16 %v2998
        %v3068 = vunpack.c.l.b16 %v2999
        %v3069 = vunpack.c.h.b16 %v2999
        %v3070 = vunpack.c.l.b16 %v3000
        %v3071 = vunpack.c.h.b16 %v3000
        %v3072 = vunpack.c.l.b16 %v3001
        %v3073 = vunpack.c.h.b16 %v3001
        %v3074 = vunpack.c.l.b16 %v3002
        %v3075 = vunpack.c.h.b16 %v3002
        %v3076 = vunpack.c.l.b16 %v3003
        %v3077 = vunpack.c.h.b16 %v3003
        %v3078 = vunpack.c.l.b16 %v3004
        %v3079 = vunpack.c.h.b16 %v3004
        %v3080 = vunpack.c.l.b16 %v3005
        %v3081 = vunpack.c.h.b16 %v3005
        %v3082 = vunpack.c.l.b16 %v3006
        %v3083 = vunpack.c.h.b16 %v3006
        %v3084 = vunpack.c.l.b16 %v3007
        %v3085 = vunpack.c.h.b16 %v3007
        %v3086 = vunpack.c.l.b16 %v3008
        %v3087 = vunpack.c.h.b16 %v3008
        %v3088 = vunpack.c.l.b16 %v3009
        %v3089 = vunpack.c.h.b16 %v3009
        %v3090 = vunpack.c.l.b16 %v3010
        %v3091 = vunpack.c.h.b16 %v3010
        %v3092 = vunpack.c.l.b16 %v3011
        %v3093 = vunpack.c.h.b16 %v3011
        %v3094 = vunpack.c.l.b16 %v3012
        %v3095 = vunpack.c.h.b16 %v3012
        %v3096 = vunpack.c.l.b16 %v3013
        %v3097 = vunpack.c.h.b16 %v3013
        %v3098 = vunpack.c.l.b16 %v3014
        %v3099 = vunpack.c.h.b16 %v3014
        %v3100 = vunpack.c.l.b16 %v3015
        %v3101 = vunpack.c.h.b16 %v3015
        %v3102 = vunpack.c.l.b16 %v3016
        %v3103 = vunpack.c.h.b16 %v3016
        %v3104 = vunpack.c.l.b16 %v3017
        %v3105 = vunpack.c.h.b16 %v3017
        %v3106 = vunpack.c.l.b16 %v3018
        %v3107 = vunpack.c.h.b16 %v3018
        %v3108 = vunpack.c.l.b16 %v3019
        %v3109 = vunpack.c.h.b16 %v3019
        %v3110 = vunpack.c.l.b16 %v3020
        %v3111 = vunpack.c.h.b16 %v3020
        %v3112 = vunpack.c.l.b16 %v3021
        %v3113 = vunpack.c.h.b16 %v3021
        %v3114 = vunpack.c.l.b16 %v3022
        %v3115 = vunpack.c.h.b16 %v3022
        %v3116 = vunpack.c.l.b16 %v3023
        %v3117 = vunpack.c.h.b16 %v3023
        %v3118 = vunpack.c.l.b16 %v3024
        %v3119 = vunpack.c.h.b16 %v3024
        %v3120 = vunpack.c.l.b16 %v3025
        %v3121 = vunpack.c.h.b16 %v3025
        %v3122 = vpack.c.b16 %v3062, %v3058
        %v3123 = vpack.c.b16 %v3063, %v3059
        %v3124 = vpack.c.b16 %v3064, %v3060
        %v3125 = vpack.c.b16 %v3065, %v3061
        %v3126 = vpack.c.b16 %v3070, %v3066
        %v3127 = vpack.c.b16 %v3071, %v3067
        %v3128 = vpack.c.b16 %v3072, %v3068
        %v3129 = vpack.c.b16 %v3073, %v3069
        %v3130 = vpack.c.b16 %v3078, %v3074
        %v3131 = vpack.c.b16 %v3079, %v3075
        %v3132 = vpack.c.b16 %v3080, %v3076
        %v3133 = vpack.c.b16 %v3081, %v3077
        %v3134 = vpack.c.b16 %v3086, %v3082
        %v3135 = vpack.c.b16 %v3087, %v3083
        %v3136 = vpack.c.b16 %v3088, %v3084
        %v3137 = vpack.c.b16 %v3089, %v3085
        %v3138 = vpack.c.b16 %v3094, %v3090
        %v3139 = vpack.c.b16 %v3095, %v3091
        %v3140 = vpack.c.b16 %v3096, %v3092
        %v3141 = vpack.c.b16 %v3097, %v3093
        %v3142 = vpack.c.b16 %v3102, %v3098
        %v3143 = vpack.c.b16 %v3103, %v3099
        %v3144 = vpack.c.b16 %v3104, %v3100
        %v3145 = vpack.c.b16 %v3105, %v3101
        %v3146 = vpack.c.b16 %v3110, %v3106
        %v3147 = vpack.c.b16 %v3111, %v3107
        %v3148 = vpack.c.b16 %v3112, %v3108
        %v3149 = vpack.c.b16 %v3113, %v3109
        %v3150 = vpack.c.b16 %v3118, %v3114
        %v3151 = vpack.c.b16 %v3119, %v3115
        %v3152 = vpack.c.b16 %v3120, %v3116
        %v3153 = vpack.c.b16 %v3121, %v3117
        %3186 = vmatprep.subr.bf16.mxu0 %v3123
        %3187 = vmatpush1.bf16.msra.mxu0 %v3122
        %3188 = vmatprep.subr.bf16.mxu0 %v3127
        %3189 = vmatpush1.bf16.msra.mxu0 %v3126
        %3190 = vmatprep.subr.bf16.mxu0 %v3131
        %3191 = vmatpush1.bf16.msra.mxu0 %v3130
        %3192 = vmatprep.subr.bf16.mxu0 %v3135
        %3193 = vmatpush1.bf16.msra.mxu0 %v3134
        %3194 = vmatprep.subr.bf16.mxu0 %v3139
        %3195 = vmatpush1.bf16.msra.mxu0 %v3138
        %3196 = vmatprep.subr.bf16.mxu0 %v3143
        %3197 = vmatpush1.bf16.msra.mxu0 %v3142
        %3198 = vmatprep.subr.bf16.mxu0 %v3147
        %3199 = vmatpush1.bf16.msra.mxu0 %v3146
        %3200 = vmatprep.subr.bf16.mxu0 %v3151
        %3201 = vmatpush1.bf16.msra.mxu0 %v3150
        %3202 = vmatprep.subr.bf16.mxu0 0
        %3203 = vmatpush1.bf16.msra.mxu0 0
        %3204 = vmatprep.subr.bf16.mxu0 0
        %3205 = vmatpush1.bf16.msra.mxu0 0
        %3206 = vmatprep.subr.bf16.mxu0 0
        %3207 = vmatpush1.bf16.msra.mxu0 0
        %3208 = vmatprep.subr.bf16.mxu0 0
        %3209 = vmatpush1.bf16.msra.mxu0 0
        %3210 = vmatprep.subr.bf16.mxu0 0
        %3211 = vmatpush1.bf16.msra.mxu0 0
        %3212 = vmatprep.subr.bf16.mxu0 0
        %3213 = vmatpush1.bf16.msra.mxu0 0
        %3214 = vmatprep.subr.bf16.mxu0 0
        %3215 = vmatpush1.bf16.msra.mxu0 0
        %3216 = vmatprep.subr.bf16.mxu0 0
        %3217 = vmatpush1.bf16.msra.mxu0 0
        %3218 = vmatprep.mubr.bf16.mxu0 0
        %3219 = vmatmul.mubr.bf16.gmra.mrb[0].mxu0 %v2993
        %v3220 = vpop.f32.mrb[0].mxu0
        %v3221 = vadd.f32 0.0, %v3220
        %v3222 = vpop.f32.mrb[0].mxu0
        %v3223 = vadd.f32 0.0, %v3222
        %v3224 = vpop.f32.mrb[0].mxu0
        %v3225 = vpop.f32.mrb[0].mxu0
        %3226 = vdwg.mxu0
        %3227 = vmatprep.subr.bf16.mxu0 %v3125
        %3228 = vmatpush1.bf16.msra.mxu0 %v3124
        %3229 = vmatprep.subr.bf16.mxu0 %v3129
        %3230 = vmatpush1.bf16.msra.mxu0 %v3128
        %3231 = vmatprep.subr.bf16.mxu0 %v3133
        %3232 = vmatpush1.bf16.msra.mxu0 %v3132
        %3233 = vmatprep.subr.bf16.mxu0 %v3137
        %3234 = vmatpush1.bf16.msra.mxu0 %v3136
        %3235 = vmatprep.subr.bf16.mxu0 %v3141
        %3236 = vmatpush1.bf16.msra.mxu0 %v3140
        %3237 = vmatprep.subr.bf16.mxu0 %v3145
        %3238 = vmatpush1.bf16.msra.mxu0 %v3144
        %3239 = vmatprep.subr.bf16.mxu0 %v3149
        %3240 = vmatpush1.bf16.msra.mxu0 %v3148
        %3241 = vmatprep.subr.bf16.mxu0 %v3153
        %3242 = vmatpush1.bf16.msra.mxu0 %v3152
        %3243 = vmatprep.subr.bf16.mxu0 0
        %3244 = vmatpush1.bf16.msra.mxu0 0
        %3245 = vmatprep.subr.bf16.mxu0 0
        %3246 = vmatpush1.bf16.msra.mxu0 0
        %3247 = vmatprep.subr.bf16.mxu0 0
        %3248 = vmatpush1.bf16.msra.mxu0 0
        %3249 = vmatprep.subr.bf16.mxu0 0
        %3250 = vmatpush1.bf16.msra.mxu0 0
        %3251 = vmatprep.subr.bf16.mxu0 0
        %3252 = vmatpush1.bf16.msra.mxu0 0
        %3253 = vmatprep.subr.bf16.mxu0 0
        %3254 = vmatpush1.bf16.msra.mxu0 0
        %3255 = vmatprep.subr.bf16.mxu0 0
        %3256 = vmatpush1.bf16.msra.mxu0 0
        %3257 = vmatprep.subr.bf16.mxu0 0
        %3258 = vmatpush1.bf16.msra.mxu0 0
        %3259 = vmatprep.mubr.bf16.mxu0 0
        %3260 = vmatmul.mubr.bf16.gmra.mrb[0].mxu0 %v2993
        %v3261 = vpop.f32.mrb[0].mxu0
        %v3262 = vadd.f32 0.0, %v3261
        %v3263 = vpop.f32.mrb[0].mxu0
        %v3264 = vadd.f32 0.0, %v3263
        %v3265 = vpop.f32.mrb[0].mxu0
        %v3266 = vpop.f32.mrb[0].mxu0
        %3267 = vdwg.mxu0
        %v3268 = vadd.f32 %v2989, %v3221
        %v3269 = vadd.f32 %v2990, %v3223
        %v3270 = vadd.f32 %v2991, %v3262
        %v3271 = vadd.f32 %v2992, %v3264
        %v3272 = vxor.u32 %v3268, 2147483648
        %v3273 = vxor.u32 %v3269, 2147483648
        %v3274 = vxor.u32 %v3270, 2147483648
        %v3275 = vmul.f32 %v3272, 1.442695
        %v3276 = vpow.pop %v3275
        %v3277 = vmul.f32 %v3273, 1.442695
        %v3278 = vpow.pop %v3277
        %v3279 = vmul.f32 %v3274, 1.442695
        %v3280 = vpow.pop %v3279
        %v3281 = vadd.f32 %v3276, 1.0
        %v3282 = vadd.f32 %v3278, 1.0
        %v3283 = vadd.f32 %v3280, 1.0
        %v3284 = vrcp.pop %v3281
        %v3285 = vmul.f32 1.0, %v3284
        %v3286 = vrcp.pop %v3282
        %v3287 = vmul.f32 1.0, %v3286
        %v3288 = vrcp.pop %v3283
        %v3289 = vmul.f32 1.0, %v3288
        %v3290 = vtanh.pop %v3271
        %v3291 = vmul.f32 %v3287, %v2983
        %v3292 = vmul.f32 %v3285, %v3290
        %v3293 = vadd.f32 %v3291, %v3292
        %v3294 = vtanh.pop %v3293
        %v3295 = vmul.f32 %v3289, %v3294
        %s3296 = scalar_lea.vmem [#allocation3], 48
        %3297 = vst [vmem:[%s3296] sm:$0xff] %v3295
        %s3298 = scalar_lea.vmem [#allocation2], 224
        %v3299 = vld [vmem:[%s3298] sm:$0xff]
        %v3300 = vld [vmem:[%s3298 + $0x8] sm:$0xff]
        %v3301 = vld [vmem:[%s3298 + $0x10] sm:$0xff]
        %v3302 = vld [vmem:[%s3298 + $0x18] sm:$0xff]
        %v3303 = vpack.c.bf16 %v3295, %v3295
        %v3304 = vld [vmem:[%s277] sm:$0xff]
        %v3305 = vld [vmem:[%s277 + $0x8] sm:$0xff]
        %v3306 = vld [vmem:[%s277 + $0x10] sm:$0xff]
        %v3307 = vld [vmem:[%s277 + $0x18] sm:$0xff]
        %v3308 = vld [vmem:[%s277 + $0x20] sm:$0xff]
        %v3309 = vld [vmem:[%s277 + $0x28] sm:$0xff]
        %v3310 = vld [vmem:[%s277 + $0x30] sm:$0xff]
        %v3311 = vld [vmem:[%s277 + $0x38] sm:$0xff]
        %v3312 = vld [vmem:[%s277 + $0x40] sm:$0xff]
        %v3313 = vld [vmem:[%s277 + $0x48] sm:$0xff]
        %v3314 = vld [vmem:[%s277 + $0x50] sm:$0xff]
        %v3315 = vld [vmem:[%s277 + $0x58] sm:$0xff]
        %v3316 = vld [vmem:[%s277 + $0x60] sm:$0xff]
        %v3317 = vld [vmem:[%s277 + $0x68] sm:$0xff]
        %v3318 = vld [vmem:[%s277 + $0x70] sm:$0xff]
        %v3319 = vld [vmem:[%s277 + $0x78] sm:$0xff]
        %v3320 = vld [vmem:[%s277 + $0x80] sm:$0xff]
        %v3321 = vld [vmem:[%s277 + $0x88] sm:$0xff]
        %v3322 = vld [vmem:[%s277 + $0x90] sm:$0xff]
        %v3323 = vld [vmem:[%s277 + $0x98] sm:$0xff]
        %v3324 = vld [vmem:[%s277 + $0xa0] sm:$0xff]
        %v3325 = vld [vmem:[%s277 + $0xa8] sm:$0xff]
        %v3326 = vld [vmem:[%s277 + $0xb0] sm:$0xff]
        %v3327 = vld [vmem:[%s277 + $0xb8] sm:$0xff]
        %v3328 = vld [vmem:[%s277 + $0xc0] sm:$0xff]
        %v3329 = vld [vmem:[%s277 + $0xc8] sm:$0xff]
        %v3330 = vld [vmem:[%s277 + $0xd0] sm:$0xff]
        %v3331 = vld [vmem:[%s277 + $0xd8] sm:$0xff]
        %v3332 = vld [vmem:[%s277 + $0xe0] sm:$0xff]
        %v3333 = vld [vmem:[%s277 + $0xe8] sm:$0xff]
        %v3334 = vld [vmem:[%s277 + $0xf0] sm:$0xff]
        %v3335 = vld [vmem:[%s277 + $0xf8] sm:$0xff]
        %v3368 = vunpack.c.l.b16 %v3304
        %v3369 = vunpack.c.h.b16 %v3304
        %v3370 = vunpack.c.l.b16 %v3305
        %v3371 = vunpack.c.h.b16 %v3305
        %v3372 = vunpack.c.l.b16 %v3306
        %v3373 = vunpack.c.h.b16 %v3306
        %v3374 = vunpack.c.l.b16 %v3307
        %v3375 = vunpack.c.h.b16 %v3307
        %v3376 = vunpack.c.l.b16 %v3308
        %v3377 = vunpack.c.h.b16 %v3308
        %v3378 = vunpack.c.l.b16 %v3309
        %v3379 = vunpack.c.h.b16 %v3309
        %v3380 = vunpack.c.l.b16 %v3310
        %v3381 = vunpack.c.h.b16 %v3310
        %v3382 = vunpack.c.l.b16 %v3311
        %v3383 = vunpack.c.h.b16 %v3311
        %v3384 = vunpack.c.l.b16 %v3312
        %v3385 = vunpack.c.h.b16 %v3312
        %v3386 = vunpack.c.l.b16 %v3313
        %v3387 = vunpack.c.h.b16 %v3313
        %v3388 = vunpack.c.l.b16 %v3314
        %v3389 = vunpack.c.h.b16 %v3314
        %v3390 = vunpack.c.l.b16 %v3315
        %v3391 = vunpack.c.h.b16 %v3315
        %v3392 = vunpack.c.l.b16 %v3316
        %v3393 = vunpack.c.h.b16 %v3316
        %v3394 = vunpack.c.l.b16 %v3317
        %v3395 = vunpack.c.h.b16 %v3317
        %v3396 = vunpack.c.l.b16 %v3318
        %v3397 = vunpack.c.h.b16 %v3318
        %v3398 = vunpack.c.l.b16 %v3319
        %v3399 = vunpack.c.h.b16 %v3319
        %v3400 = vunpack.c.l.b16 %v3320
        %v3401 = vunpack.c.h.b16 %v3320
        %v3402 = vunpack.c.l.b16 %v3321
        %v3403 = vunpack.c.h.b16 %v3321
        %v3404 = vunpack.c.l.b16 %v3322
        %v3405 = vunpack.c.h.b16 %v3322
        %v3406 = vunpack.c.l.b16 %v3323
        %v3407 = vunpack.c.h.b16 %v3323
        %v3408 = vunpack.c.l.b16 %v3324
        %v3409 = vunpack.c.h.b16 %v3324
        %v3410 = vunpack.c.l.b16 %v3325
        %v3411 = vunpack.c.h.b16 %v3325
        %v3412 = vunpack.c.l.b16 %v3326
        %v3413 = vunpack.c.h.b16 %v3326
        %v3414 = vunpack.c.l.b16 %v3327
        %v3415 = vunpack.c.h.b16 %v3327
        %v3416 = vunpack.c.l.b16 %v3328
        %v3417 = vunpack.c.h.b16 %v3328
        %v3418 = vunpack.c.l.b16 %v3329
        %v3419 = vunpack.c.h.b16 %v3329
        %v3420 = vunpack.c.l.b16 %v3330
        %v3421 = vunpack.c.h.b16 %v3330
        %v3422 = vunpack.c.l.b16 %v3331
        %v3423 = vunpack.c.h.b16 %v3331
        %v3424 = vunpack.c.l.b16 %v3332
        %v3425 = vunpack.c.h.b16 %v3332
        %v3426 = vunpack.c.l.b16 %v3333
        %v3427 = vunpack.c.h.b16 %v3333
        %v3428 = vunpack.c.l.b16 %v3334
        %v3429 = vunpack.c.h.b16 %v3334
        %v3430 = vunpack.c.l.b16 %v3335
        %v3431 = vunpack.c.h.b16 %v3335
        %v3432 = vpack.c.b16 %v3372, %v3368
        %v3433 = vpack.c.b16 %v3373, %v3369
        %v3434 = vpack.c.b16 %v3374, %v3370
        %v3435 = vpack.c.b16 %v3375, %v3371
        %v3436 = vpack.c.b16 %v3380, %v3376
        %v3437 = vpack.c.b16 %v3381, %v3377
        %v3438 = vpack.c.b16 %v3382, %v3378
        %v3439 = vpack.c.b16 %v3383, %v3379
        %v3440 = vpack.c.b16 %v3388, %v3384
        %v3441 = vpack.c.b16 %v3389, %v3385
        %v3442 = vpack.c.b16 %v3390, %v3386
        %v3443 = vpack.c.b16 %v3391, %v3387
        %v3444 = vpack.c.b16 %v3396, %v3392
        %v3445 = vpack.c.b16 %v3397, %v3393
        %v3446 = vpack.c.b16 %v3398, %v3394
        %v3447 = vpack.c.b16 %v3399, %v3395
        %v3448 = vpack.c.b16 %v3404, %v3400
        %v3449 = vpack.c.b16 %v3405, %v3401
        %v3450 = vpack.c.b16 %v3406, %v3402
        %v3451 = vpack.c.b16 %v3407, %v3403
        %v3452 = vpack.c.b16 %v3412, %v3408
        %v3453 = vpack.c.b16 %v3413, %v3409
        %v3454 = vpack.c.b16 %v3414, %v3410
        %v3455 = vpack.c.b16 %v3415, %v3411
        %v3456 = vpack.c.b16 %v3420, %v3416
        %v3457 = vpack.c.b16 %v3421, %v3417
        %v3458 = vpack.c.b16 %v3422, %v3418
        %v3459 = vpack.c.b16 %v3423, %v3419
        %v3460 = vpack.c.b16 %v3428, %v3424
        %v3461 = vpack.c.b16 %v3429, %v3425
        %v3462 = vpack.c.b16 %v3430, %v3426
        %v3463 = vpack.c.b16 %v3431, %v3427
        %3496 = vmatprep.subr.bf16.mxu0 %v3433
        %3497 = vmatpush1.bf16.msra.mxu0 %v3432
        %3498 = vmatprep.subr.bf16.mxu0 %v3437
        %3499 = vmatpush1.bf16.msra.mxu0 %v3436
        %3500 = vmatprep.subr.bf16.mxu0 %v3441
        %3501 = vmatpush1.bf16.msra.mxu0 %v3440
        %3502 = vmatprep.subr.bf16.mxu0 %v3445
        %3503 = vmatpush1.bf16.msra.mxu0 %v3444
        %3504 = vmatprep.subr.bf16.mxu0 %v3449
        %3505 = vmatpush1.bf16.msra.mxu0 %v3448
        %3506 = vmatprep.subr.bf16.mxu0 %v3453
        %3507 = vmatpush1.bf16.msra.mxu0 %v3452
        %3508 = vmatprep.subr.bf16.mxu0 %v3457
        %3509 = vmatpush1.bf16.msra.mxu0 %v3456
        %3510 = vmatprep.subr.bf16.mxu0 %v3461
        %3511 = vmatpush1.bf16.msra.mxu0 %v3460
        %3512 = vmatprep.subr.bf16.mxu0 0
        %3513 = vmatpush1.bf16.msra.mxu0 0
        %3514 = vmatprep.subr.bf16.mxu0 0
        %3515 = vmatpush1.bf16.msra.mxu0 0
        %3516 = vmatprep.subr.bf16.mxu0 0
        %3517 = vmatpush1.bf16.msra.mxu0 0
        %3518 = vmatprep.subr.bf16.mxu0 0
        %3519 = vmatpush1.bf16.msra.mxu0 0
        %3520 = vmatprep.subr.bf16.mxu0 0
        %3521 = vmatpush1.bf16.msra.mxu0 0
        %3522 = vmatprep.subr.bf16.mxu0 0
        %3523 = vmatpush1.bf16.msra.mxu0 0
        %3524 = vmatprep.subr.bf16.mxu0 0
        %3525 = vmatpush1.bf16.msra.mxu0 0
        %3526 = vmatprep.subr.bf16.mxu0 0
        %3527 = vmatpush1.bf16.msra.mxu0 0
        %3528 = vmatprep.mubr.bf16.mxu0 0
        %3529 = vmatmul.mubr.bf16.gmra.mrb[0].mxu0 %v3303
        %v3530 = vpop.f32.mrb[0].mxu0
        %v3531 = vadd.f32 0.0, %v3530
        %v3532 = vpop.f32.mrb[0].mxu0
        %v3533 = vadd.f32 0.0, %v3532
        %v3534 = vpop.f32.mrb[0].mxu0
        %v3535 = vpop.f32.mrb[0].mxu0
        %3536 = vdwg.mxu0
        %3537 = vmatprep.subr.bf16.mxu0 %v3435
        %3538 = vmatpush1.bf16.msra.mxu0 %v3434
        %3539 = vmatprep.subr.bf16.mxu0 %v3439
        %3540 = vmatpush1.bf16.msra.mxu0 %v3438
        %3541 = vmatprep.subr.bf16.mxu0 %v3443
        %3542 = vmatpush1.bf16.msra.mxu0 %v3442
        %3543 = vmatprep.subr.bf16.mxu0 %v3447
        %3544 = vmatpush1.bf16.msra.mxu0 %v3446
        %3545 = vmatprep.subr.bf16.mxu0 %v3451
        %3546 = vmatpush1.bf16.msra.mxu0 %v3450
        %3547 = vmatprep.subr.bf16.mxu0 %v3455
        %3548 = vmatpush1.bf16.msra.mxu0 %v3454
        %3549 = vmatprep.subr.bf16.mxu0 %v3459
        %3550 = vmatpush1.bf16.msra.mxu0 %v3458
        %3551 = vmatprep.subr.bf16.mxu0 %v3463
        %3552 = vmatpush1.bf16.msra.mxu0 %v3462
        %3553 = vmatprep.subr.bf16.mxu0 0
        %3554 = vmatpush1.bf16.msra.mxu0 0
        %3555 = vmatprep.subr.bf16.mxu0 0
        %3556 = vmatpush1.bf16.msra.mxu0 0
        %3557 = vmatprep.subr.bf16.mxu0 0
        %3558 = vmatpush1.bf16.msra.mxu0 0
        %3559 = vmatprep.subr.bf16.mxu0 0
        %3560 = vmatpush1.bf16.msra.mxu0 0
        %3561 = vmatprep.subr.bf16.mxu0 0
        %3562 = vmatpush1.bf16.msra.mxu0 0
        %3563 = vmatprep.subr.bf16.mxu0 0
        %3564 = vmatpush1.bf16.msra.mxu0 0
        %3565 = vmatprep.subr.bf16.mxu0 0
        %3566 = vmatpush1.bf16.msra.mxu0 0
        %3567 = vmatprep.subr.bf16.mxu0 0
        %3568 = vmatpush1.bf16.msra.mxu0 0
        %3569 = vmatprep.mubr.bf16.mxu0 0
        %3570 = vmatmul.mubr.bf16.gmra.mrb[0].mxu0 %v3303
        %v3571 = vpop.f32.mrb[0].mxu0
        %v3572 = vadd.f32 0.0, %v3571
        %v3573 = vpop.f32.mrb[0].mxu0
        %v3574 = vadd.f32 0.0, %v3573
        %v3575 = vpop.f32.mrb[0].mxu0
        %v3576 = vpop.f32.mrb[0].mxu0
        %3577 = vdwg.mxu0
        %v3578 = vadd.f32 %v3299, %v3531
        %v3579 = vadd.f32 %v3300, %v3533
        %v3580 = vadd.f32 %v3301, %v3572
        %v3581 = vadd.f32 %v3302, %v3574
        %v3582 = vxor.u32 %v3578, 2147483648
        %v3583 = vxor.u32 %v3579, 2147483648
        %v3584 = vxor.u32 %v3580, 2147483648
        %v3585 = vmul.f32 %v3582, 1.442695
        %v3586 = vpow.pop %v3585
        %v3587 = vmul.f32 %v3583, 1.442695
        %v3588 = vpow.pop %v3587
        %v3589 = vmul.f32 %v3584, 1.442695
        %v3590 = vpow.pop %v3589
        %v3591 = vadd.f32 %v3586, 1.0
        %v3592 = vadd.f32 %v3588, 1.0
        %v3593 = vadd.f32 %v3590, 1.0
        %v3594 = vrcp.pop %v3591
        %v3595 = vmul.f32 1.0, %v3594
        %v3596 = vrcp.pop %v3592
        %v3597 = vmul.f32 1.0, %v3596
        %v3598 = vrcp.pop %v3593
        %v3599 = vmul.f32 1.0, %v3598
        %v3600 = vtanh.pop %v3581
        %v3601 = vmul.f32 %v3597, %v3293
        %v3602 = vmul.f32 %v3595, %v3600
        %v3603 = vadd.f32 %v3601, %v3602
        %v3604 = vtanh.pop %v3603
        %v3605 = vmul.f32 %v3599, %v3604
        %s3606 = scalar_lea.vmem [#allocation3], 56
        %3607 = vst [vmem:[%s3606] sm:$0xff] %v3605
        %p3608 = scmp.eq.s32.totalorder %s23, 3
        // Predicated region
        $region61: #{rnn_forward.1} parent=43 // pred_check
          %p3609 = pneg %p3608
        $region62: #{rnn_forward.1} parent=43 // pred_check_branch
          %3611 = sbr.rel (%p3609) target = $region64
        $region63: #{rnn_forward.1} parent=43 // pred_region
          %v3612 = vpack.c.bf16 %v3605, %v3605
          %v3613 = vld [vmem:[%s4] sm:$0xf]
          %v3614 = vld [vmem:[%s4 + $0x4] sm:$0xf]
          %v3615 = vld [vmem:[%s4 + $0x8] sm:$0xf]
          %v3616 = vld [vmem:[%s4 + $0xc] sm:$0xf]
          %v3617 = vld [vmem:[%s4 + $0x10] sm:$0xf]
          %v3618 = vld [vmem:[%s4 + $0x14] sm:$0xf]
          %v3619 = vld [vmem:[%s4 + $0x18] sm:$0xf]
          %v3620 = vld [vmem:[%s4 + $0x1c] sm:$0xf]
          %v3621 = vld [vmem:[%s4 + $0x20] sm:$0xf]
          %v3622 = vld [vmem:[%s4 + $0x24] sm:$0xf]
          %v3623 = vld [vmem:[%s4 + $0x28] sm:$0xf]
          %v3624 = vld [vmem:[%s4 + $0x2c] sm:$0xf]
          %v3625 = vld [vmem:[%s4 + $0x30] sm:$0xf]
          %v3626 = vld [vmem:[%s4 + $0x34] sm:$0xf]
          %v3627 = vld [vmem:[%s4 + $0x38] sm:$0xf]
          %v3628 = vld [vmem:[%s4 + $0x3c] sm:$0xf]
          %v3629 = vld [vmem:[%s5] sm:$0x1]
          %v3631 = vlaneseq
          %v3632 = vshrl.u32 %v3631, 7
          %v3633 = vsub.s32 0, %v3632
          %v3634 = vrot.slane %v3629, %v3633
          %v3652 = vunpack.c.l.b16 %v3613
          %v3653 = vunpack.c.l.b16 %v3614
          %v3654 = vunpack.c.l.b16 %v3615
          %v3655 = vunpack.c.l.b16 %v3616
          %v3656 = vunpack.c.l.b16 %v3617
          %v3657 = vunpack.c.l.b16 %v3618
          %v3658 = vunpack.c.l.b16 %v3619
          %v3659 = vunpack.c.l.b16 %v3620
          %v3660 = vunpack.c.l.b16 %v3621
          %v3661 = vunpack.c.l.b16 %v3622
          %v3662 = vunpack.c.l.b16 %v3623
          %v3663 = vunpack.c.l.b16 %v3624
          %v3664 = vunpack.c.l.b16 %v3625
          %v3665 = vunpack.c.l.b16 %v3626
          %v3666 = vunpack.c.l.b16 %v3627
          %v3667 = vunpack.c.l.b16 %v3628
          %v3668 = vpack.c.b16 %v3653, %v3652
          %v3669 = vpack.c.b16 %v3655, %v3654
          %v3670 = vpack.c.b16 %v3657, %v3656
          %v3671 = vpack.c.b16 %v3659, %v3658
          %v3672 = vpack.c.b16 %v3661, %v3660
          %v3673 = vpack.c.b16 %v3663, %v3662
          %v3674 = vpack.c.b16 %v3665, %v3664
          %v3675 = vpack.c.b16 %v3667, %v3666
          %3684 = vmatprep.subr.bf16.mxu0 0
          %3685 = vmatpush1.bf16.msra.mxu0 %v3668
          %3686 = vmatprep.subr.bf16.mxu0 0
          %3687 = vmatpush1.bf16.msra.mxu0 %v3669
          %3688 = vmatprep.subr.bf16.mxu0 0
          %3689 = vmatpush1.bf16.msra.mxu0 %v3670
          %3690 = vmatprep.subr.bf16.mxu0 0
          %3691 = vmatpush1.bf16.msra.mxu0 %v3671
          %3692 = vmatprep.subr.bf16.mxu0 0
          %3693 = vmatpush1.bf16.msra.mxu0 %v3672
          %3694 = vmatprep.subr.bf16.mxu0 0
          %3695 = vmatpush1.bf16.msra.mxu0 %v3673
          %3696 = vmatprep.subr.bf16.mxu0 0
          %3697 = vmatpush1.bf16.msra.mxu0 %v3674
          %3698 = vmatprep.subr.bf16.mxu0 0
          %3699 = vmatpush1.bf16.msra.mxu0 %v3675
          %3700 = vmatprep.subr.bf16.mxu0 0
          %3701 = vmatpush1.bf16.msra.mxu0 0
          %3702 = vmatprep.subr.bf16.mxu0 0
          %3703 = vmatpush1.bf16.msra.mxu0 0
          %3704 = vmatprep.subr.bf16.mxu0 0
          %3705 = vmatpush1.bf16.msra.mxu0 0
          %3706 = vmatprep.subr.bf16.mxu0 0
          %3707 = vmatpush1.bf16.msra.mxu0 0
          %3708 = vmatprep.subr.bf16.mxu0 0
          %3709 = vmatpush1.bf16.msra.mxu0 0
          %3710 = vmatprep.subr.bf16.mxu0 0
          %3711 = vmatpush1.bf16.msra.mxu0 0
          %3712 = vmatprep.subr.bf16.mxu0 0
          %3713 = vmatpush1.bf16.msra.mxu0 0
          %3714 = vmatprep.subr.bf16.mxu0 0
          %3715 = vmatpush1.bf16.msra.mxu0 0
          %3716 = vmatprep.mubr.bf16.mxu0 0
          %3717 = vmatmul.mubr.bf16.gmra.mrb[0].mxu0 %v3612
          %v3718 = vpop.f32.mrb[0].mxu0
          %v3719 = vadd.f32 %v3634, %v3718
          %v3720 = vpop.f32.mrb[0].mxu0
          %v3721 = vpop.f32.mrb[0].mxu0
          %v3722 = vpop.f32.mrb[0].mxu0
          %3723 = vdwg.mxu0
          %3724 = vst [vmem:[%s6] sm:$0xff] %v3719
        $region64: #{rnn_forward.1} parent=43 // pred_fallthru
          _
        // Predicated region
        $region65: #{rnn_forward.1} parent=43 // pred_check
          %p3725 = pneg %p177
        $region66: #{rnn_forward.1} parent=43 // pred_check_branch
          %3727 = sbr.rel (%p3725) target = $region68
        $region67: #{rnn_forward.1} parent=43 // pred_region
          _
        $region68: #{rnn_forward.1} parent=43 // pred_fallthru
          _
        // Predicated region
        $region69: #{rnn_forward.1} parent=43 // pred_check
          %p3728 = pneg %p177
        $region70: #{rnn_forward.1} parent=43 // pred_check_branch
          %3730 = sbr.rel (%p3728) target = $region72
        $region71: #{rnn_forward.1} parent=43 // pred_region
          _
        $region72: #{rnn_forward.1} parent=43 // pred_fallthru
          _
      $region44: #{rnn_forward.1} parent=5 // pred_fallthru
        _
      %p3731 = scmp.le.s32.totalorder 2, %s18
      // Predicated region
      $region73: #{rnn_forward.1} parent=5 // pred_check
        %p3732 = pneg %p3731
      $region74: #{rnn_forward.1} parent=5 // pred_check_branch
        %3734 = sbr.rel (%p3732) target = $region76
      $region75: #{rnn_forward.1} parent=5 // pred_region
        %s3735 = ssub.s32 %s18, 2
      $region76: #{rnn_forward.1} parent=5 // pred_fallthru
        _
    $region6: #{rnn_forward.1} parent=1 // loop_footer
      %s22 = sadd.s32 1, %s18
    $region7: #{rnn_forward.1} parent=1 // loop_footer_branch
      %17 = sbr.rel target = $region3
    $region8: #{rnn_forward.1} parent=1 // loop_exit
      _
    %3736 = vsyncpa [#allocation5], 1
    %s3737 = scalar_lea.sflag [#allocation5], 1
    %3738 = vsyncpa %s3737, 1
    %3739 = vsyncpa [#allocation7], 1
    %s3740 = scalar_lea.sflag [#allocation7], 1
    %3741 = vsyncpa %s3740, 1

</llo_original>
